<compile_context>
chip_gen: v6e
topology: v6e:2x2x1
jax: 0.10.0
libtpu: 0.0.40
codegen_flags: <defaults>
</compile_context>

<pallas_src>
import math
import numpy as np
import jax
import jax.numpy as jnp
from jax.experimental import pallas as pl
from jax.experimental.pallas import tpu as pltpu


def _make_kernel(T, Bp, H):
    """Kernel body. T timesteps, Bp = padded batch (multiple of 8), H = hidden."""

    def mm(a, b):
        return jnp.dot(a, b, preferred_element_type=jnp.float32)

    def kernel(x_ref, a_ref,
               w0_i3, b0_i3, w0_hrz, w0_hn, b0_hn,
               w1_rz, b1_rz, w1_in, b1_in, w1_hn, b1_hn,
               wd1h, wd1a, bd1, wd2, bd2,
               out_ref):
        x = x_ref[...]                           # (T*Bp, D)
        act = a_ref[...]                         # (T*Bp, A)

        # ---- hoisted, non-recurrent matmuls (batched over all T*Bp rows) ----
        # Single fused layer-0 input projection for all three gates (r|z|n);
        # r/z biases already include the hidden-side bias (folded on host).
        gi0 = mm(x, w0_i3[...]) + b0_i3[...]     # (T*Bp, 3H)
        # dense1 "action" half + dense1 bias (the hidden half comes post-loop).
        a_proj = mm(act, wd1a[...]) + bd1[...]   # (T*Bp, H)

        # ---- hoisted bias broadcasts + fused r/z weight tiles (loop-invariant) ----
        b0_hn_b = jnp.broadcast_to(b0_hn[...], (Bp, H))
        b1_rz_b = jnp.broadcast_to(b1_rz[...], (Bp, 2 * H))
        b1_in_b = jnp.broadcast_to(b1_in[...], (Bp, H))
        b1_hn_b = jnp.broadcast_to(b1_hn[...], (Bp, H))
        w0_hrz_v = w0_hrz[...]                   # (H, 2H) hoisted local
        w1_rz_v = w1_rz[...]                     # (2H, 2H) hoisted local
        # n-gate weights are intentionally re-loaded per step (vld slack).

        # ---- recurrence: fully unrolled over the static sequence length ----
        h0 = jnp.zeros((Bp, H), jnp.float32)     # PyTorch GRU h=None -> zeros
        h1 = jnp.zeros((Bp, H), jnp.float32)
        h1_steps = []
        for t in range(T):
            lo = t * Bp                          # static, sublane-aligned
            gi0_t = gi0[lo:lo + Bp, :]           # (Bp, 3H)

            # layer 0: fused r/z (one matmul, one sigmoid), separate n gate.
            rz0 = jax.nn.sigmoid(gi0_t[:, :2 * H] + mm(h0, w0_hrz_v))
            r0 = rz0[:, :H]
            z0 = rz0[:, H:]
            n0 = jnp.tanh(gi0_t[:, 2 * H:]
                          + r0 * (mm(h0, w0_hn[...]) + b0_hn_b))
            h0 = (1.0 - z0) * n0 + z0 * h0

            # layer 1: [h0_t, h1_{t-1}] @ stacked rz weights -> one matmul
            # covers both input- and hidden-side r/z projections.
            h01 = jnp.concatenate([h0, h1], axis=1)          # (Bp, 2H)
            rz1 = jax.nn.sigmoid(mm(h01, w1_rz_v) + b1_rz_b)
            r1 = rz1[:, :H]
            z1 = rz1[:, H:]
            n1 = jnp.tanh(mm(h0, w1_in[...]) + b1_in_b
                          + r1 * (mm(h1, w1_hn[...]) + b1_hn_b))
            h1 = (1.0 - z1) * n1 + z1 * h1
            h1_steps.append(h1)                  # register-resident, no vst

        # ---- hoisted head: dense1(hidden half) + relu + dense2 + sigmoid ----
        p = jnp.concatenate(h1_steps, axis=0)                 # (T*Bp, H)
        hid = jax.nn.relu(mm(p, wd1h[...]) + a_proj)          # concat == split matmul
        # dense2 has a single output column: VPU multiply + XLU lane reduce
        # instead of a degenerate 1-column MXU matmul.
        logit = jnp.sum(hid * wd2[...], axis=-1, keepdims=True) + bd2[...]
        out_ref[...] = jax.nn.sigmoid(logit)                  # single store

    return kernel


def _prep_weights(tw, H):
    """PyTorch-layout params -> kernel layout.

    Exact rewrites of the GRU / concat equations:
      * layer-0 input weights fused across gates to (D, 3H) (columns r|z|n),
        r/z input+hidden biases pre-summed into the fused (1, 3H) bias.
      * layer-0 hidden r/z weights fused to (H, 2H).
      * layer-1 r/z input+hidden weights stacked to (2H, 2H) so
        [h0, h1] @ W covers gi+gh for both gates; biases pre-summed.
      * dense1 split into hidden/action halves (split matmul == concat matmul).
      * dense2 kept as a (1, H) row for the VPU multiply + lane reduction.
    """
    # ---- GRU layer 0 ----
    Wih, Whh = tw["weight_ih_l0"], tw["weight_hh_l0"]        # (3H, D), (3H, H)
    bih, bhh = tw["bias_ih_l0"], tw["bias_hh_l0"]            # (3H,)
    w0_i3 = Wih.T                                            # (D, 3H) cols r|z|n
    b0_i3 = jnp.concatenate([bih[:2 * H] + bhh[:2 * H],
                             bih[2 * H:]]).reshape(1, 3 * H)
    w0_hrz = Whh[:2 * H].T                                   # (H, 2H)
    w0_hn = Whh[2 * H:].T                                    # (H, H)
    b0_hn = bhh[2 * H:].reshape(1, H)

    # ---- GRU layer 1 ----
    Wih, Whh = tw["weight_ih_l1"], tw["weight_hh_l1"]        # (3H, H), (3H, H)
    bih, bhh = tw["bias_ih_l1"], tw["bias_hh_l1"]
    w1_rz = jnp.concatenate([Wih[:2 * H].T, Whh[:2 * H].T], axis=0)  # (2H, 2H)
    b1_rz = (bih[:2 * H] + bhh[:2 * H]).reshape(1, 2 * H)
    w1_in = Wih[2 * H:].T                                    # (H, H)
    b1_in = bih[2 * H:].reshape(1, H)
    w1_hn = Whh[2 * H:].T                                    # (H, H)
    b1_hn = bhh[2 * H:].reshape(1, H)

    # ---- head ----
    W1, b1 = tw["dense1_w"], tw["dense1_b"]                  # (H, H+A), (H,)
    W2, b2 = tw["dense2_w"], tw["dense2_b"]                  # (1, H),   (1,)
    wd1h = W1[:, :H].T                                       # (H, H)
    wd1a = W1[:, H:].T                                       # (A, H)
    bd1 = b1.reshape(1, H)
    wd2 = W2                                                 # (1, H) row
    bd2 = b2.reshape(1, 1)

    return [w0_i3, b0_i3, w0_hrz, w0_hn, b0_hn,
            w1_rz, b1_rz, w1_in, b1_in, w1_hn, b1_hn,
            wd1h, wd1a, bd1, wd2, bd2]


def discriminator_forward(x, a, torch_weights, hidden_dim, num_layers=2):
    """Pallas implementation of Discriminator.forward(x, a, h=None)."""
    assert num_layers == 2, "kernel is written for discrim_num_layers=2"
    T, B, D = x.shape
    _, _, A = a.shape
    H = hidden_dim

    # Pad batch up to a multiple of 8 (f32 sublane count); padded rows are
    # independent garbage (GRU is per-row) and get sliced off at the end.
    Bp = ((B + 7) // 8) * 8
    if Bp != B:
        pad = ((0, 0), (0, Bp - B), (0, 0))
        x = jnp.pad(x, pad)
        a = jnp.pad(a, pad)
    x_flat = x.reshape(T * Bp, D)
    a_flat = a.reshape(T * Bp, A)

    kweights = _prep_weights(torch_weights, H)
    n_in = 2 + len(kweights)

    vmem_spec = pl.BlockSpec(memory_space=pltpu.MemorySpace.VMEM)
    out = pl.pallas_call(
        _make_kernel(T, Bp, H),
        out_shape=jax.ShapeDtypeStruct((T * Bp, 1), jnp.float32),
        in_specs=[vmem_spec] * n_in,
        out_specs=pl.BlockSpec(memory_space=pltpu.MemorySpace.VMEM),
    )(x_flat, a_flat, *kweights)

    return out.reshape(T, Bp, 1)[:, :B, :]


def init_weights(key, state_dim, action_dim, hidden_dim):
    """Deterministic init with the PyTorch module's parameter shapes/layout."""
    H, D, A = hidden_dim, state_dim, action_dim
    keys = jax.random.split(key, 12)
    kg = 1.0 / math.sqrt(H)          # PyTorch GRU init scale
    k1 = 1.0 / math.sqrt(H + A)      # dense1 init scale
    k2 = 1.0 / math.sqrt(H)          # dense2 init scale

    def u(k, shape, s):
        return jax.random.uniform(k, shape, jnp.float32, minval=-s, maxval=s)

    return {
        "weight_ih_l0": u(keys[0], (3 * H, D), kg),
        "weight_hh_l0": u(keys[1], (3 * H, H), kg),
        "bias_ih_l0":   u(keys[2], (3 * H,), kg),
        "bias_hh_l0":   u(keys[3], (3 * H,), kg),
        "weight_ih_l1": u(keys[4], (3 * H, H), kg),
        "weight_hh_l1": u(keys[5], (3 * H, H), kg),
        "bias_ih_l1":   u(keys[6], (3 * H,), kg),
        "bias_hh_l1":   u(keys[7], (3 * H,), kg),
        "dense1_w":     u(keys[8], (H, H + A), k1),
        "dense1_b":     u(keys[9], (H,), k1),
        "dense2_w":     u(keys[10], (1, H), k2),
        "dense2_b":     u(keys[11], (1,), k2),
    }


def reference_forward(x, a, tw, hidden_dim):
    """Pure-JAX reference mirroring PyTorch semantics, for verification."""
    T, B, _ = x.shape
    H = hidden_dim
    h = [jnp.zeros((B, H), jnp.float32) for _ in range(2)]
    outs = []
    for t in range(T):
        inp = x[t]
        for l in range(2):
            gi = inp @ tw[f"weight_ih_l{l}"].T + tw[f"bias_ih_l{l}"]
            gh = h[l] @ tw[f"weight_hh_l{l}"].T + tw[f"bias_hh_l{l}"]
            r = jax.nn.sigmoid(gi[:, :H] + gh[:, :H])
            z = jax.nn.sigmoid(gi[:, H:2 * H] + gh[:, H:2 * H])
            n = jnp.tanh(gi[:, 2 * H:] + r * gh[:, 2 * H:])
            h[l] = (1.0 - z) * n + z * h[l]
            inp = h[l]
        cat = jnp.concatenate([h[1], a[t]], axis=-1)
        hid = jax.nn.relu(cat @ tw["dense1_w"].T + tw["dense1_b"])
        outs.append(jax.nn.sigmoid(hid @ tw["dense2_w"].T + tw["dense2_b"]))
    return jnp.stack(outs, axis=0)


if __name__ == "__main__":
    params = {"discrim_rnn_dim": 32, "y_dim": 4, "cuda": False,
              "discrim_num_layers": 2}
    T, B = 8, 4
    D = A = params["y_dim"]
    H = params["discrim_rnn_dim"]

    key = jax.random.PRNGKey(0)
    kx, ka, kw = jax.random.split(key, 3)
    x = jax.random.normal(kx, (T, B, D), jnp.float32)   # states  (seq, batch, y_dim)
    a = jax.random.normal(ka, (T, B, A), jnp.float32)   # actions (seq, batch, y_dim)
    tw = init_weights(kw, D, A, H)

    prob = discriminator_forward(x, a, tw, H, params["discrim_num_layers"])
    prob = jax.block_until_ready(prob)

    # High-precision reference; tolerance tightened 2x vs. the previous run
    # (any semantic/gate-fusion bug shows up as O(1) error) while leaving
    # headroom for MXU f32 pass-decomposition vs. XLA accumulation order.
    with jax.default_matmul_precision("highest"):
        ref = reference_forward(x, a, tw, H)
    np.testing.assert_allclose(np.asarray(prob), np.asarray(ref),
                               rtol=1e-3, atol=1e-3)
    assert prob.shape == (T, B, 1)
    print("KERNEL_OK")
</pallas_src>

<mosaic_0001>
module attributes {stable_mosaic.version = 11 : i64} {
  func.func @kernel(%arg0: memref<64x4xf32, #tpu.memory_space<vmem>>, %arg1: memref<64x4xf32, #tpu.memory_space<vmem>>, %arg2: memref<4x96xf32, #tpu.memory_space<vmem>>, %arg3: memref<1x96xf32, #tpu.memory_space<vmem>>, %arg4: memref<32x64xf32, #tpu.memory_space<vmem>>, %arg5: memref<32x32xf32, #tpu.memory_space<vmem>>, %arg6: memref<1x32xf32, #tpu.memory_space<vmem>>, %arg7: memref<64x64xf32, #tpu.memory_space<vmem>>, %arg8: memref<1x64xf32, #tpu.memory_space<vmem>>, %arg9: memref<32x32xf32, #tpu.memory_space<vmem>>, %arg10: memref<1x32xf32, #tpu.memory_space<vmem>>, %arg11: memref<32x32xf32, #tpu.memory_space<vmem>>, %arg12: memref<1x32xf32, #tpu.memory_space<vmem>>, %arg13: memref<32x32xf32, #tpu.memory_space<vmem>>, %arg14: memref<4x32xf32, #tpu.memory_space<vmem>>, %arg15: memref<1x32xf32, #tpu.memory_space<vmem>>, %arg16: memref<1x32xf32, #tpu.memory_space<vmem>>, %arg17: memref<1x1xf32, #tpu.memory_space<vmem>>, %arg18: memref<64x1xf32, #tpu.memory_space<vmem>>) attributes {dimension_semantics = [], scalar_prefetch = 0 : i64, scratch_operands = 0 : i64, tpu.core_type = #tpu.core_type<tc>} {
    %c0 = arith.constant 0 : index
    %c0_0 = arith.constant 0 : index
    %0 = vector.load %arg0[%c0, %c0_0] : memref<64x4xf32, #tpu.memory_space<vmem>>, vector<64x4xf32>
    %c0_1 = arith.constant 0 : index
    %c0_2 = arith.constant 0 : index
    %1 = vector.load %arg1[%c0_1, %c0_2] : memref<64x4xf32, #tpu.memory_space<vmem>>, vector<64x4xf32>
    %c0_3 = arith.constant 0 : index
    %c0_4 = arith.constant 0 : index
    %2 = vector.load %arg2[%c0_3, %c0_4] : memref<4x96xf32, #tpu.memory_space<vmem>>, vector<4x96xf32>
    %cst = arith.constant dense<0.000000e+00> : vector<64x96xf32>
    %3 = tpu.matmul %0, %2, %cst {dimension_numbers = #tpu.dot_dimension_numbers<[1], [0], [0], [1], [0, 0, 1, 1], [], []>} : vector<64x4xf32>, vector<4x96xf32>, vector<64x96xf32> -> vector<64x96xf32>
    %c0_5 = arith.constant 0 : index
    %c0_6 = arith.constant 0 : index
    %4 = vector.load %arg3[%c0_5, %c0_6] : memref<1x96xf32, #tpu.memory_space<vmem>>, vector<1x96xf32>
    %5 = vector.broadcast %4 : vector<1x96xf32> to vector<64x96xf32>
    %6 = arith.addf %3, %5 : vector<64x96xf32>
    %c0_7 = arith.constant 0 : index
    %c0_8 = arith.constant 0 : index
    %7 = vector.load %arg14[%c0_7, %c0_8] : memref<4x32xf32, #tpu.memory_space<vmem>>, vector<4x32xf32>
    %cst_9 = arith.constant dense<0.000000e+00> : vector<64x32xf32>
    %8 = tpu.matmul %1, %7, %cst_9 {dimension_numbers = #tpu.dot_dimension_numbers<[1], [0], [0], [1], [0, 0, 1, 1], [], []>} : vector<64x4xf32>, vector<4x32xf32>, vector<64x32xf32> -> vector<64x32xf32>
    %c0_10 = arith.constant 0 : index
    %c0_11 = arith.constant 0 : index
    %9 = vector.load %arg15[%c0_10, %c0_11] : memref<1x32xf32, #tpu.memory_space<vmem>>, vector<1x32xf32>
    %10 = vector.broadcast %9 : vector<1x32xf32> to vector<64x32xf32>
    %11 = arith.addf %8, %10 : vector<64x32xf32>
    %c0_12 = arith.constant 0 : index
    %c0_13 = arith.constant 0 : index
    %12 = vector.load %arg6[%c0_12, %c0_13] : memref<1x32xf32, #tpu.memory_space<vmem>>, vector<1x32xf32>
    %13 = vector.shape_cast %12 : vector<1x32xf32> to vector<1x32xf32>
    %14 = vector.broadcast %13 : vector<1x32xf32> to vector<8x32xf32>
    %c0_14 = arith.constant 0 : index
    %c0_15 = arith.constant 0 : index
    %15 = vector.load %arg8[%c0_14, %c0_15] : memref<1x64xf32, #tpu.memory_space<vmem>>, vector<1x64xf32>
    %16 = vector.shape_cast %15 : vector<1x64xf32> to vector<1x64xf32>
    %17 = vector.broadcast %16 : vector<1x64xf32> to vector<8x64xf32>
    %c0_16 = arith.constant 0 : index
    %c0_17 = arith.constant 0 : index
    %18 = vector.load %arg10[%c0_16, %c0_17] : memref<1x32xf32, #tpu.memory_space<vmem>>, vector<1x32xf32>
    %19 = vector.shape_cast %18 : vector<1x32xf32> to vector<1x32xf32>
    %20 = vector.broadcast %19 : vector<1x32xf32> to vector<8x32xf32>
    %c0_18 = arith.constant 0 : index
    %c0_19 = arith.constant 0 : index
    %21 = vector.load %arg12[%c0_18, %c0_19] : memref<1x32xf32, #tpu.memory_space<vmem>>, vector<1x32xf32>
    %22 = vector.shape_cast %21 : vector<1x32xf32> to vector<1x32xf32>
    %23 = vector.broadcast %22 : vector<1x32xf32> to vector<8x32xf32>
    %c0_20 = arith.constant 0 : index
    %c0_21 = arith.constant 0 : index
    %24 = vector.load %arg4[%c0_20, %c0_21] : memref<32x64xf32, #tpu.memory_space<vmem>>, vector<32x64xf32>
    %c0_22 = arith.constant 0 : index
    %c0_23 = arith.constant 0 : index
    %25 = vector.load %arg7[%c0_22, %c0_23] : memref<64x64xf32, #tpu.memory_space<vmem>>, vector<64x64xf32>
    %cst_24 = arith.constant 0.000000e+00 : f32
    %26 = vector.broadcast %cst_24 : f32 to vector<8x32xf32>
    %cst_25 = arith.constant 0.000000e+00 : f32
    %27 = vector.broadcast %cst_25 : f32 to vector<8x32xf32>
    %28 = vector.extract_strided_slice %6 {offsets = [0, 0], sizes = [8, 96], strides = [1, 1]} : vector<64x96xf32> to vector<8x96xf32>
    %29 = vector.extract_strided_slice %28 {offsets = [0, 0], sizes = [8, 64], strides = [1, 1]} : vector<8x96xf32> to vector<8x64xf32>
    %cst_26 = arith.constant dense<0.000000e+00> : vector<8x64xf32>
    %30 = tpu.matmul %26, %24, %cst_26 {dimension_numbers = #tpu.dot_dimension_numbers<[1], [0], [0], [1], [0, 0, 1, 1], [], []>} : vector<8x32xf32>, vector<32x64xf32>, vector<8x64xf32> -> vector<8x64xf32>
    %31 = arith.addf %29, %30 : vector<8x64xf32>
    %32 = arith.negf %31 : vector<8x64xf32>
    %33 = math.exp %32 : vector<8x64xf32>
    %cst_27 = arith.constant 1.000000e+00 : f32
    %34 = vector.broadcast %cst_27 : f32 to vector<8x64xf32>
    %35 = arith.addf %34, %33 : vector<8x64xf32>
    %36 = arith.divf %34, %35 : vector<8x64xf32>
    %37 = vector.extract_strided_slice %36 {offsets = [0, 0], sizes = [8, 32], strides = [1, 1]} : vector<8x64xf32> to vector<8x32xf32>
    %38 = vector.extract_strided_slice %36 {offsets = [0, 32], sizes = [8, 32], strides = [1, 1]} : vector<8x64xf32> to vector<8x32xf32>
    %39 = vector.extract_strided_slice %28 {offsets = [0, 64], sizes = [8, 32], strides = [1, 1]} : vector<8x96xf32> to vector<8x32xf32>
    %c0_28 = arith.constant 0 : index
    %c0_29 = arith.constant 0 : index
    %40 = vector.load %arg5[%c0_28, %c0_29] : memref<32x32xf32, #tpu.memory_space<vmem>>, vector<32x32xf32>
    %cst_30 = arith.constant dense<0.000000e+00> : vector<8x32xf32>
    %41 = tpu.matmul %26, %40, %cst_30 {dimension_numbers = #tpu.dot_dimension_numbers<[1], [0], [0], [1], [0, 0, 1, 1], [], []>} : vector<8x32xf32>, vector<32x32xf32>, vector<8x32xf32> -> vector<8x32xf32>
    %42 = arith.addf %41, %14 : vector<8x32xf32>
    %43 = arith.mulf %37, %42 : vector<8x32xf32>
    %44 = arith.addf %39, %43 : vector<8x32xf32>
    %45 = math.tanh %44 : vector<8x32xf32>
    %cst_31 = arith.constant 1.000000e+00 : f32
    %46 = vector.broadcast %cst_31 : f32 to vector<8x32xf32>
    %47 = arith.subf %46, %38 : vector<8x32xf32>
    %48 = arith.mulf %47, %45 : vector<8x32xf32>
    %49 = arith.mulf %38, %26 : vector<8x32xf32>
    %50 = arith.addf %48, %49 : vector<8x32xf32>
    %51 = tpu.concatenate %50, %27 in 1 : vector<8x32xf32>, vector<8x32xf32> -> vector<8x64xf32>
    %cst_32 = arith.constant dense<0.000000e+00> : vector<8x64xf32>
    %52 = tpu.matmul %51, %25, %cst_32 {dimension_numbers = #tpu.dot_dimension_numbers<[1], [0], [0], [1], [0, 0, 1, 1], [], []>} : vector<8x64xf32>, vector<64x64xf32>, vector<8x64xf32> -> vector<8x64xf32>
    %53 = arith.addf %52, %17 : vector<8x64xf32>
    %54 = arith.negf %53 : vector<8x64xf32>
    %55 = math.exp %54 : vector<8x64xf32>
    %cst_33 = arith.constant 1.000000e+00 : f32
    %56 = vector.broadcast %cst_33 : f32 to vector<8x64xf32>
    %57 = arith.addf %56, %55 : vector<8x64xf32>
    %58 = arith.divf %56, %57 : vector<8x64xf32>
    %59 = vector.extract_strided_slice %58 {offsets = [0, 0], sizes = [8, 32], strides = [1, 1]} : vector<8x64xf32> to vector<8x32xf32>
    %60 = vector.extract_strided_slice %58 {offsets = [0, 32], sizes = [8, 32], strides = [1, 1]} : vector<8x64xf32> to vector<8x32xf32>
    %c0_34 = arith.constant 0 : index
    %c0_35 = arith.constant 0 : index
    %61 = vector.load %arg9[%c0_34, %c0_35] : memref<32x32xf32, #tpu.memory_space<vmem>>, vector<32x32xf32>
    %cst_36 = arith.constant dense<0.000000e+00> : vector<8x32xf32>
    %62 = tpu.matmul %50, %61, %cst_36 {dimension_numbers = #tpu.dot_dimension_numbers<[1], [0], [0], [1], [0, 0, 1, 1], [], []>} : vector<8x32xf32>, vector<32x32xf32>, vector<8x32xf32> -> vector<8x32xf32>
    %63 = arith.addf %62, %20 : vector<8x32xf32>
    %c0_37 = arith.constant 0 : index
    %c0_38 = arith.constant 0 : index
    %64 = vector.load %arg11[%c0_37, %c0_38] : memref<32x32xf32, #tpu.memory_space<vmem>>, vector<32x32xf32>
    %cst_39 = arith.constant dense<0.000000e+00> : vector<8x32xf32>
    %65 = tpu.matmul %27, %64, %cst_39 {dimension_numbers = #tpu.dot_dimension_numbers<[1], [0], [0], [1], [0, 0, 1, 1], [], []>} : vector<8x32xf32>, vector<32x32xf32>, vector<8x32xf32> -> vector<8x32xf32>
    %66 = arith.addf %65, %23 : vector<8x32xf32>
    %67 = arith.mulf %59, %66 : vector<8x32xf32>
    %68 = arith.addf %63, %67 : vector<8x32xf32>
    %69 = math.tanh %68 : vector<8x32xf32>
    %cst_40 = arith.constant 1.000000e+00 : f32
    %70 = vector.broadcast %cst_40 : f32 to vector<8x32xf32>
    %71 = arith.subf %70, %60 : vector<8x32xf32>
    %72 = arith.mulf %71, %69 : vector<8x32xf32>
    %73 = arith.mulf %60, %27 : vector<8x32xf32>
    %74 = arith.addf %72, %73 : vector<8x32xf32>
    %75 = vector.extract_strided_slice %6 {offsets = [8, 0], sizes = [8, 96], strides = [1, 1]} : vector<64x96xf32> to vector<8x96xf32>
    %76 = vector.extract_strided_slice %75 {offsets = [0, 0], sizes = [8, 64], strides = [1, 1]} : vector<8x96xf32> to vector<8x64xf32>
    %cst_41 = arith.constant dense<0.000000e+00> : vector<8x64xf32>
    %77 = tpu.matmul %50, %24, %cst_41 {dimension_numbers = #tpu.dot_dimension_numbers<[1], [0], [0], [1], [0, 0, 1, 1], [], []>} : vector<8x32xf32>, vector<32x64xf32>, vector<8x64xf32> -> vector<8x64xf32>
    %78 = arith.addf %76, %77 : vector<8x64xf32>
    %79 = arith.negf %78 : vector<8x64xf32>
    %80 = math.exp %79 : vector<8x64xf32>
    %cst_42 = arith.constant 1.000000e+00 : f32
    %81 = vector.broadcast %cst_42 : f32 to vector<8x64xf32>
    %82 = arith.addf %81, %80 : vector<8x64xf32>
    %83 = arith.divf %81, %82 : vector<8x64xf32>
    %84 = vector.extract_strided_slice %83 {offsets = [0, 0], sizes = [8, 32], strides = [1, 1]} : vector<8x64xf32> to vector<8x32xf32>
    %85 = vector.extract_strided_slice %83 {offsets = [0, 32], sizes = [8, 32], strides = [1, 1]} : vector<8x64xf32> to vector<8x32xf32>
    %86 = vector.extract_strided_slice %75 {offsets = [0, 64], sizes = [8, 32], strides = [1, 1]} : vector<8x96xf32> to vector<8x32xf32>
    %c0_43 = arith.constant 0 : index
    %c0_44 = arith.constant 0 : index
    %87 = vector.load %arg5[%c0_43, %c0_44] : memref<32x32xf32, #tpu.memory_space<vmem>>, vector<32x32xf32>
    %cst_45 = arith.constant dense<0.000000e+00> : vector<8x32xf32>
    %88 = tpu.matmul %50, %87, %cst_45 {dimension_numbers = #tpu.dot_dimension_numbers<[1], [0], [0], [1], [0, 0, 1, 1], [], []>} : vector<8x32xf32>, vector<32x32xf32>, vector<8x32xf32> -> vector<8x32xf32>
    %89 = arith.addf %88, %14 : vector<8x32xf32>
    %90 = arith.mulf %84, %89 : vector<8x32xf32>
    %91 = arith.addf %86, %90 : vector<8x32xf32>
    %92 = math.tanh %91 : vector<8x32xf32>
    %cst_46 = arith.constant 1.000000e+00 : f32
    %93 = vector.broadcast %cst_46 : f32 to vector<8x32xf32>
    %94 = arith.subf %93, %85 : vector<8x32xf32>
    %95 = arith.mulf %94, %92 : vector<8x32xf32>
    %96 = arith.mulf %85, %50 : vector<8x32xf32>
    %97 = arith.addf %95, %96 : vector<8x32xf32>
    %98 = tpu.concatenate %97, %74 in 1 : vector<8x32xf32>, vector<8x32xf32> -> vector<8x64xf32>
    %cst_47 = arith.constant dense<0.000000e+00> : vector<8x64xf32>
    %99 = tpu.matmul %98, %25, %cst_47 {dimension_numbers = #tpu.dot_dimension_numbers<[1], [0], [0], [1], [0, 0, 1, 1], [], []>} : vector<8x64xf32>, vector<64x64xf32>, vector<8x64xf32> -> vector<8x64xf32>
    %100 = arith.addf %99, %17 : vector<8x64xf32>
    %101 = arith.negf %100 : vector<8x64xf32>
    %102 = math.exp %101 : vector<8x64xf32>
    %cst_48 = arith.constant 1.000000e+00 : f32
    %103 = vector.broadcast %cst_48 : f32 to vector<8x64xf32>
    %104 = arith.addf %103, %102 : vector<8x64xf32>
    %105 = arith.divf %103, %104 : vector<8x64xf32>
    %106 = vector.extract_strided_slice %105 {offsets = [0, 0], sizes = [8, 32], strides = [1, 1]} : vector<8x64xf32> to vector<8x32xf32>
    %107 = vector.extract_strided_slice %105 {offsets = [0, 32], sizes = [8, 32], strides = [1, 1]} : vector<8x64xf32> to vector<8x32xf32>
    %c0_49 = arith.constant 0 : index
    %c0_50 = arith.constant 0 : index
    %108 = vector.load %arg9[%c0_49, %c0_50] : memref<32x32xf32, #tpu.memory_space<vmem>>, vector<32x32xf32>
    %cst_51 = arith.constant dense<0.000000e+00> : vector<8x32xf32>
    %109 = tpu.matmul %97, %108, %cst_51 {dimension_numbers = #tpu.dot_dimension_numbers<[1], [0], [0], [1], [0, 0, 1, 1], [], []>} : vector<8x32xf32>, vector<32x32xf32>, vector<8x32xf32> -> vector<8x32xf32>
    %110 = arith.addf %109, %20 : vector<8x32xf32>
    %c0_52 = arith.constant 0 : index
    %c0_53 = arith.constant 0 : index
    %111 = vector.load %arg11[%c0_52, %c0_53] : memref<32x32xf32, #tpu.memory_space<vmem>>, vector<32x32xf32>
    %cst_54 = arith.constant dense<0.000000e+00> : vector<8x32xf32>
    %112 = tpu.matmul %74, %111, %cst_54 {dimension_numbers = #tpu.dot_dimension_numbers<[1], [0], [0], [1], [0, 0, 1, 1], [], []>} : vector<8x32xf32>, vector<32x32xf32>, vector<8x32xf32> -> vector<8x32xf32>
    %113 = arith.addf %112, %23 : vector<8x32xf32>
    %114 = arith.mulf %106, %113 : vector<8x32xf32>
    %115 = arith.addf %110, %114 : vector<8x32xf32>
    %116 = math.tanh %115 : vector<8x32xf32>
    %cst_55 = arith.constant 1.000000e+00 : f32
    %117 = vector.broadcast %cst_55 : f32 to vector<8x32xf32>
    %118 = arith.subf %117, %107 : vector<8x32xf32>
    %119 = arith.mulf %118, %116 : vector<8x32xf32>
    %120 = arith.mulf %107, %74 : vector<8x32xf32>
    %121 = arith.addf %119, %120 : vector<8x32xf32>
    %122 = vector.extract_strided_slice %6 {offsets = [16, 0], sizes = [8, 96], strides = [1, 1]} : vector<64x96xf32> to vector<8x96xf32>
    %123 = vector.extract_strided_slice %122 {offsets = [0, 0], sizes = [8, 64], strides = [1, 1]} : vector<8x96xf32> to vector<8x64xf32>
    %cst_56 = arith.constant dense<0.000000e+00> : vector<8x64xf32>
    %124 = tpu.matmul %97, %24, %cst_56 {dimension_numbers = #tpu.dot_dimension_numbers<[1], [0], [0], [1], [0, 0, 1, 1], [], []>} : vector<8x32xf32>, vector<32x64xf32>, vector<8x64xf32> -> vector<8x64xf32>
    %125 = arith.addf %123, %124 : vector<8x64xf32>
    %126 = arith.negf %125 : vector<8x64xf32>
    %127 = math.exp %126 : vector<8x64xf32>
    %cst_57 = arith.constant 1.000000e+00 : f32
    %128 = vector.broadcast %cst_57 : f32 to vector<8x64xf32>
    %129 = arith.addf %128, %127 : vector<8x64xf32>
    %130 = arith.divf %128, %129 : vector<8x64xf32>
    %131 = vector.extract_strided_slice %130 {offsets = [0, 0], sizes = [8, 32], strides = [1, 1]} : vector<8x64xf32> to vector<8x32xf32>
    %132 = vector.extract_strided_slice %130 {offsets = [0, 32], sizes = [8, 32], strides = [1, 1]} : vector<8x64xf32> to vector<8x32xf32>
    %133 = vector.extract_strided_slice %122 {offsets = [0, 64], sizes = [8, 32], strides = [1, 1]} : vector<8x96xf32> to vector<8x32xf32>
    %c0_58 = arith.constant 0 : index
    %c0_59 = arith.constant 0 : index
    %134 = vector.load %arg5[%c0_58, %c0_59] : memref<32x32xf32, #tpu.memory_space<vmem>>, vector<32x32xf32>
    %cst_60 = arith.constant dense<0.000000e+00> : vector<8x32xf32>
    %135 = tpu.matmul %97, %134, %cst_60 {dimension_numbers = #tpu.dot_dimension_numbers<[1], [0], [0], [1], [0, 0, 1, 1], [], []>} : vector<8x32xf32>, vector<32x32xf32>, vector<8x32xf32> -> vector<8x32xf32>
    %136 = arith.addf %135, %14 : vector<8x32xf32>
    %137 = arith.mulf %131, %136 : vector<8x32xf32>
    %138 = arith.addf %133, %137 : vector<8x32xf32>
    %139 = math.tanh %138 : vector<8x32xf32>
    %cst_61 = arith.constant 1.000000e+00 : f32
    %140 = vector.broadcast %cst_61 : f32 to vector<8x32xf32>
    %141 = arith.subf %140, %132 : vector<8x32xf32>
    %142 = arith.mulf %141, %139 : vector<8x32xf32>
    %143 = arith.mulf %132, %97 : vector<8x32xf32>
    %144 = arith.addf %142, %143 : vector<8x32xf32>
    %145 = tpu.concatenate %144, %121 in 1 : vector<8x32xf32>, vector<8x32xf32> -> vector<8x64xf32>
    %cst_62 = arith.constant dense<0.000000e+00> : vector<8x64xf32>
    %146 = tpu.matmul %145, %25, %cst_62 {dimension_numbers = #tpu.dot_dimension_numbers<[1], [0], [0], [1], [0, 0, 1, 1], [], []>} : vector<8x64xf32>, vector<64x64xf32>, vector<8x64xf32> -> vector<8x64xf32>
    %147 = arith.addf %146, %17 : vector<8x64xf32>
    %148 = arith.negf %147 : vector<8x64xf32>
    %149 = math.exp %148 : vector<8x64xf32>
    %cst_63 = arith.constant 1.000000e+00 : f32
    %150 = vector.broadcast %cst_63 : f32 to vector<8x64xf32>
    %151 = arith.addf %150, %149 : vector<8x64xf32>
    %152 = arith.divf %150, %151 : vector<8x64xf32>
    %153 = vector.extract_strided_slice %152 {offsets = [0, 0], sizes = [8, 32], strides = [1, 1]} : vector<8x64xf32> to vector<8x32xf32>
    %154 = vector.extract_strided_slice %152 {offsets = [0, 32], sizes = [8, 32], strides = [1, 1]} : vector<8x64xf32> to vector<8x32xf32>
    %c0_64 = arith.constant 0 : index
    %c0_65 = arith.constant 0 : index
    %155 = vector.load %arg9[%c0_64, %c0_65] : memref<32x32xf32, #tpu.memory_space<vmem>>, vector<32x32xf32>
    %cst_66 = arith.constant dense<0.000000e+00> : vector<8x32xf32>
    %156 = tpu.matmul %144, %155, %cst_66 {dimension_numbers = #tpu.dot_dimension_numbers<[1], [0], [0], [1], [0, 0, 1, 1], [], []>} : vector<8x32xf32>, vector<32x32xf32>, vector<8x32xf32> -> vector<8x32xf32>
    %157 = arith.addf %156, %20 : vector<8x32xf32>
    %c0_67 = arith.constant 0 : index
    %c0_68 = arith.constant 0 : index
    %158 = vector.load %arg11[%c0_67, %c0_68] : memref<32x32xf32, #tpu.memory_space<vmem>>, vector<32x32xf32>
    %cst_69 = arith.constant dense<0.000000e+00> : vector<8x32xf32>
    %159 = tpu.matmul %121, %158, %cst_69 {dimension_numbers = #tpu.dot_dimension_numbers<[1], [0], [0], [1], [0, 0, 1, 1], [], []>} : vector<8x32xf32>, vector<32x32xf32>, vector<8x32xf32> -> vector<8x32xf32>
    %160 = arith.addf %159, %23 : vector<8x32xf32>
    %161 = arith.mulf %153, %160 : vector<8x32xf32>
    %162 = arith.addf %157, %161 : vector<8x32xf32>
    %163 = math.tanh %162 : vector<8x32xf32>
    %cst_70 = arith.constant 1.000000e+00 : f32
    %164 = vector.broadcast %cst_70 : f32 to vector<8x32xf32>
    %165 = arith.subf %164, %154 : vector<8x32xf32>
    %166 = arith.mulf %165, %163 : vector<8x32xf32>
    %167 = arith.mulf %154, %121 : vector<8x32xf32>
    %168 = arith.addf %166, %167 : vector<8x32xf32>
    %169 = vector.extract_strided_slice %6 {offsets = [24, 0], sizes = [8, 96], strides = [1, 1]} : vector<64x96xf32> to vector<8x96xf32>
    %170 = vector.extract_strided_slice %169 {offsets = [0, 0], sizes = [8, 64], strides = [1, 1]} : vector<8x96xf32> to vector<8x64xf32>
    %cst_71 = arith.constant dense<0.000000e+00> : vector<8x64xf32>
    %171 = tpu.matmul %144, %24, %cst_71 {dimension_numbers = #tpu.dot_dimension_numbers<[1], [0], [0], [1], [0, 0, 1, 1], [], []>} : vector<8x32xf32>, vector<32x64xf32>, vector<8x64xf32> -> vector<8x64xf32>
    %172 = arith.addf %170, %171 : vector<8x64xf32>
    %173 = arith.negf %172 : vector<8x64xf32>
    %174 = math.exp %173 : vector<8x64xf32>
    %cst_72 = arith.constant 1.000000e+00 : f32
    %175 = vector.broadcast %cst_72 : f32 to vector<8x64xf32>
    %176 = arith.addf %175, %174 : vector<8x64xf32>
    %177 = arith.divf %175, %176 : vector<8x64xf32>
    %178 = vector.extract_strided_slice %177 {offsets = [0, 0], sizes = [8, 32], strides = [1, 1]} : vector<8x64xf32> to vector<8x32xf32>
    %179 = vector.extract_strided_slice %177 {offsets = [0, 32], sizes = [8, 32], strides = [1, 1]} : vector<8x64xf32> to vector<8x32xf32>
    %180 = vector.extract_strided_slice %169 {offsets = [0, 64], sizes = [8, 32], strides = [1, 1]} : vector<8x96xf32> to vector<8x32xf32>
    %c0_73 = arith.constant 0 : index
    %c0_74 = arith.constant 0 : index
    %181 = vector.load %arg5[%c0_73, %c0_74] : memref<32x32xf32, #tpu.memory_space<vmem>>, vector<32x32xf32>
    %cst_75 = arith.constant dense<0.000000e+00> : vector<8x32xf32>
    %182 = tpu.matmul %144, %181, %cst_75 {dimension_numbers = #tpu.dot_dimension_numbers<[1], [0], [0], [1], [0, 0, 1, 1], [], []>} : vector<8x32xf32>, vector<32x32xf32>, vector<8x32xf32> -> vector<8x32xf32>
    %183 = arith.addf %182, %14 : vector<8x32xf32>
    %184 = arith.mulf %178, %183 : vector<8x32xf32>
    %185 = arith.addf %180, %184 : vector<8x32xf32>
    %186 = math.tanh %185 : vector<8x32xf32>
    %cst_76 = arith.constant 1.000000e+00 : f32
    %187 = vector.broadcast %cst_76 : f32 to vector<8x32xf32>
    %188 = arith.subf %187, %179 : vector<8x32xf32>
    %189 = arith.mulf %188, %186 : vector<8x32xf32>
    %190 = arith.mulf %179, %144 : vector<8x32xf32>
    %191 = arith.addf %189, %190 : vector<8x32xf32>
    %192 = tpu.concatenate %191, %168 in 1 : vector<8x32xf32>, vector<8x32xf32> -> vector<8x64xf32>
    %cst_77 = arith.constant dense<0.000000e+00> : vector<8x64xf32>
    %193 = tpu.matmul %192, %25, %cst_77 {dimension_numbers = #tpu.dot_dimension_numbers<[1], [0], [0], [1], [0, 0, 1, 1], [], []>} : vector<8x64xf32>, vector<64x64xf32>, vector<8x64xf32> -> vector<8x64xf32>
    %194 = arith.addf %193, %17 : vector<8x64xf32>
    %195 = arith.negf %194 : vector<8x64xf32>
    %196 = math.exp %195 : vector<8x64xf32>
    %cst_78 = arith.constant 1.000000e+00 : f32
    %197 = vector.broadcast %cst_78 : f32 to vector<8x64xf32>
    %198 = arith.addf %197, %196 : vector<8x64xf32>
    %199 = arith.divf %197, %198 : vector<8x64xf32>
    %200 = vector.extract_strided_slice %199 {offsets = [0, 0], sizes = [8, 32], strides = [1, 1]} : vector<8x64xf32> to vector<8x32xf32>
    %201 = vector.extract_strided_slice %199 {offsets = [0, 32], sizes = [8, 32], strides = [1, 1]} : vector<8x64xf32> to vector<8x32xf32>
    %c0_79 = arith.constant 0 : index
    %c0_80 = arith.constant 0 : index
    %202 = vector.load %arg9[%c0_79, %c0_80] : memref<32x32xf32, #tpu.memory_space<vmem>>, vector<32x32xf32>
    %cst_81 = arith.constant dense<0.000000e+00> : vector<8x32xf32>
    %203 = tpu.matmul %191, %202, %cst_81 {dimension_numbers = #tpu.dot_dimension_numbers<[1], [0], [0], [1], [0, 0, 1, 1], [], []>} : vector<8x32xf32>, vector<32x32xf32>, vector<8x32xf32> -> vector<8x32xf32>
    %204 = arith.addf %203, %20 : vector<8x32xf32>
    %c0_82 = arith.constant 0 : index
    %c0_83 = arith.constant 0 : index
    %205 = vector.load %arg11[%c0_82, %c0_83] : memref<32x32xf32, #tpu.memory_space<vmem>>, vector<32x32xf32>
    %cst_84 = arith.constant dense<0.000000e+00> : vector<8x32xf32>
    %206 = tpu.matmul %168, %205, %cst_84 {dimension_numbers = #tpu.dot_dimension_numbers<[1], [0], [0], [1], [0, 0, 1, 1], [], []>} : vector<8x32xf32>, vector<32x32xf32>, vector<8x32xf32> -> vector<8x32xf32>
    %207 = arith.addf %206, %23 : vector<8x32xf32>
    %208 = arith.mulf %200, %207 : vector<8x32xf32>
    %209 = arith.addf %204, %208 : vector<8x32xf32>
    %210 = math.tanh %209 : vector<8x32xf32>
    %cst_85 = arith.constant 1.000000e+00 : f32
    %211 = vector.broadcast %cst_85 : f32 to vector<8x32xf32>
    %212 = arith.subf %211, %201 : vector<8x32xf32>
    %213 = arith.mulf %212, %210 : vector<8x32xf32>
    %214 = arith.mulf %201, %168 : vector<8x32xf32>
    %215 = arith.addf %213, %214 : vector<8x32xf32>
    %216 = vector.extract_strided_slice %6 {offsets = [32, 0], sizes = [8, 96], strides = [1, 1]} : vector<64x96xf32> to vector<8x96xf32>
    %217 = vector.extract_strided_slice %216 {offsets = [0, 0], sizes = [8, 64], strides = [1, 1]} : vector<8x96xf32> to vector<8x64xf32>
    %cst_86 = arith.constant dense<0.000000e+00> : vector<8x64xf32>
    %218 = tpu.matmul %191, %24, %cst_86 {dimension_numbers = #tpu.dot_dimension_numbers<[1], [0], [0], [1], [0, 0, 1, 1], [], []>} : vector<8x32xf32>, vector<32x64xf32>, vector<8x64xf32> -> vector<8x64xf32>
    %219 = arith.addf %217, %218 : vector<8x64xf32>
    %220 = arith.negf %219 : vector<8x64xf32>
    %221 = math.exp %220 : vector<8x64xf32>
    %cst_87 = arith.constant 1.000000e+00 : f32
    %222 = vector.broadcast %cst_87 : f32 to vector<8x64xf32>
    %223 = arith.addf %222, %221 : vector<8x64xf32>
    %224 = arith.divf %222, %223 : vector<8x64xf32>
    %225 = vector.extract_strided_slice %224 {offsets = [0, 0], sizes = [8, 32], strides = [1, 1]} : vector<8x64xf32> to vector<8x32xf32>
    %226 = vector.extract_strided_slice %224 {offsets = [0, 32], sizes = [8, 32], strides = [1, 1]} : vector<8x64xf32> to vector<8x32xf32>
    %227 = vector.extract_strided_slice %216 {offsets = [0, 64], sizes = [8, 32], strides = [1, 1]} : vector<8x96xf32> to vector<8x32xf32>
    %c0_88 = arith.constant 0 : index
    %c0_89 = arith.constant 0 : index
    %228 = vector.load %arg5[%c0_88, %c0_89] : memref<32x32xf32, #tpu.memory_space<vmem>>, vector<32x32xf32>
    %cst_90 = arith.constant dense<0.000000e+00> : vector<8x32xf32>
    %229 = tpu.matmul %191, %228, %cst_90 {dimension_numbers = #tpu.dot_dimension_numbers<[1], [0], [0], [1], [0, 0, 1, 1], [], []>} : vector<8x32xf32>, vector<32x32xf32>, vector<8x32xf32> -> vector<8x32xf32>
    %230 = arith.addf %229, %14 : vector<8x32xf32>
    %231 = arith.mulf %225, %230 : vector<8x32xf32>
    %232 = arith.addf %227, %231 : vector<8x32xf32>
    %233 = math.tanh %232 : vector<8x32xf32>
    %cst_91 = arith.constant 1.000000e+00 : f32
    %234 = vector.broadcast %cst_91 : f32 to vector<8x32xf32>
    %235 = arith.subf %234, %226 : vector<8x32xf32>
    %236 = arith.mulf %235, %233 : vector<8x32xf32>
    %237 = arith.mulf %226, %191 : vector<8x32xf32>
    %238 = arith.addf %236, %237 : vector<8x32xf32>
    %239 = tpu.concatenate %238, %215 in 1 : vector<8x32xf32>, vector<8x32xf32> -> vector<8x64xf32>
    %cst_92 = arith.constant dense<0.000000e+00> : vector<8x64xf32>
    %240 = tpu.matmul %239, %25, %cst_92 {dimension_numbers = #tpu.dot_dimension_numbers<[1], [0], [0], [1], [0, 0, 1, 1], [], []>} : vector<8x64xf32>, vector<64x64xf32>, vector<8x64xf32> -> vector<8x64xf32>
    %241 = arith.addf %240, %17 : vector<8x64xf32>
    %242 = arith.negf %241 : vector<8x64xf32>
    %243 = math.exp %242 : vector<8x64xf32>
    %cst_93 = arith.constant 1.000000e+00 : f32
    %244 = vector.broadcast %cst_93 : f32 to vector<8x64xf32>
    %245 = arith.addf %244, %243 : vector<8x64xf32>
    %246 = arith.divf %244, %245 : vector<8x64xf32>
    %247 = vector.extract_strided_slice %246 {offsets = [0, 0], sizes = [8, 32], strides = [1, 1]} : vector<8x64xf32> to vector<8x32xf32>
    %248 = vector.extract_strided_slice %246 {offsets = [0, 32], sizes = [8, 32], strides = [1, 1]} : vector<8x64xf32> to vector<8x32xf32>
    %c0_94 = arith.constant 0 : index
    %c0_95 = arith.constant 0 : index
    %249 = vector.load %arg9[%c0_94, %c0_95] : memref<32x32xf32, #tpu.memory_space<vmem>>, vector<32x32xf32>
    %cst_96 = arith.constant dense<0.000000e+00> : vector<8x32xf32>
    %250 = tpu.matmul %238, %249, %cst_96 {dimension_numbers = #tpu.dot_dimension_numbers<[1], [0], [0], [1], [0, 0, 1, 1], [], []>} : vector<8x32xf32>, vector<32x32xf32>, vector<8x32xf32> -> vector<8x32xf32>
    %251 = arith.addf %250, %20 : vector<8x32xf32>
    %c0_97 = arith.constant 0 : index
    %c0_98 = arith.constant 0 : index
    %252 = vector.load %arg11[%c0_97, %c0_98] : memref<32x32xf32, #tpu.memory_space<vmem>>, vector<32x32xf32>
    %cst_99 = arith.constant dense<0.000000e+00> : vector<8x32xf32>
    %253 = tpu.matmul %215, %252, %cst_99 {dimension_numbers = #tpu.dot_dimension_numbers<[1], [0], [0], [1], [0, 0, 1, 1], [], []>} : vector<8x32xf32>, vector<32x32xf32>, vector<8x32xf32> -> vector<8x32xf32>
    %254 = arith.addf %253, %23 : vector<8x32xf32>
    %255 = arith.mulf %247, %254 : vector<8x32xf32>
    %256 = arith.addf %251, %255 : vector<8x32xf32>
    %257 = math.tanh %256 : vector<8x32xf32>
    %cst_100 = arith.constant 1.000000e+00 : f32
    %258 = vector.broadcast %cst_100 : f32 to vector<8x32xf32>
    %259 = arith.subf %258, %248 : vector<8x32xf32>
    %260 = arith.mulf %259, %257 : vector<8x32xf32>
    %261 = arith.mulf %248, %215 : vector<8x32xf32>
    %262 = arith.addf %260, %261 : vector<8x32xf32>
    %263 = vector.extract_strided_slice %6 {offsets = [40, 0], sizes = [8, 96], strides = [1, 1]} : vector<64x96xf32> to vector<8x96xf32>
    %264 = vector.extract_strided_slice %263 {offsets = [0, 0], sizes = [8, 64], strides = [1, 1]} : vector<8x96xf32> to vector<8x64xf32>
    %cst_101 = arith.constant dense<0.000000e+00> : vector<8x64xf32>
    %265 = tpu.matmul %238, %24, %cst_101 {dimension_numbers = #tpu.dot_dimension_numbers<[1], [0], [0], [1], [0, 0, 1, 1], [], []>} : vector<8x32xf32>, vector<32x64xf32>, vector<8x64xf32> -> vector<8x64xf32>
    %266 = arith.addf %264, %265 : vector<8x64xf32>
    %267 = arith.negf %266 : vector<8x64xf32>
    %268 = math.exp %267 : vector<8x64xf32>
    %cst_102 = arith.constant 1.000000e+00 : f32
    %269 = vector.broadcast %cst_102 : f32 to vector<8x64xf32>
    %270 = arith.addf %269, %268 : vector<8x64xf32>
    %271 = arith.divf %269, %270 : vector<8x64xf32>
    %272 = vector.extract_strided_slice %271 {offsets = [0, 0], sizes = [8, 32], strides = [1, 1]} : vector<8x64xf32> to vector<8x32xf32>
    %273 = vector.extract_strided_slice %271 {offsets = [0, 32], sizes = [8, 32], strides = [1, 1]} : vector<8x64xf32> to vector<8x32xf32>
    %274 = vector.extract_strided_slice %263 {offsets = [0, 64], sizes = [8, 32], strides = [1, 1]} : vector<8x96xf32> to vector<8x32xf32>
    %c0_103 = arith.constant 0 : index
    %c0_104 = arith.constant 0 : index
    %275 = vector.load %arg5[%c0_103, %c0_104] : memref<32x32xf32, #tpu.memory_space<vmem>>, vector<32x32xf32>
    %cst_105 = arith.constant dense<0.000000e+00> : vector<8x32xf32>
    %276 = tpu.matmul %238, %275, %cst_105 {dimension_numbers = #tpu.dot_dimension_numbers<[1], [0], [0], [1], [0, 0, 1, 1], [], []>} : vector<8x32xf32>, vector<32x32xf32>, vector<8x32xf32> -> vector<8x32xf32>
    %277 = arith.addf %276, %14 : vector<8x32xf32>
    %278 = arith.mulf %272, %277 : vector<8x32xf32>
    %279 = arith.addf %274, %278 : vector<8x32xf32>
    %280 = math.tanh %279 : vector<8x32xf32>
    %cst_106 = arith.constant 1.000000e+00 : f32
    %281 = vector.broadcast %cst_106 : f32 to vector<8x32xf32>
    %282 = arith.subf %281, %273 : vector<8x32xf32>
    %283 = arith.mulf %282, %280 : vector<8x32xf32>
    %284 = arith.mulf %273, %238 : vector<8x32xf32>
    %285 = arith.addf %283, %284 : vector<8x32xf32>
    %286 = tpu.concatenate %285, %262 in 1 : vector<8x32xf32>, vector<8x32xf32> -> vector<8x64xf32>
    %cst_107 = arith.constant dense<0.000000e+00> : vector<8x64xf32>
    %287 = tpu.matmul %286, %25, %cst_107 {dimension_numbers = #tpu.dot_dimension_numbers<[1], [0], [0], [1], [0, 0, 1, 1], [], []>} : vector<8x64xf32>, vector<64x64xf32>, vector<8x64xf32> -> vector<8x64xf32>
    %288 = arith.addf %287, %17 : vector<8x64xf32>
    %289 = arith.negf %288 : vector<8x64xf32>
    %290 = math.exp %289 : vector<8x64xf32>
    %cst_108 = arith.constant 1.000000e+00 : f32
    %291 = vector.broadcast %cst_108 : f32 to vector<8x64xf32>
    %292 = arith.addf %291, %290 : vector<8x64xf32>
    %293 = arith.divf %291, %292 : vector<8x64xf32>
    %294 = vector.extract_strided_slice %293 {offsets = [0, 0], sizes = [8, 32], strides = [1, 1]} : vector<8x64xf32> to vector<8x32xf32>
    %295 = vector.extract_strided_slice %293 {offsets = [0, 32], sizes = [8, 32], strides = [1, 1]} : vector<8x64xf32> to vector<8x32xf32>
    %c0_109 = arith.constant 0 : index
    %c0_110 = arith.constant 0 : index
    %296 = vector.load %arg9[%c0_109, %c0_110] : memref<32x32xf32, #tpu.memory_space<vmem>>, vector<32x32xf32>
    %cst_111 = arith.constant dense<0.000000e+00> : vector<8x32xf32>
    %297 = tpu.matmul %285, %296, %cst_111 {dimension_numbers = #tpu.dot_dimension_numbers<[1], [0], [0], [1], [0, 0, 1, 1], [], []>} : vector<8x32xf32>, vector<32x32xf32>, vector<8x32xf32> -> vector<8x32xf32>
    %298 = arith.addf %297, %20 : vector<8x32xf32>
    %c0_112 = arith.constant 0 : index
    %c0_113 = arith.constant 0 : index
    %299 = vector.load %arg11[%c0_112, %c0_113] : memref<32x32xf32, #tpu.memory_space<vmem>>, vector<32x32xf32>
    %cst_114 = arith.constant dense<0.000000e+00> : vector<8x32xf32>
    %300 = tpu.matmul %262, %299, %cst_114 {dimension_numbers = #tpu.dot_dimension_numbers<[1], [0], [0], [1], [0, 0, 1, 1], [], []>} : vector<8x32xf32>, vector<32x32xf32>, vector<8x32xf32> -> vector<8x32xf32>
    %301 = arith.addf %300, %23 : vector<8x32xf32>
    %302 = arith.mulf %294, %301 : vector<8x32xf32>
    %303 = arith.addf %298, %302 : vector<8x32xf32>
    %304 = math.tanh %303 : vector<8x32xf32>
    %cst_115 = arith.constant 1.000000e+00 : f32
    %305 = vector.broadcast %cst_115 : f32 to vector<8x32xf32>
    %306 = arith.subf %305, %295 : vector<8x32xf32>
    %307 = arith.mulf %306, %304 : vector<8x32xf32>
    %308 = arith.mulf %295, %262 : vector<8x32xf32>
    %309 = arith.addf %307, %308 : vector<8x32xf32>
    %310 = vector.extract_strided_slice %6 {offsets = [48, 0], sizes = [8, 96], strides = [1, 1]} : vector<64x96xf32> to vector<8x96xf32>
    %311 = vector.extract_strided_slice %310 {offsets = [0, 0], sizes = [8, 64], strides = [1, 1]} : vector<8x96xf32> to vector<8x64xf32>
    %cst_116 = arith.constant dense<0.000000e+00> : vector<8x64xf32>
    %312 = tpu.matmul %285, %24, %cst_116 {dimension_numbers = #tpu.dot_dimension_numbers<[1], [0], [0], [1], [0, 0, 1, 1], [], []>} : vector<8x32xf32>, vector<32x64xf32>, vector<8x64xf32> -> vector<8x64xf32>
    %313 = arith.addf %311, %312 : vector<8x64xf32>
    %314 = arith.negf %313 : vector<8x64xf32>
    %315 = math.exp %314 : vector<8x64xf32>
    %cst_117 = arith.constant 1.000000e+00 : f32
    %316 = vector.broadcast %cst_117 : f32 to vector<8x64xf32>
    %317 = arith.addf %316, %315 : vector<8x64xf32>
    %318 = arith.divf %316, %317 : vector<8x64xf32>
    %319 = vector.extract_strided_slice %318 {offsets = [0, 0], sizes = [8, 32], strides = [1, 1]} : vector<8x64xf32> to vector<8x32xf32>
    %320 = vector.extract_strided_slice %318 {offsets = [0, 32], sizes = [8, 32], strides = [1, 1]} : vector<8x64xf32> to vector<8x32xf32>
    %321 = vector.extract_strided_slice %310 {offsets = [0, 64], sizes = [8, 32], strides = [1, 1]} : vector<8x96xf32> to vector<8x32xf32>
    %c0_118 = arith.constant 0 : index
    %c0_119 = arith.constant 0 : index
    %322 = vector.load %arg5[%c0_118, %c0_119] : memref<32x32xf32, #tpu.memory_space<vmem>>, vector<32x32xf32>
    %cst_120 = arith.constant dense<0.000000e+00> : vector<8x32xf32>
    %323 = tpu.matmul %285, %322, %cst_120 {dimension_numbers = #tpu.dot_dimension_numbers<[1], [0], [0], [1], [0, 0, 1, 1], [], []>} : vector<8x32xf32>, vector<32x32xf32>, vector<8x32xf32> -> vector<8x32xf32>
    %324 = arith.addf %323, %14 : vector<8x32xf32>
    %325 = arith.mulf %319, %324 : vector<8x32xf32>
    %326 = arith.addf %321, %325 : vector<8x32xf32>
    %327 = math.tanh %326 : vector<8x32xf32>
    %cst_121 = arith.constant 1.000000e+00 : f32
    %328 = vector.broadcast %cst_121 : f32 to vector<8x32xf32>
    %329 = arith.subf %328, %320 : vector<8x32xf32>
    %330 = arith.mulf %329, %327 : vector<8x32xf32>
    %331 = arith.mulf %320, %285 : vector<8x32xf32>
    %332 = arith.addf %330, %331 : vector<8x32xf32>
    %333 = tpu.concatenate %332, %309 in 1 : vector<8x32xf32>, vector<8x32xf32> -> vector<8x64xf32>
    %cst_122 = arith.constant dense<0.000000e+00> : vector<8x64xf32>
    %334 = tpu.matmul %333, %25, %cst_122 {dimension_numbers = #tpu.dot_dimension_numbers<[1], [0], [0], [1], [0, 0, 1, 1], [], []>} : vector<8x64xf32>, vector<64x64xf32>, vector<8x64xf32> -> vector<8x64xf32>
    %335 = arith.addf %334, %17 : vector<8x64xf32>
    %336 = arith.negf %335 : vector<8x64xf32>
    %337 = math.exp %336 : vector<8x64xf32>
    %cst_123 = arith.constant 1.000000e+00 : f32
    %338 = vector.broadcast %cst_123 : f32 to vector<8x64xf32>
    %339 = arith.addf %338, %337 : vector<8x64xf32>
    %340 = arith.divf %338, %339 : vector<8x64xf32>
    %341 = vector.extract_strided_slice %340 {offsets = [0, 0], sizes = [8, 32], strides = [1, 1]} : vector<8x64xf32> to vector<8x32xf32>
    %342 = vector.extract_strided_slice %340 {offsets = [0, 32], sizes = [8, 32], strides = [1, 1]} : vector<8x64xf32> to vector<8x32xf32>
    %c0_124 = arith.constant 0 : index
    %c0_125 = arith.constant 0 : index
    %343 = vector.load %arg9[%c0_124, %c0_125] : memref<32x32xf32, #tpu.memory_space<vmem>>, vector<32x32xf32>
    %cst_126 = arith.constant dense<0.000000e+00> : vector<8x32xf32>
    %344 = tpu.matmul %332, %343, %cst_126 {dimension_numbers = #tpu.dot_dimension_numbers<[1], [0], [0], [1], [0, 0, 1, 1], [], []>} : vector<8x32xf32>, vector<32x32xf32>, vector<8x32xf32> -> vector<8x32xf32>
    %345 = arith.addf %344, %20 : vector<8x32xf32>
    %c0_127 = arith.constant 0 : index
    %c0_128 = arith.constant 0 : index
    %346 = vector.load %arg11[%c0_127, %c0_128] : memref<32x32xf32, #tpu.memory_space<vmem>>, vector<32x32xf32>
    %cst_129 = arith.constant dense<0.000000e+00> : vector<8x32xf32>
    %347 = tpu.matmul %309, %346, %cst_129 {dimension_numbers = #tpu.dot_dimension_numbers<[1], [0], [0], [1], [0, 0, 1, 1], [], []>} : vector<8x32xf32>, vector<32x32xf32>, vector<8x32xf32> -> vector<8x32xf32>
    %348 = arith.addf %347, %23 : vector<8x32xf32>
    %349 = arith.mulf %341, %348 : vector<8x32xf32>
    %350 = arith.addf %345, %349 : vector<8x32xf32>
    %351 = math.tanh %350 : vector<8x32xf32>
    %cst_130 = arith.constant 1.000000e+00 : f32
    %352 = vector.broadcast %cst_130 : f32 to vector<8x32xf32>
    %353 = arith.subf %352, %342 : vector<8x32xf32>
    %354 = arith.mulf %353, %351 : vector<8x32xf32>
    %355 = arith.mulf %342, %309 : vector<8x32xf32>
    %356 = arith.addf %354, %355 : vector<8x32xf32>
    %357 = vector.extract_strided_slice %6 {offsets = [56, 0], sizes = [8, 96], strides = [1, 1]} : vector<64x96xf32> to vector<8x96xf32>
    %358 = vector.extract_strided_slice %357 {offsets = [0, 0], sizes = [8, 64], strides = [1, 1]} : vector<8x96xf32> to vector<8x64xf32>
    %cst_131 = arith.constant dense<0.000000e+00> : vector<8x64xf32>
    %359 = tpu.matmul %332, %24, %cst_131 {dimension_numbers = #tpu.dot_dimension_numbers<[1], [0], [0], [1], [0, 0, 1, 1], [], []>} : vector<8x32xf32>, vector<32x64xf32>, vector<8x64xf32> -> vector<8x64xf32>
    %360 = arith.addf %358, %359 : vector<8x64xf32>
    %361 = arith.negf %360 : vector<8x64xf32>
    %362 = math.exp %361 : vector<8x64xf32>
    %cst_132 = arith.constant 1.000000e+00 : f32
    %363 = vector.broadcast %cst_132 : f32 to vector<8x64xf32>
    %364 = arith.addf %363, %362 : vector<8x64xf32>
    %365 = arith.divf %363, %364 : vector<8x64xf32>
    %366 = vector.extract_strided_slice %365 {offsets = [0, 0], sizes = [8, 32], strides = [1, 1]} : vector<8x64xf32> to vector<8x32xf32>
    %367 = vector.extract_strided_slice %365 {offsets = [0, 32], sizes = [8, 32], strides = [1, 1]} : vector<8x64xf32> to vector<8x32xf32>
    %368 = vector.extract_strided_slice %357 {offsets = [0, 64], sizes = [8, 32], strides = [1, 1]} : vector<8x96xf32> to vector<8x32xf32>
    %c0_133 = arith.constant 0 : index
    %c0_134 = arith.constant 0 : index
    %369 = vector.load %arg5[%c0_133, %c0_134] : memref<32x32xf32, #tpu.memory_space<vmem>>, vector<32x32xf32>
    %cst_135 = arith.constant dense<0.000000e+00> : vector<8x32xf32>
    %370 = tpu.matmul %332, %369, %cst_135 {dimension_numbers = #tpu.dot_dimension_numbers<[1], [0], [0], [1], [0, 0, 1, 1], [], []>} : vector<8x32xf32>, vector<32x32xf32>, vector<8x32xf32> -> vector<8x32xf32>
    %371 = arith.addf %370, %14 : vector<8x32xf32>
    %372 = arith.mulf %366, %371 : vector<8x32xf32>
    %373 = arith.addf %368, %372 : vector<8x32xf32>
    %374 = math.tanh %373 : vector<8x32xf32>
    %cst_136 = arith.constant 1.000000e+00 : f32
    %375 = vector.broadcast %cst_136 : f32 to vector<8x32xf32>
    %376 = arith.subf %375, %367 : vector<8x32xf32>
    %377 = arith.mulf %376, %374 : vector<8x32xf32>
    %378 = arith.mulf %367, %332 : vector<8x32xf32>
    %379 = arith.addf %377, %378 : vector<8x32xf32>
    %380 = tpu.concatenate %379, %356 in 1 : vector<8x32xf32>, vector<8x32xf32> -> vector<8x64xf32>
    %cst_137 = arith.constant dense<0.000000e+00> : vector<8x64xf32>
    %381 = tpu.matmul %380, %25, %cst_137 {dimension_numbers = #tpu.dot_dimension_numbers<[1], [0], [0], [1], [0, 0, 1, 1], [], []>} : vector<8x64xf32>, vector<64x64xf32>, vector<8x64xf32> -> vector<8x64xf32>
    %382 = arith.addf %381, %17 : vector<8x64xf32>
    %383 = arith.negf %382 : vector<8x64xf32>
    %384 = math.exp %383 : vector<8x64xf32>
    %cst_138 = arith.constant 1.000000e+00 : f32
    %385 = vector.broadcast %cst_138 : f32 to vector<8x64xf32>
    %386 = arith.addf %385, %384 : vector<8x64xf32>
    %387 = arith.divf %385, %386 : vector<8x64xf32>
    %388 = vector.extract_strided_slice %387 {offsets = [0, 0], sizes = [8, 32], strides = [1, 1]} : vector<8x64xf32> to vector<8x32xf32>
    %389 = vector.extract_strided_slice %387 {offsets = [0, 32], sizes = [8, 32], strides = [1, 1]} : vector<8x64xf32> to vector<8x32xf32>
    %c0_139 = arith.constant 0 : index
    %c0_140 = arith.constant 0 : index
    %390 = vector.load %arg9[%c0_139, %c0_140] : memref<32x32xf32, #tpu.memory_space<vmem>>, vector<32x32xf32>
    %cst_141 = arith.constant dense<0.000000e+00> : vector<8x32xf32>
    %391 = tpu.matmul %379, %390, %cst_141 {dimension_numbers = #tpu.dot_dimension_numbers<[1], [0], [0], [1], [0, 0, 1, 1], [], []>} : vector<8x32xf32>, vector<32x32xf32>, vector<8x32xf32> -> vector<8x32xf32>
    %392 = arith.addf %391, %20 : vector<8x32xf32>
    %c0_142 = arith.constant 0 : index
    %c0_143 = arith.constant 0 : index
    %393 = vector.load %arg11[%c0_142, %c0_143] : memref<32x32xf32, #tpu.memory_space<vmem>>, vector<32x32xf32>
    %cst_144 = arith.constant dense<0.000000e+00> : vector<8x32xf32>
    %394 = tpu.matmul %356, %393, %cst_144 {dimension_numbers = #tpu.dot_dimension_numbers<[1], [0], [0], [1], [0, 0, 1, 1], [], []>} : vector<8x32xf32>, vector<32x32xf32>, vector<8x32xf32> -> vector<8x32xf32>
    %395 = arith.addf %394, %23 : vector<8x32xf32>
    %396 = arith.mulf %388, %395 : vector<8x32xf32>
    %397 = arith.addf %392, %396 : vector<8x32xf32>
    %398 = math.tanh %397 : vector<8x32xf32>
    %cst_145 = arith.constant 1.000000e+00 : f32
    %399 = vector.broadcast %cst_145 : f32 to vector<8x32xf32>
    %400 = arith.subf %399, %389 : vector<8x32xf32>
    %401 = arith.mulf %400, %398 : vector<8x32xf32>
    %402 = arith.mulf %389, %356 : vector<8x32xf32>
    %403 = arith.addf %401, %402 : vector<8x32xf32>
    %404 = tpu.concatenate %74, %121, %168, %215, %262, %309, %356, %403 in 0 : vector<8x32xf32>, vector<8x32xf32>, vector<8x32xf32>, vector<8x32xf32>, vector<8x32xf32>, vector<8x32xf32>, vector<8x32xf32>, vector<8x32xf32> -> vector<64x32xf32>
    %c0_146 = arith.constant 0 : index
    %c0_147 = arith.constant 0 : index
    %405 = vector.load %arg13[%c0_146, %c0_147] : memref<32x32xf32, #tpu.memory_space<vmem>>, vector<32x32xf32>
    %cst_148 = arith.constant dense<0.000000e+00> : vector<64x32xf32>
    %406 = tpu.matmul %404, %405, %cst_148 {dimension_numbers = #tpu.dot_dimension_numbers<[1], [0], [0], [1], [0, 0, 1, 1], [], []>} : vector<64x32xf32>, vector<32x32xf32>, vector<64x32xf32> -> vector<64x32xf32>
    %407 = arith.addf %406, %11 : vector<64x32xf32>
    %cst_149 = arith.constant 0.000000e+00 : f32
    %408 = vector.broadcast %cst_149 : f32 to vector<64x32xf32>
    %409 = arith.maximumf %407, %408 : vector<64x32xf32>
    %c0_150 = arith.constant 0 : index
    %c0_151 = arith.constant 0 : index
    %410 = vector.load %arg16[%c0_150, %c0_151] : memref<1x32xf32, #tpu.memory_space<vmem>>, vector<1x32xf32>
    %411 = vector.broadcast %410 : vector<1x32xf32> to vector<64x32xf32>
    %412 = arith.mulf %409, %411 : vector<64x32xf32>
    %cst_152 = arith.constant dense<0.000000e+00> : vector<64xf32>
    %413 = vector.multi_reduction <add>, %412, %cst_152 [1] : vector<64x32xf32> to vector<64xf32>
    %414 = vector.shape_cast %413 : vector<64xf32> to vector<64x1xf32>
    %c0_153 = arith.constant 0 : index
    %c0_154 = arith.constant 0 : index
    %415 = vector.load %arg17[%c0_153, %c0_154] : memref<1x1xf32, #tpu.memory_space<vmem>>, vector<1x1xf32>
    %416 = vector.broadcast %415 : vector<1x1xf32> to vector<64x1xf32>
    %417 = arith.addf %414, %416 : vector<64x1xf32>
    %418 = arith.negf %417 : vector<64x1xf32>
    %419 = math.exp %418 : vector<64x1xf32>
    %cst_155 = arith.constant 1.000000e+00 : f32
    %420 = vector.broadcast %cst_155 : f32 to vector<64x1xf32>
    %421 = arith.addf %420, %419 : vector<64x1xf32>
    %422 = arith.divf %420, %421 : vector<64x1xf32>
    %c0_156 = arith.constant 0 : index
    %c0_157 = arith.constant 0 : index
    %423 = vector.load %arg18[%c0_156, %c0_157] : memref<64x1xf32, #tpu.memory_space<vmem>>, vector<64x1xf32>
    tpu.vector_store %arg18[%c0_156, %c0_157], %422 {strides = array<i32>} : memref<64x1xf32, #tpu.memory_space<vmem>>, vector<64x1xf32>,
    return
  }
}

</mosaic_0001>

<llo_original>
// kernel: tpu_custom_call.1
$region0: #{tpu_custom_call.1}
  #allocation0 [shape = 'u32[]', space=smem, size = 0x4, offset = 0x4, fixed_abs, tag = 'smem constant byte address 0x4 - core index']
  #allocation1 [shape = 'u32[144,128]{1,0:T(1,128)}', space=vmem, size = 0x12000, scoped, tag = 'internal scratch']
  #allocation2 [shape = 'f32[1,1]{1,0:T(1,128)S(1)}', space=vmem, size = 0x200, scoped, tag = 'scoped memory for tpu_custom_call.1']
  %s0 = inlined_call_operand.vmem [shape: f32[64,4], index: 0, kind: input, shape index: {}]
  %s1 = inlined_call_operand.vmem [shape: f32[64,4], index: 1, kind: input, shape index: {}]
  %s2 = inlined_call_operand.hbm [shape: f32[4,96], index: 2, kind: input, shape index: {}]
  %s3 = inlined_call_operand.vmem [shape: f32[1,96], index: 3, kind: input, shape index: {}]
  %s4 = inlined_call_operand.vmem [shape: f32[32,64], index: 4, kind: input, shape index: {}]
  %s5 = inlined_call_operand.vmem [shape: f32[32,32], index: 5, kind: input, shape index: {}]
  %s6 = inlined_call_operand.hbm [shape: f32[1,32], index: 6, kind: input, shape index: {}]
  %s7 = inlined_call_operand.vmem [shape: f32[64,64], index: 7, kind: input, shape index: {}]
  %s8 = inlined_call_operand.hbm [shape: f32[1,64], index: 8, kind: input, shape index: {}]
  %s9 = inlined_call_operand.hbm [shape: f32[32,32], index: 9, kind: input, shape index: {}]
  %s10 = inlined_call_operand.hbm [shape: f32[1,32], index: 10, kind: input, shape index: {}]
  %s11 = inlined_call_operand.hbm [shape: f32[32,32], index: 11, kind: input, shape index: {}]
  %s12 = inlined_call_operand.hbm [shape: f32[1,32], index: 12, kind: input, shape index: {}]
  %s13 = inlined_call_operand.vmem [shape: f32[32,32], index: 13, kind: input, shape index: {}]
  %s14 = inlined_call_operand.hbm [shape: f32[4,32], index: 14, kind: input, shape index: {}]
  %s15 = inlined_call_operand.vmem [shape: f32[1,32], index: 15, kind: input, shape index: {}]
  %s16 = inlined_call_operand.vmem [shape: f32[1,32], index: 16, kind: input, shape index: {}]
  %s17 = inlined_call_operand.<no memory space> [shape: f32[1,1], index: 17, kind: input, shape index: {}]
  %s18 = inlined_call_operand.vmem [shape: f32[64,1], index: 18, kind: output, shape index: {}]
  %s19 = sld [smem:[#allocation0]]
  $region114: #{tpu_custom_call.1} parent=0
    _
  %s21 = ssub.s32 1, %s19
  %s22 = scalar_select 0, %s21, %s19
  %v23 = vstv %s17
  %24 = vst [vmem:[#allocation2] sm:$0x1] %v23
  $region1: #{tpu_custom_call.1} parent=0
    #allocation3 [shape = 'u8[2048]{0}', space=vmem, size = 0x800, scoped, tag = 'input window, operand 2, single buffered']
    #allocation4 [shape = 's32[1]{0}', space=sflag, size = 0x4, scoped, tag = 'scoped memory for tpu_custom_call.1']
    #allocation5 [shape = 'u8[512]{0}', space=vmem, size = 0x400, scoped, tag = 'input window, operand 6, single buffered']
    #allocation6 [shape = 's32[1]{0}', space=sflag, size = 0x4, scoped, tag = 'scoped memory for tpu_custom_call.1']
    #allocation7 [shape = 'u8[512]{0}', space=vmem, size = 0x400, scoped, tag = 'input window, operand 8, single buffered']
    #allocation8 [shape = 'u8[16384]{0}', space=vmem, size = 0x4000, scoped, tag = 'input window, operand 9, single buffered']
    #allocation9 [shape = 's32[1]{0}', space=sflag, size = 0x4, scoped, tag = 'scoped memory for tpu_custom_call.1']
    #allocation10 [shape = 'u8[512]{0}', space=vmem, size = 0x400, scoped, tag = 'input window, operand 10, single buffered']
    #allocation11 [shape = 'u8[16384]{0}', space=vmem, size = 0x4000, scoped, tag = 'input window, operand 11, single buffered']
    #allocation12 [shape = 's32[1]{0}', space=sflag, size = 0x4, scoped, tag = 'scoped memory for tpu_custom_call.1']
    #allocation13 [shape = 'u8[512]{0}', space=vmem, size = 0x400, scoped, tag = 'input window, operand 12, single buffered']
    #allocation14 [shape = 'u8[2048]{0}', space=vmem, size = 0x800, scoped, tag = 'input window, operand 14, single buffered']
    #allocation15 [shape = 's32[1]{0}', space=sflag, size = 0x4, scoped, tag = 'scoped memory for tpu_custom_call.1']
    %25 = vsyncpa [#allocation4], 0
    %26 = vsyncpa [#allocation6], 0
    %27 = vsyncpa [#allocation9], 0
    %28 = vsyncpa [#allocation12], 0
    %29 = vsyncpa [#allocation15], 0
    // Predicated region
    $region2: #{tpu_custom_call.1} parent=1 // pred_check
      _
    $region3: #{tpu_custom_call.1} parent=1 // pred_check_branch
      %31 = sbr.rel (0) target = $region5
    $region4: #{tpu_custom_call.1} parent=1 // pred_region
      _
    $region5: #{tpu_custom_call.1} parent=1 // pred_fallthru
      _
    // Predicated region
    $region6: #{tpu_custom_call.1} parent=1 // pred_check
      _
    $region7: #{tpu_custom_call.1} parent=1 // pred_check_branch
      %33 = sbr.rel (0) target = $region9
    $region8: #{tpu_custom_call.1} parent=1 // pred_region
      _
    $region9: #{tpu_custom_call.1} parent=1 // pred_fallthru
      _
    // Predicated region
    $region10: #{tpu_custom_call.1} parent=1 // pred_check
      _
    $region11: #{tpu_custom_call.1} parent=1 // pred_check_branch
      %35 = sbr.rel (0) target = $region13
    $region12: #{tpu_custom_call.1} parent=1 // pred_region
      %s37 = ssub.s32 64, 64
      %38 = vsyncadd [#allocation4], %s37
      %s40 = sshll.u32 [#allocation3], 4
      %s41 = int_to_ptr.vmem [resolvable:$true] %s40
      %43 = dma.hbm_to_vmem [thread:$0]  %s2, 64, %s41, [#allocation4]
    $region13: #{tpu_custom_call.1} parent=1 // pred_fallthru
      _
    // Predicated region
    $region14: #{tpu_custom_call.1} parent=1 // pred_check
      _
    $region15: #{tpu_custom_call.1} parent=1 // pred_check_branch
      %45 = sbr.rel (0) target = $region17
    $region16: #{tpu_custom_call.1} parent=1 // pred_region
      _
    $region17: #{tpu_custom_call.1} parent=1 // pred_fallthru
      _
    // Predicated region
    $region18: #{tpu_custom_call.1} parent=1 // pred_check
      _
    $region19: #{tpu_custom_call.1} parent=1 // pred_check_branch
      %47 = sbr.rel (0) target = $region21
    $region20: #{tpu_custom_call.1} parent=1 // pred_region
      _
    $region21: #{tpu_custom_call.1} parent=1 // pred_fallthru
      _
    // Predicated region
    $region22: #{tpu_custom_call.1} parent=1 // pred_check
      _
    $region23: #{tpu_custom_call.1} parent=1 // pred_check_branch
      %49 = sbr.rel (0) target = $region25
    $region24: #{tpu_custom_call.1} parent=1 // pred_region
      _
    $region25: #{tpu_custom_call.1} parent=1 // pred_fallthru
      _
    // Predicated region
    $region26: #{tpu_custom_call.1} parent=1 // pred_check
      _
    $region27: #{tpu_custom_call.1} parent=1 // pred_check_branch
      %51 = sbr.rel (0) target = $region29
    $region28: #{tpu_custom_call.1} parent=1 // pred_region
      %s53 = ssub.s32 16, 16
      %54 = vsyncadd [#allocation6], %s53
      %s56 = sshll.u32 [#allocation5], 4
      %s57 = int_to_ptr.vmem [resolvable:$true] %s56
      %59 = dma.hbm_to_vmem [thread:$0]  %s6, 16, %s57, [#allocation6]
    $region29: #{tpu_custom_call.1} parent=1 // pred_fallthru
      _
    // Predicated region
    $region30: #{tpu_custom_call.1} parent=1 // pred_check
      _
    $region31: #{tpu_custom_call.1} parent=1 // pred_check_branch
      %61 = sbr.rel (0) target = $region33
    $region32: #{tpu_custom_call.1} parent=1 // pred_region
      _
    $region33: #{tpu_custom_call.1} parent=1 // pred_fallthru
      _
    // Predicated region
    $region34: #{tpu_custom_call.1} parent=1 // pred_check
      _
    $region35: #{tpu_custom_call.1} parent=1 // pred_check_branch
      %63 = sbr.rel (0) target = $region37
    $region36: #{tpu_custom_call.1} parent=1 // pred_region
      %s65 = ssub.s32 16, 16
      %66 = vsyncadd [#allocation6], %s65
      %s68 = sshll.u32 [#allocation7], 4
      %s69 = int_to_ptr.vmem [resolvable:$true] %s68
      %71 = dma.hbm_to_vmem [thread:$0]  %s8, 16, %s69, [#allocation6]
    $region37: #{tpu_custom_call.1} parent=1 // pred_fallthru
      _
    // Predicated region
    $region38: #{tpu_custom_call.1} parent=1 // pred_check
      _
    $region39: #{tpu_custom_call.1} parent=1 // pred_check_branch
      %73 = sbr.rel (0) target = $region41
    $region40: #{tpu_custom_call.1} parent=1 // pred_region
      %s75 = ssub.s32 512, 512
      %76 = vsyncadd [#allocation9], %s75
      %s77 = sshll.u32 [#allocation8], 4
      %s78 = int_to_ptr.vmem [resolvable:$true] %s77
      %83 = dma.hbm_to_vmem [thread:$0]  %s9, 512, %s78, [#allocation9], 128, 128, 8
    $region41: #{tpu_custom_call.1} parent=1 // pred_fallthru
      _
    // Predicated region
    $region42: #{tpu_custom_call.1} parent=1 // pred_check
      _
    $region43: #{tpu_custom_call.1} parent=1 // pred_check_branch
      %85 = sbr.rel (0) target = $region45
    $region44: #{tpu_custom_call.1} parent=1 // pred_region
      %s87 = ssub.s32 16, 16
      %88 = vsyncadd [#allocation9], %s87
      %s90 = sshll.u32 [#allocation10], 4
      %s91 = int_to_ptr.vmem [resolvable:$true] %s90
      %93 = dma.hbm_to_vmem [thread:$0]  %s10, 16, %s91, [#allocation9]
    $region45: #{tpu_custom_call.1} parent=1 // pred_fallthru
      _
    // Predicated region
    $region46: #{tpu_custom_call.1} parent=1 // pred_check
      _
    $region47: #{tpu_custom_call.1} parent=1 // pred_check_branch
      %95 = sbr.rel (0) target = $region49
    $region48: #{tpu_custom_call.1} parent=1 // pred_region
      %s97 = ssub.s32 512, 512
      %98 = vsyncadd [#allocation12], %s97
      %s99 = sshll.u32 [#allocation11], 4
      %s100 = int_to_ptr.vmem [resolvable:$true] %s99
      %105 = dma.hbm_to_vmem [thread:$0]  %s11, 512, %s100, [#allocation12], 128, 128, 8
    $region49: #{tpu_custom_call.1} parent=1 // pred_fallthru
      _
    // Predicated region
    $region50: #{tpu_custom_call.1} parent=1 // pred_check
      _
    $region51: #{tpu_custom_call.1} parent=1 // pred_check_branch
      %107 = sbr.rel (0) target = $region53
    $region52: #{tpu_custom_call.1} parent=1 // pred_region
      %s109 = ssub.s32 16, 16
      %110 = vsyncadd [#allocation12], %s109
      %s112 = sshll.u32 [#allocation13], 4
      %s113 = int_to_ptr.vmem [resolvable:$true] %s112
      %115 = dma.hbm_to_vmem [thread:$0]  %s12, 16, %s113, [#allocation12]
    $region53: #{tpu_custom_call.1} parent=1 // pred_fallthru
      _
    // Predicated region
    $region54: #{tpu_custom_call.1} parent=1 // pred_check
      _
    $region55: #{tpu_custom_call.1} parent=1 // pred_check_branch
      %117 = sbr.rel (0) target = $region57
    $region56: #{tpu_custom_call.1} parent=1 // pred_region
      _
    $region57: #{tpu_custom_call.1} parent=1 // pred_fallthru
      _
    // Predicated region
    $region58: #{tpu_custom_call.1} parent=1 // pred_check
      _
    $region59: #{tpu_custom_call.1} parent=1 // pred_check_branch
      %119 = sbr.rel (0) target = $region61
    $region60: #{tpu_custom_call.1} parent=1 // pred_region
      %s121 = ssub.s32 64, 64
      %122 = vsyncadd [#allocation15], %s121
      %s124 = sshll.u32 [#allocation14], 4
      %s125 = int_to_ptr.vmem [resolvable:$true] %s124
      %127 = dma.hbm_to_vmem [thread:$0]  %s14, 64, %s125, [#allocation15]
    $region61: #{tpu_custom_call.1} parent=1 // pred_fallthru
      _
    // Predicated region
    $region62: #{tpu_custom_call.1} parent=1 // pred_check
      _
    $region63: #{tpu_custom_call.1} parent=1 // pred_check_branch
      %129 = sbr.rel (0) target = $region65
    $region64: #{tpu_custom_call.1} parent=1 // pred_region
      _
    $region65: #{tpu_custom_call.1} parent=1 // pred_fallthru
      _
    // Predicated region
    $region66: #{tpu_custom_call.1} parent=1 // pred_check
      _
    $region67: #{tpu_custom_call.1} parent=1 // pred_check_branch
      %131 = sbr.rel (0) target = $region69
    $region68: #{tpu_custom_call.1} parent=1 // pred_region
      _
    $region69: #{tpu_custom_call.1} parent=1 // pred_fallthru
      _
    // Predicated region
    $region70: #{tpu_custom_call.1} parent=1 // pred_check
      _
    $region71: #{tpu_custom_call.1} parent=1 // pred_check_branch
      %133 = sbr.rel (0) target = $region73
    $region72: #{tpu_custom_call.1} parent=1 // pred_region
      _
    $region73: #{tpu_custom_call.1} parent=1 // pred_fallthru
      _
    // Predicated region
    $region74: #{tpu_custom_call.1} parent=1 // pred_check
      _
    $region75: #{tpu_custom_call.1} parent=1 // pred_check_branch
      %135 = sbr.rel (0) target = $region77
    $region76: #{tpu_custom_call.1} parent=1 // pred_region
      %136 = dma.done [#allocation4], 64
    $region77: #{tpu_custom_call.1} parent=1 // pred_fallthru
      _
    // Predicated region
    $region78: #{tpu_custom_call.1} parent=1 // pred_check
      _
    $region79: #{tpu_custom_call.1} parent=1 // pred_check_branch
      %138 = sbr.rel (0) target = $region81
    $region80: #{tpu_custom_call.1} parent=1 // pred_region
      %139 = dma.done [#allocation6], 16
    $region81: #{tpu_custom_call.1} parent=1 // pred_fallthru
      _
    // Predicated region
    $region82: #{tpu_custom_call.1} parent=1 // pred_check
      _
    $region83: #{tpu_custom_call.1} parent=1 // pred_check_branch
      %141 = sbr.rel (0) target = $region85
    $region84: #{tpu_custom_call.1} parent=1 // pred_region
      %142 = dma.done [#allocation6], 16
    $region85: #{tpu_custom_call.1} parent=1 // pred_fallthru
      _
    // Predicated region
    $region86: #{tpu_custom_call.1} parent=1 // pred_check
      _
    $region87: #{tpu_custom_call.1} parent=1 // pred_check_branch
      %144 = sbr.rel (0) target = $region89
    $region88: #{tpu_custom_call.1} parent=1 // pred_region
      %145 = dma.done [#allocation9], 512
    $region89: #{tpu_custom_call.1} parent=1 // pred_fallthru
      _
    // Predicated region
    $region90: #{tpu_custom_call.1} parent=1 // pred_check
      _
    $region91: #{tpu_custom_call.1} parent=1 // pred_check_branch
      %147 = sbr.rel (0) target = $region93
    $region92: #{tpu_custom_call.1} parent=1 // pred_region
      %148 = dma.done [#allocation9], 16
    $region93: #{tpu_custom_call.1} parent=1 // pred_fallthru
      _
    // Predicated region
    $region94: #{tpu_custom_call.1} parent=1 // pred_check
      _
    $region95: #{tpu_custom_call.1} parent=1 // pred_check_branch
      %150 = sbr.rel (0) target = $region97
    $region96: #{tpu_custom_call.1} parent=1 // pred_region
      %151 = dma.done [#allocation12], 512
    $region97: #{tpu_custom_call.1} parent=1 // pred_fallthru
      _
    // Predicated region
    $region98: #{tpu_custom_call.1} parent=1 // pred_check
      _
    $region99: #{tpu_custom_call.1} parent=1 // pred_check_branch
      %153 = sbr.rel (0) target = $region101
    $region100: #{tpu_custom_call.1} parent=1 // pred_region
      %154 = dma.done [#allocation12], 16
    $region101: #{tpu_custom_call.1} parent=1 // pred_fallthru
      _
    // Predicated region
    $region102: #{tpu_custom_call.1} parent=1 // pred_check
      _
    $region103: #{tpu_custom_call.1} parent=1 // pred_check_branch
      %156 = sbr.rel (0) target = $region105
    $region104: #{tpu_custom_call.1} parent=1 // pred_region
      %157 = dma.done [#allocation15], 64
    $region105: #{tpu_custom_call.1} parent=1 // pred_fallthru
      _
    %v158 = vld [vmem:[%s0] sm:$0xff]
    %v159 = vld [vmem:[%s0 + $0x8] sm:$0xff]
    %v160 = vld [vmem:[%s0 + $0x10] sm:$0xff]
    %v161 = vld [vmem:[%s0 + $0x18] sm:$0xff]
    %v162 = vld [vmem:[%s0 + $0x20] sm:$0xff]
    %v163 = vld [vmem:[%s0 + $0x28] sm:$0xff]
    %v164 = vld [vmem:[%s0 + $0x30] sm:$0xff]
    %v165 = vld [vmem:[%s0 + $0x38] sm:$0xff]
    %v166 = vld [vmem:[%s1] sm:$0xff]
    %v167 = vld [vmem:[%s1 + $0x8] sm:$0xff]
    %v168 = vld [vmem:[%s1 + $0x10] sm:$0xff]
    %v169 = vld [vmem:[%s1 + $0x18] sm:$0xff]
    %v170 = vld [vmem:[%s1 + $0x20] sm:$0xff]
    %v171 = vld [vmem:[%s1 + $0x28] sm:$0xff]
    %v172 = vld [vmem:[%s1 + $0x30] sm:$0xff]
    %v173 = vld [vmem:[%s1 + $0x38] sm:$0xff]
    %v174 = vld [vmem:[#allocation3] sm:$0xf]
    %v175 = vld [vmem:[%s3] sm:$0x1]
    %v177 = vlaneseq
    %v178 = vshrl.u32 %v177, 7
    %v179 = vsub.s32 0, %v178
    %v180 = vrot.slane %v175, %v179
    %vm182 = vcmask 31744
    %v184 = vsel %vm182, %v158, 0
    %v187 = vsel %vm182, %v159, 0
    %v190 = vsel %vm182, %v160, 0
    %v193 = vsel %vm182, %v161, 0
    %v196 = vsel %vm182, %v162, 0
    %v199 = vsel %vm182, %v163, 0
    %v202 = vsel %vm182, %v164, 0
    %v205 = vsel %vm182, %v165, 0
    %vm207 = vcmask 1043456
    %v209 = vsel %vm207, %v174, 0
    %211 = vmatprep.subr.mxu0 0.0
    %212 = vmatpush1.msra.mxu0 0.0
    %213 = vmatprep.subr.mxu0 0.0
    %214 = vmatpush1.msra.mxu0 0.0
    %215 = vmatprep.subr.mxu0 0.0
    %216 = vmatpush1.msra.mxu0 0.0
    %217 = vmatprep.subr.mxu0 0.0
    %218 = vmatpush1.msra.mxu0 0.0
    %219 = vmatprep.subr.mxu0 0.0
    %220 = vmatpush1.msra.mxu0 0.0
    %221 = vmatprep.subr.mxu0 0.0
    %222 = vmatpush1.msra.mxu0 0.0
    %223 = vmatprep.subr.mxu0 0.0
    %224 = vmatpush1.msra.mxu0 0.0
    %225 = vmatprep.subr.mxu0 0.0
    %226 = vmatpush1.msra.mxu0 0.0
    %227 = vmatprep.subr.mxu0 0.0
    %228 = vmatpush1.msra.mxu0 0.0
    %229 = vmatprep.subr.mxu0 0.0
    %230 = vmatpush1.msra.mxu0 0.0
    %231 = vmatprep.subr.mxu0 0.0
    %232 = vmatpush1.msra.mxu0 0.0
    %233 = vmatprep.subr.mxu0 0.0
    %234 = vmatpush1.msra.mxu0 0.0
    %235 = vmatprep.subr.mxu0 0.0
    %236 = vmatpush1.msra.mxu0 0.0
    %237 = vmatprep.subr.mxu0 0.0
    %238 = vmatpush1.msra.mxu0 0.0
    %239 = vmatprep.subr.mxu0 0.0
    %240 = vmatpush1.msra.mxu0 0.0
    %241 = vmatprep.subr.mxu0 0.0
    %242 = vmatpush1.msra.mxu0 %v209
    %243 = vmatprep.subr.mxu0 0.0
    %244 = vmatpush2.msra.mxu0 0.0
    %245 = vmatprep.subr.mxu0 0.0
    %246 = vmatpush2.msra.mxu0 0.0
    %247 = vmatprep.subr.mxu0 0.0
    %248 = vmatpush2.msra.mxu0 0.0
    %249 = vmatprep.subr.mxu0 0.0
    %250 = vmatpush2.msra.mxu0 0.0
    %251 = vmatprep.subr.mxu0 0.0
    %252 = vmatpush2.msra.mxu0 0.0
    %253 = vmatprep.subr.mxu0 0.0
    %254 = vmatpush2.msra.mxu0 0.0
    %255 = vmatprep.subr.mxu0 0.0
    %256 = vmatpush2.msra.mxu0 0.0
    %257 = vmatprep.subr.mxu0 0.0
    %258 = vmatpush2.msra.mxu0 0.0
    %259 = vmatprep.subr.mxu0 0.0
    %260 = vmatpush2.msra.mxu0 0.0
    %261 = vmatprep.subr.mxu0 0.0
    %262 = vmatpush2.msra.mxu0 0.0
    %263 = vmatprep.subr.mxu0 0.0
    %264 = vmatpush2.msra.mxu0 0.0
    %265 = vmatprep.subr.mxu0 0.0
    %266 = vmatpush2.msra.mxu0 0.0
    %267 = vmatprep.subr.mxu0 0.0
    %268 = vmatpush2.msra.mxu0 0.0
    %269 = vmatprep.subr.mxu0 0.0
    %270 = vmatpush2.msra.mxu0 0.0
    %271 = vmatprep.subr.mxu0 0.0
    %272 = vmatpush2.msra.mxu0 0.0
    %273 = vmatprep.subr.mxu0 0.0
    %274 = vmatpush2.msra.mxu0 0.0
    %275 = vmatprep.mubr.f32.mxu0 0.0
    %276 = vmatmul.mubr.f32.gmra.mxu0 %v184
    %v277 = vpop.f32.mrf.mxu0
    %v278 = vadd.f32 %v180, %v277
    %v279 = vpop.f32.mrf.mxu0
    %280 = vmatprep.mubr.f32.mxu0 0.0
    %281 = vmatmul.mubr.f32.gmra.mxu0 %v187
    %v282 = vpop.f32.mrf.mxu0
    %v283 = vadd.f32 %v180, %v282
    %v284 = vpop.f32.mrf.mxu0
    %285 = vmatprep.mubr.f32.mxu0 0.0
    %286 = vmatmul.mubr.f32.gmra.mxu0 %v190
    %v287 = vpop.f32.mrf.mxu0
    %v288 = vadd.f32 %v180, %v287
    %v289 = vpop.f32.mrf.mxu0
    %290 = vmatprep.mubr.f32.mxu0 0.0
    %291 = vmatmul.mubr.f32.gmra.mxu0 %v193
    %v292 = vpop.f32.mrf.mxu0
    %v293 = vadd.f32 %v180, %v292
    %v294 = vpop.f32.mrf.mxu0
    %295 = vmatprep.mubr.f32.mxu0 0.0
    %296 = vmatmul.mubr.f32.gmra.mxu0 %v196
    %v297 = vpop.f32.mrf.mxu0
    %v298 = vadd.f32 %v180, %v297
    %v299 = vpop.f32.mrf.mxu0
    %300 = vmatprep.mubr.f32.mxu0 0.0
    %301 = vmatmul.mubr.f32.gmra.mxu0 %v199
    %v302 = vpop.f32.mrf.mxu0
    %v303 = vadd.f32 %v180, %v302
    %v304 = vpop.f32.mrf.mxu0
    %305 = vmatprep.mubr.f32.mxu0 0.0
    %306 = vmatmul.mubr.f32.gmra.mxu0 %v202
    %v307 = vpop.f32.mrf.mxu0
    %v308 = vadd.f32 %v180, %v307
    %v309 = vpop.f32.mrf.mxu0
    %310 = vmatprep.mubr.f32.mxu0 0.0
    %311 = vmatmul.mubr.f32.gmra.mxu0 %v205
    %v312 = vpop.f32.mrf.mxu0
    %v313 = vadd.f32 %v180, %v312
    %v314 = vpop.f32.mrf.mxu0
    %315 = vdwg.mxu0
    %v316 = vld [vmem:[#allocation14] sm:$0xf]
    %v317 = vld [vmem:[%s15] sm:$0x1]
    %v319 = vlaneseq
    %v320 = vshrl.u32 %v319, 7
    %v321 = vsub.s32 0, %v320
    %v322 = vrot.slane %v317, %v321
    %v325 = vsel %vm182, %v166, 0
    %v328 = vsel %vm182, %v167, 0
    %v331 = vsel %vm182, %v168, 0
    %v334 = vsel %vm182, %v169, 0
    %v337 = vsel %vm182, %v170, 0
    %v340 = vsel %vm182, %v171, 0
    %v343 = vsel %vm182, %v172, 0
    %v346 = vsel %vm182, %v173, 0
    %v349 = vsel %vm207, %v316, 0
    %351 = vmatprep.subr.mxu0 0.0
    %352 = vmatpush1.msra.mxu0 0.0
    %353 = vmatprep.subr.mxu0 0.0
    %354 = vmatpush1.msra.mxu0 0.0
    %355 = vmatprep.subr.mxu0 0.0
    %356 = vmatpush1.msra.mxu0 0.0
    %357 = vmatprep.subr.mxu0 0.0
    %358 = vmatpush1.msra.mxu0 0.0
    %359 = vmatprep.subr.mxu0 0.0
    %360 = vmatpush1.msra.mxu0 0.0
    %361 = vmatprep.subr.mxu0 0.0
    %362 = vmatpush1.msra.mxu0 0.0
    %363 = vmatprep.subr.mxu0 0.0
    %364 = vmatpush1.msra.mxu0 0.0
    %365 = vmatprep.subr.mxu0 0.0
    %366 = vmatpush1.msra.mxu0 0.0
    %367 = vmatprep.subr.mxu0 0.0
    %368 = vmatpush1.msra.mxu0 0.0
    %369 = vmatprep.subr.mxu0 0.0
    %370 = vmatpush1.msra.mxu0 0.0
    %371 = vmatprep.subr.mxu0 0.0
    %372 = vmatpush1.msra.mxu0 0.0
    %373 = vmatprep.subr.mxu0 0.0
    %374 = vmatpush1.msra.mxu0 0.0
    %375 = vmatprep.subr.mxu0 0.0
    %376 = vmatpush1.msra.mxu0 0.0
    %377 = vmatprep.subr.mxu0 0.0
    %378 = vmatpush1.msra.mxu0 0.0
    %379 = vmatprep.subr.mxu0 0.0
    %380 = vmatpush1.msra.mxu0 0.0
    %381 = vmatprep.subr.mxu0 0.0
    %382 = vmatpush1.msra.mxu0 %v349
    %383 = vmatprep.subr.mxu0 0.0
    %384 = vmatpush2.msra.mxu0 0.0
    %385 = vmatprep.subr.mxu0 0.0
    %386 = vmatpush2.msra.mxu0 0.0
    %387 = vmatprep.subr.mxu0 0.0
    %388 = vmatpush2.msra.mxu0 0.0
    %389 = vmatprep.subr.mxu0 0.0
    %390 = vmatpush2.msra.mxu0 0.0
    %391 = vmatprep.subr.mxu0 0.0
    %392 = vmatpush2.msra.mxu0 0.0
    %393 = vmatprep.subr.mxu0 0.0
    %394 = vmatpush2.msra.mxu0 0.0
    %395 = vmatprep.subr.mxu0 0.0
    %396 = vmatpush2.msra.mxu0 0.0
    %397 = vmatprep.subr.mxu0 0.0
    %398 = vmatpush2.msra.mxu0 0.0
    %399 = vmatprep.subr.mxu0 0.0
    %400 = vmatpush2.msra.mxu0 0.0
    %401 = vmatprep.subr.mxu0 0.0
    %402 = vmatpush2.msra.mxu0 0.0
    %403 = vmatprep.subr.mxu0 0.0
    %404 = vmatpush2.msra.mxu0 0.0
    %405 = vmatprep.subr.mxu0 0.0
    %406 = vmatpush2.msra.mxu0 0.0
    %407 = vmatprep.subr.mxu0 0.0
    %408 = vmatpush2.msra.mxu0 0.0
    %409 = vmatprep.subr.mxu0 0.0
    %410 = vmatpush2.msra.mxu0 0.0
    %411 = vmatprep.subr.mxu0 0.0
    %412 = vmatpush2.msra.mxu0 0.0
    %413 = vmatprep.subr.mxu0 0.0
    %414 = vmatpush2.msra.mxu0 0.0
    %415 = vmatprep.mubr.f32.mxu0 0.0
    %416 = vmatmul.mubr.f32.gmra.mxu0 %v325
    %v417 = vpop.f32.mrf.mxu0
    %v418 = vadd.f32 %v322, %v417
    %v419 = vpop.f32.mrf.mxu0
    %420 = vmatprep.mubr.f32.mxu0 0.0
    %421 = vmatmul.mubr.f32.gmra.mxu0 %v328
    %v422 = vpop.f32.mrf.mxu0
    %v423 = vadd.f32 %v322, %v422
    %v424 = vpop.f32.mrf.mxu0
    %425 = vmatprep.mubr.f32.mxu0 0.0
    %426 = vmatmul.mubr.f32.gmra.mxu0 %v331
    %v427 = vpop.f32.mrf.mxu0
    %v428 = vadd.f32 %v322, %v427
    %v429 = vpop.f32.mrf.mxu0
    %430 = vmatprep.mubr.f32.mxu0 0.0
    %431 = vmatmul.mubr.f32.gmra.mxu0 %v334
    %v432 = vpop.f32.mrf.mxu0
    %v433 = vadd.f32 %v322, %v432
    %v434 = vpop.f32.mrf.mxu0
    %435 = vmatprep.mubr.f32.mxu0 0.0
    %436 = vmatmul.mubr.f32.gmra.mxu0 %v337
    %v437 = vpop.f32.mrf.mxu0
    %v438 = vadd.f32 %v322, %v437
    %v439 = vpop.f32.mrf.mxu0
    %440 = vmatprep.mubr.f32.mxu0 0.0
    %441 = vmatmul.mubr.f32.gmra.mxu0 %v340
    %v442 = vpop.f32.mrf.mxu0
    %v443 = vadd.f32 %v322, %v442
    %v444 = vpop.f32.mrf.mxu0
    %445 = vmatprep.mubr.f32.mxu0 0.0
    %446 = vmatmul.mubr.f32.gmra.mxu0 %v343
    %v447 = vpop.f32.mrf.mxu0
    %v448 = vadd.f32 %v322, %v447
    %v449 = vpop.f32.mrf.mxu0
    %450 = vmatprep.mubr.f32.mxu0 0.0
    %451 = vmatmul.mubr.f32.gmra.mxu0 %v346
    %v452 = vpop.f32.mrf.mxu0
    %v453 = vadd.f32 %v322, %v452
    %v454 = vpop.f32.mrf.mxu0
    %455 = vdwg.mxu0
    %v456 = vld [vmem:[#allocation5] sm:$0x1]
    %v458 = vlaneseq
    %v459 = vshrl.u32 %v458, 7
    %v460 = vsub.s32 0, %v459
    %v461 = vrot.slane %v456, %v460
    %v463 = vld [vmem:[#allocation7] sm:$0x1]
    %v465 = vlaneseq
    %v466 = vshrl.u32 %v465, 7
    %v467 = vsub.s32 0, %v466
    %v468 = vrot.slane %v463, %v467
    %v470 = vld [vmem:[#allocation10] sm:$0x1]
    %v472 = vlaneseq
    %v473 = vshrl.u32 %v472, 7
    %v474 = vsub.s32 0, %v473
    %v475 = vrot.slane %v470, %v474
    %v477 = vld [vmem:[#allocation13] sm:$0x1]
    %v479 = vlaneseq
    %v480 = vshrl.u32 %v479, 7
    %v481 = vsub.s32 0, %v480
    %v482 = vrot.slane %v477, %v481
    %v484 = vld [vmem:[%s4] sm:$0xff]
    %v485 = vld [vmem:[%s4 + $0x8] sm:$0xff]
    %v486 = vld [vmem:[%s4 + $0x10] sm:$0xff]
    %v487 = vld [vmem:[%s4 + $0x18] sm:$0xff]
    %v488 = vld [vmem:[%s7] sm:$0xff]
    %v489 = vld [vmem:[%s7 + $0x8] sm:$0xff]
    %v490 = vld [vmem:[%s7 + $0x10] sm:$0xff]
    %v491 = vld [vmem:[%s7 + $0x18] sm:$0xff]
    %v492 = vld [vmem:[%s7 + $0x20] sm:$0xff]
    %v493 = vld [vmem:[%s7 + $0x28] sm:$0xff]
    %v494 = vld [vmem:[%s7 + $0x30] sm:$0xff]
    %v495 = vld [vmem:[%s7 + $0x38] sm:$0xff]
    %vm496 = vcmask 261120
    %v498 = vsel %vm496, 0.0, 0
    %500 = vmatprep.subr.mxu0 0.0
    %501 = vmatpush1.msra.mxu0 0.0
    %502 = vmatprep.subr.mxu0 0.0
    %503 = vmatpush1.msra.mxu0 0.0
    %504 = vmatprep.subr.mxu0 0.0
    %505 = vmatpush1.msra.mxu0 0.0
    %506 = vmatprep.subr.mxu0 0.0
    %507 = vmatpush1.msra.mxu0 0.0
    %508 = vmatprep.subr.mxu0 0.0
    %509 = vmatpush1.msra.mxu0 0.0
    %510 = vmatprep.subr.mxu0 0.0
    %511 = vmatpush1.msra.mxu0 0.0
    %512 = vmatprep.subr.mxu0 0.0
    %513 = vmatpush1.msra.mxu0 0.0
    %514 = vmatprep.subr.mxu0 0.0
    %515 = vmatpush1.msra.mxu0 0.0
    %516 = vmatprep.subr.mxu0 0.0
    %517 = vmatpush1.msra.mxu0 0.0
    %518 = vmatprep.subr.mxu0 0.0
    %519 = vmatpush1.msra.mxu0 0.0
    %520 = vmatprep.subr.mxu0 0.0
    %521 = vmatpush1.msra.mxu0 0.0
    %522 = vmatprep.subr.mxu0 0.0
    %523 = vmatpush1.msra.mxu0 0.0
    %524 = vmatprep.subr.mxu0 0.0
    %525 = vmatpush1.msra.mxu0 %v487
    %526 = vmatprep.subr.mxu0 0.0
    %527 = vmatpush1.msra.mxu0 %v486
    %528 = vmatprep.subr.mxu0 0.0
    %529 = vmatpush1.msra.mxu0 %v485
    %530 = vmatprep.subr.mxu0 0.0
    %531 = vmatpush1.msra.mxu0 %v484
    %532 = vmatprep.subr.mxu0 0.0
    %533 = vmatpush2.msra.mxu0 0.0
    %534 = vmatprep.subr.mxu0 0.0
    %535 = vmatpush2.msra.mxu0 0.0
    %536 = vmatprep.subr.mxu0 0.0
    %537 = vmatpush2.msra.mxu0 0.0
    %538 = vmatprep.subr.mxu0 0.0
    %539 = vmatpush2.msra.mxu0 0.0
    %540 = vmatprep.subr.mxu0 0.0
    %541 = vmatpush2.msra.mxu0 0.0
    %542 = vmatprep.subr.mxu0 0.0
    %543 = vmatpush2.msra.mxu0 0.0
    %544 = vmatprep.subr.mxu0 0.0
    %545 = vmatpush2.msra.mxu0 0.0
    %546 = vmatprep.subr.mxu0 0.0
    %547 = vmatpush2.msra.mxu0 0.0
    %548 = vmatprep.subr.mxu0 0.0
    %549 = vmatpush2.msra.mxu0 0.0
    %550 = vmatprep.subr.mxu0 0.0
    %551 = vmatpush2.msra.mxu0 0.0
    %552 = vmatprep.subr.mxu0 0.0
    %553 = vmatpush2.msra.mxu0 0.0
    %554 = vmatprep.subr.mxu0 0.0
    %555 = vmatpush2.msra.mxu0 0.0
    %556 = vmatprep.subr.mxu0 0.0
    %557 = vmatpush2.msra.mxu0 0.0
    %558 = vmatprep.subr.mxu0 0.0
    %559 = vmatpush2.msra.mxu0 0.0
    %560 = vmatprep.subr.mxu0 0.0
    %561 = vmatpush2.msra.mxu0 0.0
    %562 = vmatprep.subr.mxu0 0.0
    %563 = vmatpush2.msra.mxu0 0.0
    %564 = vmatprep.mubr.f32.mxu0 0.0
    %565 = vmatmul.mubr.f32.gmra.mxu0 %v498
    %v566 = vpop.f32.mrf.mxu0
    %v567 = vadd.f32 0.0, %v566
    %v568 = vpop.f32.mrf.mxu0
    %569 = vdwg.mxu0
    %v570 = vadd.f32 %v278, %v567
    %v571 = vxor.u32 %v570, 2147483648
    %v572 = vmul.f32 %v571, 1.442695
    %v573 = vpow.pop %v572
    %v574 = vadd.f32 %v573, 1.0
    %v575 = vrcp.pop %v574
    %v576 = vmul.f32 1.0, %v575
    %v577 = vld [vmem:[%s5] sm:$0xff]
    %v578 = vld [vmem:[%s5 + $0x8] sm:$0xff]
    %v579 = vld [vmem:[%s5 + $0x10] sm:$0xff]
    %v580 = vld [vmem:[%s5 + $0x18] sm:$0xff]
    %581 = vmatprep.subr.mxu0 0.0
    %582 = vmatpush1.msra.mxu0 0.0
    %583 = vmatprep.subr.mxu0 0.0
    %584 = vmatpush1.msra.mxu0 0.0
    %585 = vmatprep.subr.mxu0 0.0
    %586 = vmatpush1.msra.mxu0 0.0
    %587 = vmatprep.subr.mxu0 0.0
    %588 = vmatpush1.msra.mxu0 0.0
    %589 = vmatprep.subr.mxu0 0.0
    %590 = vmatpush1.msra.mxu0 0.0
    %591 = vmatprep.subr.mxu0 0.0
    %592 = vmatpush1.msra.mxu0 0.0
    %593 = vmatprep.subr.mxu0 0.0
    %594 = vmatpush1.msra.mxu0 0.0
    %595 = vmatprep.subr.mxu0 0.0
    %596 = vmatpush1.msra.mxu0 0.0
    %597 = vmatprep.subr.mxu0 0.0
    %598 = vmatpush1.msra.mxu0 0.0
    %599 = vmatprep.subr.mxu0 0.0
    %600 = vmatpush1.msra.mxu0 0.0
    %601 = vmatprep.subr.mxu0 0.0
    %602 = vmatpush1.msra.mxu0 0.0
    %603 = vmatprep.subr.mxu0 0.0
    %604 = vmatpush1.msra.mxu0 0.0
    %605 = vmatprep.subr.mxu0 0.0
    %606 = vmatpush1.msra.mxu0 %v580
    %607 = vmatprep.subr.mxu0 0.0
    %608 = vmatpush1.msra.mxu0 %v579
    %609 = vmatprep.subr.mxu0 0.0
    %610 = vmatpush1.msra.mxu0 %v578
    %611 = vmatprep.subr.mxu0 0.0
    %612 = vmatpush1.msra.mxu0 %v577
    %613 = vmatprep.subr.mxu0 0.0
    %614 = vmatpush2.msra.mxu0 0.0
    %615 = vmatprep.subr.mxu0 0.0
    %616 = vmatpush2.msra.mxu0 0.0
    %617 = vmatprep.subr.mxu0 0.0
    %618 = vmatpush2.msra.mxu0 0.0
    %619 = vmatprep.subr.mxu0 0.0
    %620 = vmatpush2.msra.mxu0 0.0
    %621 = vmatprep.subr.mxu0 0.0
    %622 = vmatpush2.msra.mxu0 0.0
    %623 = vmatprep.subr.mxu0 0.0
    %624 = vmatpush2.msra.mxu0 0.0
    %625 = vmatprep.subr.mxu0 0.0
    %626 = vmatpush2.msra.mxu0 0.0
    %627 = vmatprep.subr.mxu0 0.0
    %628 = vmatpush2.msra.mxu0 0.0
    %629 = vmatprep.subr.mxu0 0.0
    %630 = vmatpush2.msra.mxu0 0.0
    %631 = vmatprep.subr.mxu0 0.0
    %632 = vmatpush2.msra.mxu0 0.0
    %633 = vmatprep.subr.mxu0 0.0
    %634 = vmatpush2.msra.mxu0 0.0
    %635 = vmatprep.subr.mxu0 0.0
    %636 = vmatpush2.msra.mxu0 0.0
    %637 = vmatprep.subr.mxu0 0.0
    %638 = vmatpush2.msra.mxu0 0.0
    %639 = vmatprep.subr.mxu0 0.0
    %640 = vmatpush2.msra.mxu0 0.0
    %641 = vmatprep.subr.mxu0 0.0
    %642 = vmatpush2.msra.mxu0 0.0
    %643 = vmatprep.subr.mxu0 0.0
    %644 = vmatpush2.msra.mxu0 0.0
    %645 = vmatprep.mubr.f32.mxu0 0.0
    %646 = vmatmul.mubr.f32.gmra.mxu0 %v498
    %v647 = vpop.f32.mrf.mxu0
    %v648 = vadd.f32 %v461, %v647
    %v649 = vpop.f32.mrf.mxu0
    %650 = vdwg.mxu0
    %v651 = vmul.f32 %v576, %v648
    %653 = vrot.lane.b32.xlu0 %v651, 64
    %v654 = vpop.permute.xlu0 %653
    %v656 = vadd.f32 %v278, %v654
    %v657 = vtanh.pop %v656
    %v658 = vsub.f32 1.0, %v576
    %660 = vrot.lane.b32.xlu0 %v657, 96
    %v661 = vpop.permute.xlu0 %660
    %v663 = vmul.f32 %v658, %v661
    %v664 = vmul.f32 %v576, 0.0
    %v665 = vadd.f32 %v663, %v664
    %667 = vrot.lane.b32.xlu0 %v665, 96
    %v668 = vpop.permute.xlu0 %667
    %v670 = vsel %vm496, %v668, 0.0
    %vm671 = vcmask 523264
    %v673 = vsel %vm671, %v670, 0
    %675 = vmatprep.subr.mxu0 0.0
    %676 = vmatpush1.msra.mxu0 0.0
    %677 = vmatprep.subr.mxu0 0.0
    %678 = vmatpush1.msra.mxu0 0.0
    %679 = vmatprep.subr.mxu0 0.0
    %680 = vmatpush1.msra.mxu0 0.0
    %681 = vmatprep.subr.mxu0 0.0
    %682 = vmatpush1.msra.mxu0 0.0
    %683 = vmatprep.subr.mxu0 0.0
    %684 = vmatpush1.msra.mxu0 0.0
    %685 = vmatprep.subr.mxu0 0.0
    %686 = vmatpush1.msra.mxu0 0.0
    %687 = vmatprep.subr.mxu0 0.0
    %688 = vmatpush1.msra.mxu0 0.0
    %689 = vmatprep.subr.mxu0 0.0
    %690 = vmatpush1.msra.mxu0 0.0
    %691 = vmatprep.subr.mxu0 0.0
    %692 = vmatpush1.msra.mxu0 %v495
    %693 = vmatprep.subr.mxu0 0.0
    %694 = vmatpush1.msra.mxu0 %v494
    %695 = vmatprep.subr.mxu0 0.0
    %696 = vmatpush1.msra.mxu0 %v493
    %697 = vmatprep.subr.mxu0 0.0
    %698 = vmatpush1.msra.mxu0 %v492
    %699 = vmatprep.subr.mxu0 0.0
    %700 = vmatpush1.msra.mxu0 %v491
    %701 = vmatprep.subr.mxu0 0.0
    %702 = vmatpush1.msra.mxu0 %v490
    %703 = vmatprep.subr.mxu0 0.0
    %704 = vmatpush1.msra.mxu0 %v489
    %705 = vmatprep.subr.mxu0 0.0
    %706 = vmatpush1.msra.mxu0 %v488
    %707 = vmatprep.subr.mxu0 0.0
    %708 = vmatpush2.msra.mxu0 0.0
    %709 = vmatprep.subr.mxu0 0.0
    %710 = vmatpush2.msra.mxu0 0.0
    %711 = vmatprep.subr.mxu0 0.0
    %712 = vmatpush2.msra.mxu0 0.0
    %713 = vmatprep.subr.mxu0 0.0
    %714 = vmatpush2.msra.mxu0 0.0
    %715 = vmatprep.subr.mxu0 0.0
    %716 = vmatpush2.msra.mxu0 0.0
    %717 = vmatprep.subr.mxu0 0.0
    %718 = vmatpush2.msra.mxu0 0.0
    %719 = vmatprep.subr.mxu0 0.0
    %720 = vmatpush2.msra.mxu0 0.0
    %721 = vmatprep.subr.mxu0 0.0
    %722 = vmatpush2.msra.mxu0 0.0
    %723 = vmatprep.subr.mxu0 0.0
    %724 = vmatpush2.msra.mxu0 0.0
    %725 = vmatprep.subr.mxu0 0.0
    %726 = vmatpush2.msra.mxu0 0.0
    %727 = vmatprep.subr.mxu0 0.0
    %728 = vmatpush2.msra.mxu0 0.0
    %729 = vmatprep.subr.mxu0 0.0
    %730 = vmatpush2.msra.mxu0 0.0
    %731 = vmatprep.subr.mxu0 0.0
    %732 = vmatpush2.msra.mxu0 0.0
    %733 = vmatprep.subr.mxu0 0.0
    %734 = vmatpush2.msra.mxu0 0.0
    %735 = vmatprep.subr.mxu0 0.0
    %736 = vmatpush2.msra.mxu0 0.0
    %737 = vmatprep.subr.mxu0 0.0
    %738 = vmatpush2.msra.mxu0 0.0
    %739 = vmatprep.mubr.f32.mxu0 0.0
    %740 = vmatmul.mubr.f32.gmra.mxu0 %v673
    %v741 = vpop.f32.mrf.mxu0
    %v742 = vadd.f32 %v468, %v741
    %v743 = vpop.f32.mrf.mxu0
    %744 = vdwg.mxu0
    %v745 = vxor.u32 %v742, 2147483648
    %v746 = vmul.f32 %v745, 1.442695
    %v747 = vpow.pop %v746
    %v748 = vadd.f32 %v747, 1.0
    %v749 = vrcp.pop %v748
    %v750 = vmul.f32 1.0, %v749
    %v751 = vld [vmem:[#allocation8] sm:$0xff]
    %v752 = vld [vmem:[#allocation8 + $0x8] sm:$0xff]
    %v753 = vld [vmem:[#allocation8 + $0x10] sm:$0xff]
    %v754 = vld [vmem:[#allocation8 + $0x18] sm:$0xff]
    %v755 = vsel %vm496, %v668, 0
    %757 = vmatprep.subr.mxu0 0.0
    %758 = vmatpush1.msra.mxu0 0.0
    %759 = vmatprep.subr.mxu0 0.0
    %760 = vmatpush1.msra.mxu0 0.0
    %761 = vmatprep.subr.mxu0 0.0
    %762 = vmatpush1.msra.mxu0 0.0
    %763 = vmatprep.subr.mxu0 0.0
    %764 = vmatpush1.msra.mxu0 0.0
    %765 = vmatprep.subr.mxu0 0.0
    %766 = vmatpush1.msra.mxu0 0.0
    %767 = vmatprep.subr.mxu0 0.0
    %768 = vmatpush1.msra.mxu0 0.0
    %769 = vmatprep.subr.mxu0 0.0
    %770 = vmatpush1.msra.mxu0 0.0
    %771 = vmatprep.subr.mxu0 0.0
    %772 = vmatpush1.msra.mxu0 0.0
    %773 = vmatprep.subr.mxu0 0.0
    %774 = vmatpush1.msra.mxu0 0.0
    %775 = vmatprep.subr.mxu0 0.0
    %776 = vmatpush1.msra.mxu0 0.0
    %777 = vmatprep.subr.mxu0 0.0
    %778 = vmatpush1.msra.mxu0 0.0
    %779 = vmatprep.subr.mxu0 0.0
    %780 = vmatpush1.msra.mxu0 0.0
    %781 = vmatprep.subr.mxu0 0.0
    %782 = vmatpush1.msra.mxu0 %v754
    %783 = vmatprep.subr.mxu0 0.0
    %784 = vmatpush1.msra.mxu0 %v753
    %785 = vmatprep.subr.mxu0 0.0
    %786 = vmatpush1.msra.mxu0 %v752
    %787 = vmatprep.subr.mxu0 0.0
    %788 = vmatpush1.msra.mxu0 %v751
    %789 = vmatprep.subr.mxu0 0.0
    %790 = vmatpush2.msra.mxu0 0.0
    %791 = vmatprep.subr.mxu0 0.0
    %792 = vmatpush2.msra.mxu0 0.0
    %793 = vmatprep.subr.mxu0 0.0
    %794 = vmatpush2.msra.mxu0 0.0
    %795 = vmatprep.subr.mxu0 0.0
    %796 = vmatpush2.msra.mxu0 0.0
    %797 = vmatprep.subr.mxu0 0.0
    %798 = vmatpush2.msra.mxu0 0.0
    %799 = vmatprep.subr.mxu0 0.0
    %800 = vmatpush2.msra.mxu0 0.0
    %801 = vmatprep.subr.mxu0 0.0
    %802 = vmatpush2.msra.mxu0 0.0
    %803 = vmatprep.subr.mxu0 0.0
    %804 = vmatpush2.msra.mxu0 0.0
    %805 = vmatprep.subr.mxu0 0.0
    %806 = vmatpush2.msra.mxu0 0.0
    %807 = vmatprep.subr.mxu0 0.0
    %808 = vmatpush2.msra.mxu0 0.0
    %809 = vmatprep.subr.mxu0 0.0
    %810 = vmatpush2.msra.mxu0 0.0
    %811 = vmatprep.subr.mxu0 0.0
    %812 = vmatpush2.msra.mxu0 0.0
    %813 = vmatprep.subr.mxu0 0.0
    %814 = vmatpush2.msra.mxu0 0.0
    %815 = vmatprep.subr.mxu0 0.0
    %816 = vmatpush2.msra.mxu0 0.0
    %817 = vmatprep.subr.mxu0 0.0
    %818 = vmatpush2.msra.mxu0 0.0
    %819 = vmatprep.subr.mxu0 0.0
    %820 = vmatpush2.msra.mxu0 0.0
    %821 = vmatprep.mubr.f32.mxu0 0.0
    %822 = vmatmul.mubr.f32.gmra.mxu0 %v755
    %v823 = vpop.f32.mrf.mxu0
    %v824 = vadd.f32 %v475, %v823
    %v825 = vpop.f32.mrf.mxu0
    %826 = vdwg.mxu0
    %v827 = vld [vmem:[#allocation11] sm:$0xff]
    %v828 = vld [vmem:[#allocation11 + $0x8] sm:$0xff]
    %v829 = vld [vmem:[#allocation11 + $0x10] sm:$0xff]
    %v830 = vld [vmem:[#allocation11 + $0x18] sm:$0xff]
    %831 = vmatprep.subr.mxu0 0.0
    %832 = vmatpush1.msra.mxu0 0.0
    %833 = vmatprep.subr.mxu0 0.0
    %834 = vmatpush1.msra.mxu0 0.0
    %835 = vmatprep.subr.mxu0 0.0
    %836 = vmatpush1.msra.mxu0 0.0
    %837 = vmatprep.subr.mxu0 0.0
    %838 = vmatpush1.msra.mxu0 0.0
    %839 = vmatprep.subr.mxu0 0.0
    %840 = vmatpush1.msra.mxu0 0.0
    %841 = vmatprep.subr.mxu0 0.0
    %842 = vmatpush1.msra.mxu0 0.0
    %843 = vmatprep.subr.mxu0 0.0
    %844 = vmatpush1.msra.mxu0 0.0
    %845 = vmatprep.subr.mxu0 0.0
    %846 = vmatpush1.msra.mxu0 0.0
    %847 = vmatprep.subr.mxu0 0.0
    %848 = vmatpush1.msra.mxu0 0.0
    %849 = vmatprep.subr.mxu0 0.0
    %850 = vmatpush1.msra.mxu0 0.0
    %851 = vmatprep.subr.mxu0 0.0
    %852 = vmatpush1.msra.mxu0 0.0
    %853 = vmatprep.subr.mxu0 0.0
    %854 = vmatpush1.msra.mxu0 0.0
    %855 = vmatprep.subr.mxu0 0.0
    %856 = vmatpush1.msra.mxu0 %v830
    %857 = vmatprep.subr.mxu0 0.0
    %858 = vmatpush1.msra.mxu0 %v829
    %859 = vmatprep.subr.mxu0 0.0
    %860 = vmatpush1.msra.mxu0 %v828
    %861 = vmatprep.subr.mxu0 0.0
    %862 = vmatpush1.msra.mxu0 %v827
    %863 = vmatprep.subr.mxu0 0.0
    %864 = vmatpush2.msra.mxu0 0.0
    %865 = vmatprep.subr.mxu0 0.0
    %866 = vmatpush2.msra.mxu0 0.0
    %867 = vmatprep.subr.mxu0 0.0
    %868 = vmatpush2.msra.mxu0 0.0
    %869 = vmatprep.subr.mxu0 0.0
    %870 = vmatpush2.msra.mxu0 0.0
    %871 = vmatprep.subr.mxu0 0.0
    %872 = vmatpush2.msra.mxu0 0.0
    %873 = vmatprep.subr.mxu0 0.0
    %874 = vmatpush2.msra.mxu0 0.0
    %875 = vmatprep.subr.mxu0 0.0
    %876 = vmatpush2.msra.mxu0 0.0
    %877 = vmatprep.subr.mxu0 0.0
    %878 = vmatpush2.msra.mxu0 0.0
    %879 = vmatprep.subr.mxu0 0.0
    %880 = vmatpush2.msra.mxu0 0.0
    %881 = vmatprep.subr.mxu0 0.0
    %882 = vmatpush2.msra.mxu0 0.0
    %883 = vmatprep.subr.mxu0 0.0
    %884 = vmatpush2.msra.mxu0 0.0
    %885 = vmatprep.subr.mxu0 0.0
    %886 = vmatpush2.msra.mxu0 0.0
    %887 = vmatprep.subr.mxu0 0.0
    %888 = vmatpush2.msra.mxu0 0.0
    %889 = vmatprep.subr.mxu0 0.0
    %890 = vmatpush2.msra.mxu0 0.0
    %891 = vmatprep.subr.mxu0 0.0
    %892 = vmatpush2.msra.mxu0 0.0
    %893 = vmatprep.subr.mxu0 0.0
    %894 = vmatpush2.msra.mxu0 0.0
    %895 = vmatprep.mubr.f32.mxu0 0.0
    %896 = vmatmul.mubr.f32.gmra.mxu0 %v498
    %v897 = vpop.f32.mrf.mxu0
    %v898 = vadd.f32 %v482, %v897
    %v899 = vpop.f32.mrf.mxu0
    %900 = vdwg.mxu0
    %v901 = vmul.f32 %v750, %v898
    %v902 = vadd.f32 %v824, %v901
    %v903 = vtanh.pop %v902
    %v904 = vsub.f32 1.0, %v750
    %906 = vrot.lane.b32.xlu0 %v903, 32
    %v907 = vpop.permute.xlu0 %906
    %v909 = vmul.f32 %v904, %v907
    %v910 = vmul.f32 %v750, 0.0
    %v911 = vadd.f32 %v909, %v910
    %912 = vmatprep.subr.mxu0 0.0
    %913 = vmatpush1.msra.mxu0 0.0
    %914 = vmatprep.subr.mxu0 0.0
    %915 = vmatpush1.msra.mxu0 0.0
    %916 = vmatprep.subr.mxu0 0.0
    %917 = vmatpush1.msra.mxu0 0.0
    %918 = vmatprep.subr.mxu0 0.0
    %919 = vmatpush1.msra.mxu0 0.0
    %920 = vmatprep.subr.mxu0 0.0
    %921 = vmatpush1.msra.mxu0 0.0
    %922 = vmatprep.subr.mxu0 0.0
    %923 = vmatpush1.msra.mxu0 0.0
    %924 = vmatprep.subr.mxu0 0.0
    %925 = vmatpush1.msra.mxu0 0.0
    %926 = vmatprep.subr.mxu0 0.0
    %927 = vmatpush1.msra.mxu0 0.0
    %928 = vmatprep.subr.mxu0 0.0
    %929 = vmatpush1.msra.mxu0 0.0
    %930 = vmatprep.subr.mxu0 0.0
    %931 = vmatpush1.msra.mxu0 0.0
    %932 = vmatprep.subr.mxu0 0.0
    %933 = vmatpush1.msra.mxu0 0.0
    %934 = vmatprep.subr.mxu0 0.0
    %935 = vmatpush1.msra.mxu0 0.0
    %936 = vmatprep.subr.mxu0 0.0
    %937 = vmatpush1.msra.mxu0 %v487
    %938 = vmatprep.subr.mxu0 0.0
    %939 = vmatpush1.msra.mxu0 %v486
    %940 = vmatprep.subr.mxu0 0.0
    %941 = vmatpush1.msra.mxu0 %v485
    %942 = vmatprep.subr.mxu0 0.0
    %943 = vmatpush1.msra.mxu0 %v484
    %944 = vmatprep.subr.mxu0 0.0
    %945 = vmatpush2.msra.mxu0 0.0
    %946 = vmatprep.subr.mxu0 0.0
    %947 = vmatpush2.msra.mxu0 0.0
    %948 = vmatprep.subr.mxu0 0.0
    %949 = vmatpush2.msra.mxu0 0.0
    %950 = vmatprep.subr.mxu0 0.0
    %951 = vmatpush2.msra.mxu0 0.0
    %952 = vmatprep.subr.mxu0 0.0
    %953 = vmatpush2.msra.mxu0 0.0
    %954 = vmatprep.subr.mxu0 0.0
    %955 = vmatpush2.msra.mxu0 0.0
    %956 = vmatprep.subr.mxu0 0.0
    %957 = vmatpush2.msra.mxu0 0.0
    %958 = vmatprep.subr.mxu0 0.0
    %959 = vmatpush2.msra.mxu0 0.0
    %960 = vmatprep.subr.mxu0 0.0
    %961 = vmatpush2.msra.mxu0 0.0
    %962 = vmatprep.subr.mxu0 0.0
    %963 = vmatpush2.msra.mxu0 0.0
    %964 = vmatprep.subr.mxu0 0.0
    %965 = vmatpush2.msra.mxu0 0.0
    %966 = vmatprep.subr.mxu0 0.0
    %967 = vmatpush2.msra.mxu0 0.0
    %968 = vmatprep.subr.mxu0 0.0
    %969 = vmatpush2.msra.mxu0 0.0
    %970 = vmatprep.subr.mxu0 0.0
    %971 = vmatpush2.msra.mxu0 0.0
    %972 = vmatprep.subr.mxu0 0.0
    %973 = vmatpush2.msra.mxu0 0.0
    %974 = vmatprep.subr.mxu0 0.0
    %975 = vmatpush2.msra.mxu0 0.0
    %976 = vmatprep.mubr.f32.mxu0 0.0
    %977 = vmatmul.mubr.f32.gmra.mxu0 %v755
    %v978 = vpop.f32.mrf.mxu0
    %v979 = vadd.f32 0.0, %v978
    %v980 = vpop.f32.mrf.mxu0
    %981 = vdwg.mxu0
    %v982 = vadd.f32 %v283, %v979
    %v983 = vxor.u32 %v982, 2147483648
    %v984 = vmul.f32 %v983, 1.442695
    %v985 = vpow.pop %v984
    %v986 = vadd.f32 %v985, 1.0
    %v987 = vrcp.pop %v986
    %v988 = vmul.f32 1.0, %v987
    %989 = vmatprep.subr.mxu0 0.0
    %990 = vmatpush1.msra.mxu0 0.0
    %991 = vmatprep.subr.mxu0 0.0
    %992 = vmatpush1.msra.mxu0 0.0
    %993 = vmatprep.subr.mxu0 0.0
    %994 = vmatpush1.msra.mxu0 0.0
    %995 = vmatprep.subr.mxu0 0.0
    %996 = vmatpush1.msra.mxu0 0.0
    %997 = vmatprep.subr.mxu0 0.0
    %998 = vmatpush1.msra.mxu0 0.0
    %999 = vmatprep.subr.mxu0 0.0
    %1000 = vmatpush1.msra.mxu0 0.0
    %1001 = vmatprep.subr.mxu0 0.0
    %1002 = vmatpush1.msra.mxu0 0.0
    %1003 = vmatprep.subr.mxu0 0.0
    %1004 = vmatpush1.msra.mxu0 0.0
    %1005 = vmatprep.subr.mxu0 0.0
    %1006 = vmatpush1.msra.mxu0 0.0
    %1007 = vmatprep.subr.mxu0 0.0
    %1008 = vmatpush1.msra.mxu0 0.0
    %1009 = vmatprep.subr.mxu0 0.0
    %1010 = vmatpush1.msra.mxu0 0.0
    %1011 = vmatprep.subr.mxu0 0.0
    %1012 = vmatpush1.msra.mxu0 0.0
    %1013 = vmatprep.subr.mxu0 0.0
    %1014 = vmatpush1.msra.mxu0 %v580
    %1015 = vmatprep.subr.mxu0 0.0
    %1016 = vmatpush1.msra.mxu0 %v579
    %1017 = vmatprep.subr.mxu0 0.0
    %1018 = vmatpush1.msra.mxu0 %v578
    %1019 = vmatprep.subr.mxu0 0.0
    %1020 = vmatpush1.msra.mxu0 %v577
    %1021 = vmatprep.subr.mxu0 0.0
    %1022 = vmatpush2.msra.mxu0 0.0
    %1023 = vmatprep.subr.mxu0 0.0
    %1024 = vmatpush2.msra.mxu0 0.0
    %1025 = vmatprep.subr.mxu0 0.0
    %1026 = vmatpush2.msra.mxu0 0.0
    %1027 = vmatprep.subr.mxu0 0.0
    %1028 = vmatpush2.msra.mxu0 0.0
    %1029 = vmatprep.subr.mxu0 0.0
    %1030 = vmatpush2.msra.mxu0 0.0
    %1031 = vmatprep.subr.mxu0 0.0
    %1032 = vmatpush2.msra.mxu0 0.0
    %1033 = vmatprep.subr.mxu0 0.0
    %1034 = vmatpush2.msra.mxu0 0.0
    %1035 = vmatprep.subr.mxu0 0.0
    %1036 = vmatpush2.msra.mxu0 0.0
    %1037 = vmatprep.subr.mxu0 0.0
    %1038 = vmatpush2.msra.mxu0 0.0
    %1039 = vmatprep.subr.mxu0 0.0
    %1040 = vmatpush2.msra.mxu0 0.0
    %1041 = vmatprep.subr.mxu0 0.0
    %1042 = vmatpush2.msra.mxu0 0.0
    %1043 = vmatprep.subr.mxu0 0.0
    %1044 = vmatpush2.msra.mxu0 0.0
    %1045 = vmatprep.subr.mxu0 0.0
    %1046 = vmatpush2.msra.mxu0 0.0
    %1047 = vmatprep.subr.mxu0 0.0
    %1048 = vmatpush2.msra.mxu0 0.0
    %1049 = vmatprep.subr.mxu0 0.0
    %1050 = vmatpush2.msra.mxu0 0.0
    %1051 = vmatprep.subr.mxu0 0.0
    %1052 = vmatpush2.msra.mxu0 0.0
    %1053 = vmatprep.mubr.f32.mxu0 0.0
    %1054 = vmatmul.mubr.f32.gmra.mxu0 %v755
    %v1055 = vpop.f32.mrf.mxu0
    %v1056 = vadd.f32 %v461, %v1055
    %v1057 = vpop.f32.mrf.mxu0
    %1058 = vdwg.mxu0
    %v1059 = vmul.f32 %v988, %v1056
    %1061 = vrot.lane.b32.xlu0 %v1059, 64
    %v1062 = vpop.permute.xlu0 %1061
    %v1064 = vadd.f32 %v283, %v1062
    %v1065 = vtanh.pop %v1064
    %v1066 = vsub.f32 1.0, %v988
    %1068 = vrot.lane.b32.xlu0 %v1065, 96
    %v1069 = vpop.permute.xlu0 %1068
    %v1071 = vmul.f32 %v1066, %v1069
    %v1072 = vmul.f32 %v988, %v665
    %v1073 = vadd.f32 %v1071, %v1072
    %1075 = vrot.lane.b32.xlu0 %v1073, 96
    %v1076 = vpop.permute.xlu0 %1075
    %v1078 = vsel %vm496, %v1076, %v911
    %v1080 = vsel %vm671, %v1078, 0
    %1082 = vmatprep.subr.mxu0 0.0
    %1083 = vmatpush1.msra.mxu0 0.0
    %1084 = vmatprep.subr.mxu0 0.0
    %1085 = vmatpush1.msra.mxu0 0.0
    %1086 = vmatprep.subr.mxu0 0.0
    %1087 = vmatpush1.msra.mxu0 0.0
    %1088 = vmatprep.subr.mxu0 0.0
    %1089 = vmatpush1.msra.mxu0 0.0
    %1090 = vmatprep.subr.mxu0 0.0
    %1091 = vmatpush1.msra.mxu0 0.0
    %1092 = vmatprep.subr.mxu0 0.0
    %1093 = vmatpush1.msra.mxu0 0.0
    %1094 = vmatprep.subr.mxu0 0.0
    %1095 = vmatpush1.msra.mxu0 0.0
    %1096 = vmatprep.subr.mxu0 0.0
    %1097 = vmatpush1.msra.mxu0 0.0
    %1098 = vmatprep.subr.mxu0 0.0
    %1099 = vmatpush1.msra.mxu0 %v495
    %1100 = vmatprep.subr.mxu0 0.0
    %1101 = vmatpush1.msra.mxu0 %v494
    %1102 = vmatprep.subr.mxu0 0.0
    %1103 = vmatpush1.msra.mxu0 %v493
    %1104 = vmatprep.subr.mxu0 0.0
    %1105 = vmatpush1.msra.mxu0 %v492
    %1106 = vmatprep.subr.mxu0 0.0
    %1107 = vmatpush1.msra.mxu0 %v491
    %1108 = vmatprep.subr.mxu0 0.0
    %1109 = vmatpush1.msra.mxu0 %v490
    %1110 = vmatprep.subr.mxu0 0.0
    %1111 = vmatpush1.msra.mxu0 %v489
    %1112 = vmatprep.subr.mxu0 0.0
    %1113 = vmatpush1.msra.mxu0 %v488
    %1114 = vmatprep.subr.mxu0 0.0
    %1115 = vmatpush2.msra.mxu0 0.0
    %1116 = vmatprep.subr.mxu0 0.0
    %1117 = vmatpush2.msra.mxu0 0.0
    %1118 = vmatprep.subr.mxu0 0.0
    %1119 = vmatpush2.msra.mxu0 0.0
    %1120 = vmatprep.subr.mxu0 0.0
    %1121 = vmatpush2.msra.mxu0 0.0
    %1122 = vmatprep.subr.mxu0 0.0
    %1123 = vmatpush2.msra.mxu0 0.0
    %1124 = vmatprep.subr.mxu0 0.0
    %1125 = vmatpush2.msra.mxu0 0.0
    %1126 = vmatprep.subr.mxu0 0.0
    %1127 = vmatpush2.msra.mxu0 0.0
    %1128 = vmatprep.subr.mxu0 0.0
    %1129 = vmatpush2.msra.mxu0 0.0
    %1130 = vmatprep.subr.mxu0 0.0
    %1131 = vmatpush2.msra.mxu0 0.0
    %1132 = vmatprep.subr.mxu0 0.0
    %1133 = vmatpush2.msra.mxu0 0.0
    %1134 = vmatprep.subr.mxu0 0.0
    %1135 = vmatpush2.msra.mxu0 0.0
    %1136 = vmatprep.subr.mxu0 0.0
    %1137 = vmatpush2.msra.mxu0 0.0
    %1138 = vmatprep.subr.mxu0 0.0
    %1139 = vmatpush2.msra.mxu0 0.0
    %1140 = vmatprep.subr.mxu0 0.0
    %1141 = vmatpush2.msra.mxu0 0.0
    %1142 = vmatprep.subr.mxu0 0.0
    %1143 = vmatpush2.msra.mxu0 0.0
    %1144 = vmatprep.subr.mxu0 0.0
    %1145 = vmatpush2.msra.mxu0 0.0
    %1146 = vmatprep.mubr.f32.mxu0 0.0
    %1147 = vmatmul.mubr.f32.gmra.mxu0 %v1080
    %v1148 = vpop.f32.mrf.mxu0
    %v1149 = vadd.f32 %v468, %v1148
    %v1150 = vpop.f32.mrf.mxu0
    %1151 = vdwg.mxu0
    %v1152 = vxor.u32 %v1149, 2147483648
    %v1153 = vmul.f32 %v1152, 1.442695
    %v1154 = vpow.pop %v1153
    %v1155 = vadd.f32 %v1154, 1.0
    %v1156 = vrcp.pop %v1155
    %v1157 = vmul.f32 1.0, %v1156
    %v1158 = vsel %vm496, %v1076, 0
    %1160 = vmatprep.subr.mxu0 0.0
    %1161 = vmatpush1.msra.mxu0 0.0
    %1162 = vmatprep.subr.mxu0 0.0
    %1163 = vmatpush1.msra.mxu0 0.0
    %1164 = vmatprep.subr.mxu0 0.0
    %1165 = vmatpush1.msra.mxu0 0.0
    %1166 = vmatprep.subr.mxu0 0.0
    %1167 = vmatpush1.msra.mxu0 0.0
    %1168 = vmatprep.subr.mxu0 0.0
    %1169 = vmatpush1.msra.mxu0 0.0
    %1170 = vmatprep.subr.mxu0 0.0
    %1171 = vmatpush1.msra.mxu0 0.0
    %1172 = vmatprep.subr.mxu0 0.0
    %1173 = vmatpush1.msra.mxu0 0.0
    %1174 = vmatprep.subr.mxu0 0.0
    %1175 = vmatpush1.msra.mxu0 0.0
    %1176 = vmatprep.subr.mxu0 0.0
    %1177 = vmatpush1.msra.mxu0 0.0
    %1178 = vmatprep.subr.mxu0 0.0
    %1179 = vmatpush1.msra.mxu0 0.0
    %1180 = vmatprep.subr.mxu0 0.0
    %1181 = vmatpush1.msra.mxu0 0.0
    %1182 = vmatprep.subr.mxu0 0.0
    %1183 = vmatpush1.msra.mxu0 0.0
    %1184 = vmatprep.subr.mxu0 0.0
    %1185 = vmatpush1.msra.mxu0 %v754
    %1186 = vmatprep.subr.mxu0 0.0
    %1187 = vmatpush1.msra.mxu0 %v753
    %1188 = vmatprep.subr.mxu0 0.0
    %1189 = vmatpush1.msra.mxu0 %v752
    %1190 = vmatprep.subr.mxu0 0.0
    %1191 = vmatpush1.msra.mxu0 %v751
    %1192 = vmatprep.subr.mxu0 0.0
    %1193 = vmatpush2.msra.mxu0 0.0
    %1194 = vmatprep.subr.mxu0 0.0
    %1195 = vmatpush2.msra.mxu0 0.0
    %1196 = vmatprep.subr.mxu0 0.0
    %1197 = vmatpush2.msra.mxu0 0.0
    %1198 = vmatprep.subr.mxu0 0.0
    %1199 = vmatpush2.msra.mxu0 0.0
    %1200 = vmatprep.subr.mxu0 0.0
    %1201 = vmatpush2.msra.mxu0 0.0
    %1202 = vmatprep.subr.mxu0 0.0
    %1203 = vmatpush2.msra.mxu0 0.0
    %1204 = vmatprep.subr.mxu0 0.0
    %1205 = vmatpush2.msra.mxu0 0.0
    %1206 = vmatprep.subr.mxu0 0.0
    %1207 = vmatpush2.msra.mxu0 0.0
    %1208 = vmatprep.subr.mxu0 0.0
    %1209 = vmatpush2.msra.mxu0 0.0
    %1210 = vmatprep.subr.mxu0 0.0
    %1211 = vmatpush2.msra.mxu0 0.0
    %1212 = vmatprep.subr.mxu0 0.0
    %1213 = vmatpush2.msra.mxu0 0.0
    %1214 = vmatprep.subr.mxu0 0.0
    %1215 = vmatpush2.msra.mxu0 0.0
    %1216 = vmatprep.subr.mxu0 0.0
    %1217 = vmatpush2.msra.mxu0 0.0
    %1218 = vmatprep.subr.mxu0 0.0
    %1219 = vmatpush2.msra.mxu0 0.0
    %1220 = vmatprep.subr.mxu0 0.0
    %1221 = vmatpush2.msra.mxu0 0.0
    %1222 = vmatprep.subr.mxu0 0.0
    %1223 = vmatpush2.msra.mxu0 0.0
    %1224 = vmatprep.mubr.f32.mxu0 0.0
    %1225 = vmatmul.mubr.f32.gmra.mxu0 %v1158
    %v1226 = vpop.f32.mrf.mxu0
    %v1227 = vadd.f32 %v475, %v1226
    %v1228 = vpop.f32.mrf.mxu0
    %1229 = vdwg.mxu0
    %1231 = vrot.lane.b32.xlu0 %v911, 96
    %v1232 = vpop.permute.xlu0 %1231
    %v1233 = vsel %vm496, %v1232, 0
    %1235 = vmatprep.subr.mxu0 0.0
    %1236 = vmatpush1.msra.mxu0 0.0
    %1237 = vmatprep.subr.mxu0 0.0
    %1238 = vmatpush1.msra.mxu0 0.0
    %1239 = vmatprep.subr.mxu0 0.0
    %1240 = vmatpush1.msra.mxu0 0.0
    %1241 = vmatprep.subr.mxu0 0.0
    %1242 = vmatpush1.msra.mxu0 0.0
    %1243 = vmatprep.subr.mxu0 0.0
    %1244 = vmatpush1.msra.mxu0 0.0
    %1245 = vmatprep.subr.mxu0 0.0
    %1246 = vmatpush1.msra.mxu0 0.0
    %1247 = vmatprep.subr.mxu0 0.0
    %1248 = vmatpush1.msra.mxu0 0.0
    %1249 = vmatprep.subr.mxu0 0.0
    %1250 = vmatpush1.msra.mxu0 0.0
    %1251 = vmatprep.subr.mxu0 0.0
    %1252 = vmatpush1.msra.mxu0 0.0
    %1253 = vmatprep.subr.mxu0 0.0
    %1254 = vmatpush1.msra.mxu0 0.0
    %1255 = vmatprep.subr.mxu0 0.0
    %1256 = vmatpush1.msra.mxu0 0.0
    %1257 = vmatprep.subr.mxu0 0.0
    %1258 = vmatpush1.msra.mxu0 0.0
    %1259 = vmatprep.subr.mxu0 0.0
    %1260 = vmatpush1.msra.mxu0 %v830
    %1261 = vmatprep.subr.mxu0 0.0
    %1262 = vmatpush1.msra.mxu0 %v829
    %1263 = vmatprep.subr.mxu0 0.0
    %1264 = vmatpush1.msra.mxu0 %v828
    %1265 = vmatprep.subr.mxu0 0.0
    %1266 = vmatpush1.msra.mxu0 %v827
    %1267 = vmatprep.subr.mxu0 0.0
    %1268 = vmatpush2.msra.mxu0 0.0
    %1269 = vmatprep.subr.mxu0 0.0
    %1270 = vmatpush2.msra.mxu0 0.0
    %1271 = vmatprep.subr.mxu0 0.0
    %1272 = vmatpush2.msra.mxu0 0.0
    %1273 = vmatprep.subr.mxu0 0.0
    %1274 = vmatpush2.msra.mxu0 0.0
    %1275 = vmatprep.subr.mxu0 0.0
    %1276 = vmatpush2.msra.mxu0 0.0
    %1277 = vmatprep.subr.mxu0 0.0
    %1278 = vmatpush2.msra.mxu0 0.0
    %1279 = vmatprep.subr.mxu0 0.0
    %1280 = vmatpush2.msra.mxu0 0.0
    %1281 = vmatprep.subr.mxu0 0.0
    %1282 = vmatpush2.msra.mxu0 0.0
    %1283 = vmatprep.subr.mxu0 0.0
    %1284 = vmatpush2.msra.mxu0 0.0
    %1285 = vmatprep.subr.mxu0 0.0
    %1286 = vmatpush2.msra.mxu0 0.0
    %1287 = vmatprep.subr.mxu0 0.0
    %1288 = vmatpush2.msra.mxu0 0.0
    %1289 = vmatprep.subr.mxu0 0.0
    %1290 = vmatpush2.msra.mxu0 0.0
    %1291 = vmatprep.subr.mxu0 0.0
    %1292 = vmatpush2.msra.mxu0 0.0
    %1293 = vmatprep.subr.mxu0 0.0
    %1294 = vmatpush2.msra.mxu0 0.0
    %1295 = vmatprep.subr.mxu0 0.0
    %1296 = vmatpush2.msra.mxu0 0.0
    %1297 = vmatprep.subr.mxu0 0.0
    %1298 = vmatpush2.msra.mxu0 0.0
    %1299 = vmatprep.mubr.f32.mxu0 0.0
    %1300 = vmatmul.mubr.f32.gmra.mxu0 %v1233
    %v1301 = vpop.f32.mrf.mxu0
    %v1302 = vadd.f32 %v482, %v1301
    %v1303 = vpop.f32.mrf.mxu0
    %1304 = vdwg.mxu0
    %v1305 = vmul.f32 %v1157, %v1302
    %v1306 = vadd.f32 %v1227, %v1305
    %v1307 = vtanh.pop %v1306
    %v1308 = vsub.f32 1.0, %v1157
    %1310 = vrot.lane.b32.xlu0 %v1307, 32
    %v1311 = vpop.permute.xlu0 %1310
    %v1313 = vmul.f32 %v1308, %v1311
    %v1314 = vmul.f32 %v1157, %v911
    %v1315 = vadd.f32 %v1313, %v1314
    %1316 = vmatprep.subr.mxu0 0.0
    %1317 = vmatpush1.msra.mxu0 0.0
    %1318 = vmatprep.subr.mxu0 0.0
    %1319 = vmatpush1.msra.mxu0 0.0
    %1320 = vmatprep.subr.mxu0 0.0
    %1321 = vmatpush1.msra.mxu0 0.0
    %1322 = vmatprep.subr.mxu0 0.0
    %1323 = vmatpush1.msra.mxu0 0.0
    %1324 = vmatprep.subr.mxu0 0.0
    %1325 = vmatpush1.msra.mxu0 0.0
    %1326 = vmatprep.subr.mxu0 0.0
    %1327 = vmatpush1.msra.mxu0 0.0
    %1328 = vmatprep.subr.mxu0 0.0
    %1329 = vmatpush1.msra.mxu0 0.0
    %1330 = vmatprep.subr.mxu0 0.0
    %1331 = vmatpush1.msra.mxu0 0.0
    %1332 = vmatprep.subr.mxu0 0.0
    %1333 = vmatpush1.msra.mxu0 0.0
    %1334 = vmatprep.subr.mxu0 0.0
    %1335 = vmatpush1.msra.mxu0 0.0
    %1336 = vmatprep.subr.mxu0 0.0
    %1337 = vmatpush1.msra.mxu0 0.0
    %1338 = vmatprep.subr.mxu0 0.0
    %1339 = vmatpush1.msra.mxu0 0.0
    %1340 = vmatprep.subr.mxu0 0.0
    %1341 = vmatpush1.msra.mxu0 %v487
    %1342 = vmatprep.subr.mxu0 0.0
    %1343 = vmatpush1.msra.mxu0 %v486
    %1344 = vmatprep.subr.mxu0 0.0
    %1345 = vmatpush1.msra.mxu0 %v485
    %1346 = vmatprep.subr.mxu0 0.0
    %1347 = vmatpush1.msra.mxu0 %v484
    %1348 = vmatprep.subr.mxu0 0.0
    %1349 = vmatpush2.msra.mxu0 0.0
    %1350 = vmatprep.subr.mxu0 0.0
    %1351 = vmatpush2.msra.mxu0 0.0
    %1352 = vmatprep.subr.mxu0 0.0
    %1353 = vmatpush2.msra.mxu0 0.0
    %1354 = vmatprep.subr.mxu0 0.0
    %1355 = vmatpush2.msra.mxu0 0.0
    %1356 = vmatprep.subr.mxu0 0.0
    %1357 = vmatpush2.msra.mxu0 0.0
    %1358 = vmatprep.subr.mxu0 0.0
    %1359 = vmatpush2.msra.mxu0 0.0
    %1360 = vmatprep.subr.mxu0 0.0
    %1361 = vmatpush2.msra.mxu0 0.0
    %1362 = vmatprep.subr.mxu0 0.0
    %1363 = vmatpush2.msra.mxu0 0.0
    %1364 = vmatprep.subr.mxu0 0.0
    %1365 = vmatpush2.msra.mxu0 0.0
    %1366 = vmatprep.subr.mxu0 0.0
    %1367 = vmatpush2.msra.mxu0 0.0
    %1368 = vmatprep.subr.mxu0 0.0
    %1369 = vmatpush2.msra.mxu0 0.0
    %1370 = vmatprep.subr.mxu0 0.0
    %1371 = vmatpush2.msra.mxu0 0.0
    %1372 = vmatprep.subr.mxu0 0.0
    %1373 = vmatpush2.msra.mxu0 0.0
    %1374 = vmatprep.subr.mxu0 0.0
    %1375 = vmatpush2.msra.mxu0 0.0
    %1376 = vmatprep.subr.mxu0 0.0
    %1377 = vmatpush2.msra.mxu0 0.0
    %1378 = vmatprep.subr.mxu0 0.0
    %1379 = vmatpush2.msra.mxu0 0.0
    %1380 = vmatprep.mubr.f32.mxu0 0.0
    %1381 = vmatmul.mubr.f32.gmra.mxu0 %v1158
    %v1382 = vpop.f32.mrf.mxu0
    %v1383 = vadd.f32 0.0, %v1382
    %v1384 = vpop.f32.mrf.mxu0
    %1385 = vdwg.mxu0
    %v1386 = vadd.f32 %v288, %v1383
    %v1387 = vxor.u32 %v1386, 2147483648
    %v1388 = vmul.f32 %v1387, 1.442695
    %v1389 = vpow.pop %v1388
    %v1390 = vadd.f32 %v1389, 1.0
    %v1391 = vrcp.pop %v1390
    %v1392 = vmul.f32 1.0, %v1391
    %1393 = vmatprep.subr.mxu0 0.0
    %1394 = vmatpush1.msra.mxu0 0.0
    %1395 = vmatprep.subr.mxu0 0.0
    %1396 = vmatpush1.msra.mxu0 0.0
    %1397 = vmatprep.subr.mxu0 0.0
    %1398 = vmatpush1.msra.mxu0 0.0
    %1399 = vmatprep.subr.mxu0 0.0
    %1400 = vmatpush1.msra.mxu0 0.0
    %1401 = vmatprep.subr.mxu0 0.0
    %1402 = vmatpush1.msra.mxu0 0.0
    %1403 = vmatprep.subr.mxu0 0.0
    %1404 = vmatpush1.msra.mxu0 0.0
    %1405 = vmatprep.subr.mxu0 0.0
    %1406 = vmatpush1.msra.mxu0 0.0
    %1407 = vmatprep.subr.mxu0 0.0
    %1408 = vmatpush1.msra.mxu0 0.0
    %1409 = vmatprep.subr.mxu0 0.0
    %1410 = vmatpush1.msra.mxu0 0.0
    %1411 = vmatprep.subr.mxu0 0.0
    %1412 = vmatpush1.msra.mxu0 0.0
    %1413 = vmatprep.subr.mxu0 0.0
    %1414 = vmatpush1.msra.mxu0 0.0
    %1415 = vmatprep.subr.mxu0 0.0
    %1416 = vmatpush1.msra.mxu0 0.0
    %1417 = vmatprep.subr.mxu0 0.0
    %1418 = vmatpush1.msra.mxu0 %v580
    %1419 = vmatprep.subr.mxu0 0.0
    %1420 = vmatpush1.msra.mxu0 %v579
    %1421 = vmatprep.subr.mxu0 0.0
    %1422 = vmatpush1.msra.mxu0 %v578
    %1423 = vmatprep.subr.mxu0 0.0
    %1424 = vmatpush1.msra.mxu0 %v577
    %1425 = vmatprep.subr.mxu0 0.0
    %1426 = vmatpush2.msra.mxu0 0.0
    %1427 = vmatprep.subr.mxu0 0.0
    %1428 = vmatpush2.msra.mxu0 0.0
    %1429 = vmatprep.subr.mxu0 0.0
    %1430 = vmatpush2.msra.mxu0 0.0
    %1431 = vmatprep.subr.mxu0 0.0
    %1432 = vmatpush2.msra.mxu0 0.0
    %1433 = vmatprep.subr.mxu0 0.0
    %1434 = vmatpush2.msra.mxu0 0.0
    %1435 = vmatprep.subr.mxu0 0.0
    %1436 = vmatpush2.msra.mxu0 0.0
    %1437 = vmatprep.subr.mxu0 0.0
    %1438 = vmatpush2.msra.mxu0 0.0
    %1439 = vmatprep.subr.mxu0 0.0
    %1440 = vmatpush2.msra.mxu0 0.0
    %1441 = vmatprep.subr.mxu0 0.0
    %1442 = vmatpush2.msra.mxu0 0.0
    %1443 = vmatprep.subr.mxu0 0.0
    %1444 = vmatpush2.msra.mxu0 0.0
    %1445 = vmatprep.subr.mxu0 0.0
    %1446 = vmatpush2.msra.mxu0 0.0
    %1447 = vmatprep.subr.mxu0 0.0
    %1448 = vmatpush2.msra.mxu0 0.0
    %1449 = vmatprep.subr.mxu0 0.0
    %1450 = vmatpush2.msra.mxu0 0.0
    %1451 = vmatprep.subr.mxu0 0.0
    %1452 = vmatpush2.msra.mxu0 0.0
    %1453 = vmatprep.subr.mxu0 0.0
    %1454 = vmatpush2.msra.mxu0 0.0
    %1455 = vmatprep.subr.mxu0 0.0
    %1456 = vmatpush2.msra.mxu0 0.0
    %1457 = vmatprep.mubr.f32.mxu0 0.0
    %1458 = vmatmul.mubr.f32.gmra.mxu0 %v1158
    %v1459 = vpop.f32.mrf.mxu0
    %v1460 = vadd.f32 %v461, %v1459
    %v1461 = vpop.f32.mrf.mxu0
    %1462 = vdwg.mxu0
    %v1463 = vmul.f32 %v1392, %v1460
    %1465 = vrot.lane.b32.xlu0 %v1463, 64
    %v1466 = vpop.permute.xlu0 %1465
    %v1468 = vadd.f32 %v288, %v1466
    %v1469 = vtanh.pop %v1468
    %v1470 = vsub.f32 1.0, %v1392
    %1472 = vrot.lane.b32.xlu0 %v1469, 96
    %v1473 = vpop.permute.xlu0 %1472
    %v1475 = vmul.f32 %v1470, %v1473
    %v1476 = vmul.f32 %v1392, %v1073
    %v1477 = vadd.f32 %v1475, %v1476
    %1479 = vrot.lane.b32.xlu0 %v1477, 96
    %v1480 = vpop.permute.xlu0 %1479
    %v1482 = vsel %vm496, %v1480, %v1315
    %v1484 = vsel %vm671, %v1482, 0
    %1486 = vmatprep.subr.mxu0 0.0
    %1487 = vmatpush1.msra.mxu0 0.0
    %1488 = vmatprep.subr.mxu0 0.0
    %1489 = vmatpush1.msra.mxu0 0.0
    %1490 = vmatprep.subr.mxu0 0.0
    %1491 = vmatpush1.msra.mxu0 0.0
    %1492 = vmatprep.subr.mxu0 0.0
    %1493 = vmatpush1.msra.mxu0 0.0
    %1494 = vmatprep.subr.mxu0 0.0
    %1495 = vmatpush1.msra.mxu0 0.0
    %1496 = vmatprep.subr.mxu0 0.0
    %1497 = vmatpush1.msra.mxu0 0.0
    %1498 = vmatprep.subr.mxu0 0.0
    %1499 = vmatpush1.msra.mxu0 0.0
    %1500 = vmatprep.subr.mxu0 0.0
    %1501 = vmatpush1.msra.mxu0 0.0
    %1502 = vmatprep.subr.mxu0 0.0
    %1503 = vmatpush1.msra.mxu0 %v495
    %1504 = vmatprep.subr.mxu0 0.0
    %1505 = vmatpush1.msra.mxu0 %v494
    %1506 = vmatprep.subr.mxu0 0.0
    %1507 = vmatpush1.msra.mxu0 %v493
    %1508 = vmatprep.subr.mxu0 0.0
    %1509 = vmatpush1.msra.mxu0 %v492
    %1510 = vmatprep.subr.mxu0 0.0
    %1511 = vmatpush1.msra.mxu0 %v491
    %1512 = vmatprep.subr.mxu0 0.0
    %1513 = vmatpush1.msra.mxu0 %v490
    %1514 = vmatprep.subr.mxu0 0.0
    %1515 = vmatpush1.msra.mxu0 %v489
    %1516 = vmatprep.subr.mxu0 0.0
    %1517 = vmatpush1.msra.mxu0 %v488
    %1518 = vmatprep.subr.mxu0 0.0
    %1519 = vmatpush2.msra.mxu0 0.0
    %1520 = vmatprep.subr.mxu0 0.0
    %1521 = vmatpush2.msra.mxu0 0.0
    %1522 = vmatprep.subr.mxu0 0.0
    %1523 = vmatpush2.msra.mxu0 0.0
    %1524 = vmatprep.subr.mxu0 0.0
    %1525 = vmatpush2.msra.mxu0 0.0
    %1526 = vmatprep.subr.mxu0 0.0
    %1527 = vmatpush2.msra.mxu0 0.0
    %1528 = vmatprep.subr.mxu0 0.0
    %1529 = vmatpush2.msra.mxu0 0.0
    %1530 = vmatprep.subr.mxu0 0.0
    %1531 = vmatpush2.msra.mxu0 0.0
    %1532 = vmatprep.subr.mxu0 0.0
    %1533 = vmatpush2.msra.mxu0 0.0
    %1534 = vmatprep.subr.mxu0 0.0
    %1535 = vmatpush2.msra.mxu0 0.0
    %1536 = vmatprep.subr.mxu0 0.0
    %1537 = vmatpush2.msra.mxu0 0.0
    %1538 = vmatprep.subr.mxu0 0.0
    %1539 = vmatpush2.msra.mxu0 0.0
    %1540 = vmatprep.subr.mxu0 0.0
    %1541 = vmatpush2.msra.mxu0 0.0
    %1542 = vmatprep.subr.mxu0 0.0
    %1543 = vmatpush2.msra.mxu0 0.0
    %1544 = vmatprep.subr.mxu0 0.0
    %1545 = vmatpush2.msra.mxu0 0.0
    %1546 = vmatprep.subr.mxu0 0.0
    %1547 = vmatpush2.msra.mxu0 0.0
    %1548 = vmatprep.subr.mxu0 0.0
    %1549 = vmatpush2.msra.mxu0 0.0
    %1550 = vmatprep.mubr.f32.mxu0 0.0
    %1551 = vmatmul.mubr.f32.gmra.mxu0 %v1484
    %v1552 = vpop.f32.mrf.mxu0
    %v1553 = vadd.f32 %v468, %v1552
    %v1554 = vpop.f32.mrf.mxu0
    %1555 = vdwg.mxu0
    %v1556 = vxor.u32 %v1553, 2147483648
    %v1557 = vmul.f32 %v1556, 1.442695
    %v1558 = vpow.pop %v1557
    %v1559 = vadd.f32 %v1558, 1.0
    %v1560 = vrcp.pop %v1559
    %v1561 = vmul.f32 1.0, %v1560
    %v1562 = vsel %vm496, %v1480, 0
    %1564 = vmatprep.subr.mxu0 0.0
    %1565 = vmatpush1.msra.mxu0 0.0
    %1566 = vmatprep.subr.mxu0 0.0
    %1567 = vmatpush1.msra.mxu0 0.0
    %1568 = vmatprep.subr.mxu0 0.0
    %1569 = vmatpush1.msra.mxu0 0.0
    %1570 = vmatprep.subr.mxu0 0.0
    %1571 = vmatpush1.msra.mxu0 0.0
    %1572 = vmatprep.subr.mxu0 0.0
    %1573 = vmatpush1.msra.mxu0 0.0
    %1574 = vmatprep.subr.mxu0 0.0
    %1575 = vmatpush1.msra.mxu0 0.0
    %1576 = vmatprep.subr.mxu0 0.0
    %1577 = vmatpush1.msra.mxu0 0.0
    %1578 = vmatprep.subr.mxu0 0.0
    %1579 = vmatpush1.msra.mxu0 0.0
    %1580 = vmatprep.subr.mxu0 0.0
    %1581 = vmatpush1.msra.mxu0 0.0
    %1582 = vmatprep.subr.mxu0 0.0
    %1583 = vmatpush1.msra.mxu0 0.0
    %1584 = vmatprep.subr.mxu0 0.0
    %1585 = vmatpush1.msra.mxu0 0.0
    %1586 = vmatprep.subr.mxu0 0.0
    %1587 = vmatpush1.msra.mxu0 0.0
    %1588 = vmatprep.subr.mxu0 0.0
    %1589 = vmatpush1.msra.mxu0 %v754
    %1590 = vmatprep.subr.mxu0 0.0
    %1591 = vmatpush1.msra.mxu0 %v753
    %1592 = vmatprep.subr.mxu0 0.0
    %1593 = vmatpush1.msra.mxu0 %v752
    %1594 = vmatprep.subr.mxu0 0.0
    %1595 = vmatpush1.msra.mxu0 %v751
    %1596 = vmatprep.subr.mxu0 0.0
    %1597 = vmatpush2.msra.mxu0 0.0
    %1598 = vmatprep.subr.mxu0 0.0
    %1599 = vmatpush2.msra.mxu0 0.0
    %1600 = vmatprep.subr.mxu0 0.0
    %1601 = vmatpush2.msra.mxu0 0.0
    %1602 = vmatprep.subr.mxu0 0.0
    %1603 = vmatpush2.msra.mxu0 0.0
    %1604 = vmatprep.subr.mxu0 0.0
    %1605 = vmatpush2.msra.mxu0 0.0
    %1606 = vmatprep.subr.mxu0 0.0
    %1607 = vmatpush2.msra.mxu0 0.0
    %1608 = vmatprep.subr.mxu0 0.0
    %1609 = vmatpush2.msra.mxu0 0.0
    %1610 = vmatprep.subr.mxu0 0.0
    %1611 = vmatpush2.msra.mxu0 0.0
    %1612 = vmatprep.subr.mxu0 0.0
    %1613 = vmatpush2.msra.mxu0 0.0
    %1614 = vmatprep.subr.mxu0 0.0
    %1615 = vmatpush2.msra.mxu0 0.0
    %1616 = vmatprep.subr.mxu0 0.0
    %1617 = vmatpush2.msra.mxu0 0.0
    %1618 = vmatprep.subr.mxu0 0.0
    %1619 = vmatpush2.msra.mxu0 0.0
    %1620 = vmatprep.subr.mxu0 0.0
    %1621 = vmatpush2.msra.mxu0 0.0
    %1622 = vmatprep.subr.mxu0 0.0
    %1623 = vmatpush2.msra.mxu0 0.0
    %1624 = vmatprep.subr.mxu0 0.0
    %1625 = vmatpush2.msra.mxu0 0.0
    %1626 = vmatprep.subr.mxu0 0.0
    %1627 = vmatpush2.msra.mxu0 0.0
    %1628 = vmatprep.mubr.f32.mxu0 0.0
    %1629 = vmatmul.mubr.f32.gmra.mxu0 %v1562
    %v1630 = vpop.f32.mrf.mxu0
    %v1631 = vadd.f32 %v475, %v1630
    %v1632 = vpop.f32.mrf.mxu0
    %1633 = vdwg.mxu0
    %1635 = vrot.lane.b32.xlu0 %v1315, 96
    %v1636 = vpop.permute.xlu0 %1635
    %v1637 = vsel %vm496, %v1636, 0
    %1639 = vmatprep.subr.mxu0 0.0
    %1640 = vmatpush1.msra.mxu0 0.0
    %1641 = vmatprep.subr.mxu0 0.0
    %1642 = vmatpush1.msra.mxu0 0.0
    %1643 = vmatprep.subr.mxu0 0.0
    %1644 = vmatpush1.msra.mxu0 0.0
    %1645 = vmatprep.subr.mxu0 0.0
    %1646 = vmatpush1.msra.mxu0 0.0
    %1647 = vmatprep.subr.mxu0 0.0
    %1648 = vmatpush1.msra.mxu0 0.0
    %1649 = vmatprep.subr.mxu0 0.0
    %1650 = vmatpush1.msra.mxu0 0.0
    %1651 = vmatprep.subr.mxu0 0.0
    %1652 = vmatpush1.msra.mxu0 0.0
    %1653 = vmatprep.subr.mxu0 0.0
    %1654 = vmatpush1.msra.mxu0 0.0
    %1655 = vmatprep.subr.mxu0 0.0
    %1656 = vmatpush1.msra.mxu0 0.0
    %1657 = vmatprep.subr.mxu0 0.0
    %1658 = vmatpush1.msra.mxu0 0.0
    %1659 = vmatprep.subr.mxu0 0.0
    %1660 = vmatpush1.msra.mxu0 0.0
    %1661 = vmatprep.subr.mxu0 0.0
    %1662 = vmatpush1.msra.mxu0 0.0
    %1663 = vmatprep.subr.mxu0 0.0
    %1664 = vmatpush1.msra.mxu0 %v830
    %1665 = vmatprep.subr.mxu0 0.0
    %1666 = vmatpush1.msra.mxu0 %v829
    %1667 = vmatprep.subr.mxu0 0.0
    %1668 = vmatpush1.msra.mxu0 %v828
    %1669 = vmatprep.subr.mxu0 0.0
    %1670 = vmatpush1.msra.mxu0 %v827
    %1671 = vmatprep.subr.mxu0 0.0
    %1672 = vmatpush2.msra.mxu0 0.0
    %1673 = vmatprep.subr.mxu0 0.0
    %1674 = vmatpush2.msra.mxu0 0.0
    %1675 = vmatprep.subr.mxu0 0.0
    %1676 = vmatpush2.msra.mxu0 0.0
    %1677 = vmatprep.subr.mxu0 0.0
    %1678 = vmatpush2.msra.mxu0 0.0
    %1679 = vmatprep.subr.mxu0 0.0
    %1680 = vmatpush2.msra.mxu0 0.0
    %1681 = vmatprep.subr.mxu0 0.0
    %1682 = vmatpush2.msra.mxu0 0.0
    %1683 = vmatprep.subr.mxu0 0.0
    %1684 = vmatpush2.msra.mxu0 0.0
    %1685 = vmatprep.subr.mxu0 0.0
    %1686 = vmatpush2.msra.mxu0 0.0
    %1687 = vmatprep.subr.mxu0 0.0
    %1688 = vmatpush2.msra.mxu0 0.0
    %1689 = vmatprep.subr.mxu0 0.0
    %1690 = vmatpush2.msra.mxu0 0.0
    %1691 = vmatprep.subr.mxu0 0.0
    %1692 = vmatpush2.msra.mxu0 0.0
    %1693 = vmatprep.subr.mxu0 0.0
    %1694 = vmatpush2.msra.mxu0 0.0
    %1695 = vmatprep.subr.mxu0 0.0
    %1696 = vmatpush2.msra.mxu0 0.0
    %1697 = vmatprep.subr.mxu0 0.0
    %1698 = vmatpush2.msra.mxu0 0.0
    %1699 = vmatprep.subr.mxu0 0.0
    %1700 = vmatpush2.msra.mxu0 0.0
    %1701 = vmatprep.subr.mxu0 0.0
    %1702 = vmatpush2.msra.mxu0 0.0
    %1703 = vmatprep.mubr.f32.mxu0 0.0
    %1704 = vmatmul.mubr.f32.gmra.mxu0 %v1637
    %v1705 = vpop.f32.mrf.mxu0
    %v1706 = vadd.f32 %v482, %v1705
    %v1707 = vpop.f32.mrf.mxu0
    %1708 = vdwg.mxu0
    %v1709 = vmul.f32 %v1561, %v1706
    %v1710 = vadd.f32 %v1631, %v1709
    %v1711 = vtanh.pop %v1710
    %v1712 = vsub.f32 1.0, %v1561
    %1714 = vrot.lane.b32.xlu0 %v1711, 32
    %v1715 = vpop.permute.xlu0 %1714
    %v1717 = vmul.f32 %v1712, %v1715
    %v1718 = vmul.f32 %v1561, %v1315
    %v1719 = vadd.f32 %v1717, %v1718
    %1720 = vmatprep.subr.mxu0 0.0
    %1721 = vmatpush1.msra.mxu0 0.0
    %1722 = vmatprep.subr.mxu0 0.0
    %1723 = vmatpush1.msra.mxu0 0.0
    %1724 = vmatprep.subr.mxu0 0.0
    %1725 = vmatpush1.msra.mxu0 0.0
    %1726 = vmatprep.subr.mxu0 0.0
    %1727 = vmatpush1.msra.mxu0 0.0
    %1728 = vmatprep.subr.mxu0 0.0
    %1729 = vmatpush1.msra.mxu0 0.0
    %1730 = vmatprep.subr.mxu0 0.0
    %1731 = vmatpush1.msra.mxu0 0.0
    %1732 = vmatprep.subr.mxu0 0.0
    %1733 = vmatpush1.msra.mxu0 0.0
    %1734 = vmatprep.subr.mxu0 0.0
    %1735 = vmatpush1.msra.mxu0 0.0
    %1736 = vmatprep.subr.mxu0 0.0
    %1737 = vmatpush1.msra.mxu0 0.0
    %1738 = vmatprep.subr.mxu0 0.0
    %1739 = vmatpush1.msra.mxu0 0.0
    %1740 = vmatprep.subr.mxu0 0.0
    %1741 = vmatpush1.msra.mxu0 0.0
    %1742 = vmatprep.subr.mxu0 0.0
    %1743 = vmatpush1.msra.mxu0 0.0
    %1744 = vmatprep.subr.mxu0 0.0
    %1745 = vmatpush1.msra.mxu0 %v487
    %1746 = vmatprep.subr.mxu0 0.0
    %1747 = vmatpush1.msra.mxu0 %v486
    %1748 = vmatprep.subr.mxu0 0.0
    %1749 = vmatpush1.msra.mxu0 %v485
    %1750 = vmatprep.subr.mxu0 0.0
    %1751 = vmatpush1.msra.mxu0 %v484
    %1752 = vmatprep.subr.mxu0 0.0
    %1753 = vmatpush2.msra.mxu0 0.0
    %1754 = vmatprep.subr.mxu0 0.0
    %1755 = vmatpush2.msra.mxu0 0.0
    %1756 = vmatprep.subr.mxu0 0.0
    %1757 = vmatpush2.msra.mxu0 0.0
    %1758 = vmatprep.subr.mxu0 0.0
    %1759 = vmatpush2.msra.mxu0 0.0
    %1760 = vmatprep.subr.mxu0 0.0
    %1761 = vmatpush2.msra.mxu0 0.0
    %1762 = vmatprep.subr.mxu0 0.0
    %1763 = vmatpush2.msra.mxu0 0.0
    %1764 = vmatprep.subr.mxu0 0.0
    %1765 = vmatpush2.msra.mxu0 0.0
    %1766 = vmatprep.subr.mxu0 0.0
    %1767 = vmatpush2.msra.mxu0 0.0
    %1768 = vmatprep.subr.mxu0 0.0
    %1769 = vmatpush2.msra.mxu0 0.0
    %1770 = vmatprep.subr.mxu0 0.0
    %1771 = vmatpush2.msra.mxu0 0.0
    %1772 = vmatprep.subr.mxu0 0.0
    %1773 = vmatpush2.msra.mxu0 0.0
    %1774 = vmatprep.subr.mxu0 0.0
    %1775 = vmatpush2.msra.mxu0 0.0
    %1776 = vmatprep.subr.mxu0 0.0
    %1777 = vmatpush2.msra.mxu0 0.0
    %1778 = vmatprep.subr.mxu0 0.0
    %1779 = vmatpush2.msra.mxu0 0.0
    %1780 = vmatprep.subr.mxu0 0.0
    %1781 = vmatpush2.msra.mxu0 0.0
    %1782 = vmatprep.subr.mxu0 0.0
    %1783 = vmatpush2.msra.mxu0 0.0
    %1784 = vmatprep.mubr.f32.mxu0 0.0
    %1785 = vmatmul.mubr.f32.gmra.mxu0 %v1562
    %v1786 = vpop.f32.mrf.mxu0
    %v1787 = vadd.f32 0.0, %v1786
    %v1788 = vpop.f32.mrf.mxu0
    %1789 = vdwg.mxu0
    %v1790 = vadd.f32 %v293, %v1787
    %v1791 = vxor.u32 %v1790, 2147483648
    %v1792 = vmul.f32 %v1791, 1.442695
    %v1793 = vpow.pop %v1792
    %v1794 = vadd.f32 %v1793, 1.0
    %v1795 = vrcp.pop %v1794
    %v1796 = vmul.f32 1.0, %v1795
    %1797 = vmatprep.subr.mxu0 0.0
    %1798 = vmatpush1.msra.mxu0 0.0
    %1799 = vmatprep.subr.mxu0 0.0
    %1800 = vmatpush1.msra.mxu0 0.0
    %1801 = vmatprep.subr.mxu0 0.0
    %1802 = vmatpush1.msra.mxu0 0.0
    %1803 = vmatprep.subr.mxu0 0.0
    %1804 = vmatpush1.msra.mxu0 0.0
    %1805 = vmatprep.subr.mxu0 0.0
    %1806 = vmatpush1.msra.mxu0 0.0
    %1807 = vmatprep.subr.mxu0 0.0
    %1808 = vmatpush1.msra.mxu0 0.0
    %1809 = vmatprep.subr.mxu0 0.0
    %1810 = vmatpush1.msra.mxu0 0.0
    %1811 = vmatprep.subr.mxu0 0.0
    %1812 = vmatpush1.msra.mxu0 0.0
    %1813 = vmatprep.subr.mxu0 0.0
    %1814 = vmatpush1.msra.mxu0 0.0
    %1815 = vmatprep.subr.mxu0 0.0
    %1816 = vmatpush1.msra.mxu0 0.0
    %1817 = vmatprep.subr.mxu0 0.0
    %1818 = vmatpush1.msra.mxu0 0.0
    %1819 = vmatprep.subr.mxu0 0.0
    %1820 = vmatpush1.msra.mxu0 0.0
    %1821 = vmatprep.subr.mxu0 0.0
    %1822 = vmatpush1.msra.mxu0 %v580
    %1823 = vmatprep.subr.mxu0 0.0
    %1824 = vmatpush1.msra.mxu0 %v579
    %1825 = vmatprep.subr.mxu0 0.0
    %1826 = vmatpush1.msra.mxu0 %v578
    %1827 = vmatprep.subr.mxu0 0.0
    %1828 = vmatpush1.msra.mxu0 %v577
    %1829 = vmatprep.subr.mxu0 0.0
    %1830 = vmatpush2.msra.mxu0 0.0
    %1831 = vmatprep.subr.mxu0 0.0
    %1832 = vmatpush2.msra.mxu0 0.0
    %1833 = vmatprep.subr.mxu0 0.0
    %1834 = vmatpush2.msra.mxu0 0.0
    %1835 = vmatprep.subr.mxu0 0.0
    %1836 = vmatpush2.msra.mxu0 0.0
    %1837 = vmatprep.subr.mxu0 0.0
    %1838 = vmatpush2.msra.mxu0 0.0
    %1839 = vmatprep.subr.mxu0 0.0
    %1840 = vmatpush2.msra.mxu0 0.0
    %1841 = vmatprep.subr.mxu0 0.0
    %1842 = vmatpush2.msra.mxu0 0.0
    %1843 = vmatprep.subr.mxu0 0.0
    %1844 = vmatpush2.msra.mxu0 0.0
    %1845 = vmatprep.subr.mxu0 0.0
    %1846 = vmatpush2.msra.mxu0 0.0
    %1847 = vmatprep.subr.mxu0 0.0
    %1848 = vmatpush2.msra.mxu0 0.0
    %1849 = vmatprep.subr.mxu0 0.0
    %1850 = vmatpush2.msra.mxu0 0.0
    %1851 = vmatprep.subr.mxu0 0.0
    %1852 = vmatpush2.msra.mxu0 0.0
    %1853 = vmatprep.subr.mxu0 0.0
    %1854 = vmatpush2.msra.mxu0 0.0
    %1855 = vmatprep.subr.mxu0 0.0
    %1856 = vmatpush2.msra.mxu0 0.0
    %1857 = vmatprep.subr.mxu0 0.0
    %1858 = vmatpush2.msra.mxu0 0.0
    %1859 = vmatprep.subr.mxu0 0.0
    %1860 = vmatpush2.msra.mxu0 0.0
    %1861 = vmatprep.mubr.f32.mxu0 0.0
    %1862 = vmatmul.mubr.f32.gmra.mxu0 %v1562
    %v1863 = vpop.f32.mrf.mxu0
    %v1864 = vadd.f32 %v461, %v1863
    %v1865 = vpop.f32.mrf.mxu0
    %1866 = vdwg.mxu0
    %v1867 = vmul.f32 %v1796, %v1864
    %1869 = vrot.lane.b32.xlu0 %v1867, 64
    %v1870 = vpop.permute.xlu0 %1869
    %v1872 = vadd.f32 %v293, %v1870
    %v1873 = vtanh.pop %v1872
    %v1874 = vsub.f32 1.0, %v1796
    %1876 = vrot.lane.b32.xlu0 %v1873, 96
    %v1877 = vpop.permute.xlu0 %1876
    %v1879 = vmul.f32 %v1874, %v1877
    %v1880 = vmul.f32 %v1796, %v1477
    %v1881 = vadd.f32 %v1879, %v1880
    %1883 = vrot.lane.b32.xlu0 %v1881, 96
    %v1884 = vpop.permute.xlu0 %1883
    %v1886 = vsel %vm496, %v1884, %v1719
    %v1888 = vsel %vm671, %v1886, 0
    %1890 = vmatprep.subr.mxu0 0.0
    %1891 = vmatpush1.msra.mxu0 0.0
    %1892 = vmatprep.subr.mxu0 0.0
    %1893 = vmatpush1.msra.mxu0 0.0
    %1894 = vmatprep.subr.mxu0 0.0
    %1895 = vmatpush1.msra.mxu0 0.0
    %1896 = vmatprep.subr.mxu0 0.0
    %1897 = vmatpush1.msra.mxu0 0.0
    %1898 = vmatprep.subr.mxu0 0.0
    %1899 = vmatpush1.msra.mxu0 0.0
    %1900 = vmatprep.subr.mxu0 0.0
    %1901 = vmatpush1.msra.mxu0 0.0
    %1902 = vmatprep.subr.mxu0 0.0
    %1903 = vmatpush1.msra.mxu0 0.0
    %1904 = vmatprep.subr.mxu0 0.0
    %1905 = vmatpush1.msra.mxu0 0.0
    %1906 = vmatprep.subr.mxu0 0.0
    %1907 = vmatpush1.msra.mxu0 %v495
    %1908 = vmatprep.subr.mxu0 0.0
    %1909 = vmatpush1.msra.mxu0 %v494
    %1910 = vmatprep.subr.mxu0 0.0
    %1911 = vmatpush1.msra.mxu0 %v493
    %1912 = vmatprep.subr.mxu0 0.0
    %1913 = vmatpush1.msra.mxu0 %v492
    %1914 = vmatprep.subr.mxu0 0.0
    %1915 = vmatpush1.msra.mxu0 %v491
    %1916 = vmatprep.subr.mxu0 0.0
    %1917 = vmatpush1.msra.mxu0 %v490
    %1918 = vmatprep.subr.mxu0 0.0
    %1919 = vmatpush1.msra.mxu0 %v489
    %1920 = vmatprep.subr.mxu0 0.0
    %1921 = vmatpush1.msra.mxu0 %v488
    %1922 = vmatprep.subr.mxu0 0.0
    %1923 = vmatpush2.msra.mxu0 0.0
    %1924 = vmatprep.subr.mxu0 0.0
    %1925 = vmatpush2.msra.mxu0 0.0
    %1926 = vmatprep.subr.mxu0 0.0
    %1927 = vmatpush2.msra.mxu0 0.0
    %1928 = vmatprep.subr.mxu0 0.0
    %1929 = vmatpush2.msra.mxu0 0.0
    %1930 = vmatprep.subr.mxu0 0.0
    %1931 = vmatpush2.msra.mxu0 0.0
    %1932 = vmatprep.subr.mxu0 0.0
    %1933 = vmatpush2.msra.mxu0 0.0
    %1934 = vmatprep.subr.mxu0 0.0
    %1935 = vmatpush2.msra.mxu0 0.0
    %1936 = vmatprep.subr.mxu0 0.0
    %1937 = vmatpush2.msra.mxu0 0.0
    %1938 = vmatprep.subr.mxu0 0.0
    %1939 = vmatpush2.msra.mxu0 0.0
    %1940 = vmatprep.subr.mxu0 0.0
    %1941 = vmatpush2.msra.mxu0 0.0
    %1942 = vmatprep.subr.mxu0 0.0
    %1943 = vmatpush2.msra.mxu0 0.0
    %1944 = vmatprep.subr.mxu0 0.0
    %1945 = vmatpush2.msra.mxu0 0.0
    %1946 = vmatprep.subr.mxu0 0.0
    %1947 = vmatpush2.msra.mxu0 0.0
    %1948 = vmatprep.subr.mxu0 0.0
    %1949 = vmatpush2.msra.mxu0 0.0
    %1950 = vmatprep.subr.mxu0 0.0
    %1951 = vmatpush2.msra.mxu0 0.0
    %1952 = vmatprep.subr.mxu0 0.0
    %1953 = vmatpush2.msra.mxu0 0.0
    %1954 = vmatprep.mubr.f32.mxu0 0.0
    %1955 = vmatmul.mubr.f32.gmra.mxu0 %v1888
    %v1956 = vpop.f32.mrf.mxu0
    %v1957 = vadd.f32 %v468, %v1956
    %v1958 = vpop.f32.mrf.mxu0
    %1959 = vdwg.mxu0
    %v1960 = vxor.u32 %v1957, 2147483648
    %v1961 = vmul.f32 %v1960, 1.442695
    %v1962 = vpow.pop %v1961
    %v1963 = vadd.f32 %v1962, 1.0
    %v1964 = vrcp.pop %v1963
    %v1965 = vmul.f32 1.0, %v1964
    %v1966 = vsel %vm496, %v1884, 0
    %1968 = vmatprep.subr.mxu0 0.0
    %1969 = vmatpush1.msra.mxu0 0.0
    %1970 = vmatprep.subr.mxu0 0.0
    %1971 = vmatpush1.msra.mxu0 0.0
    %1972 = vmatprep.subr.mxu0 0.0
    %1973 = vmatpush1.msra.mxu0 0.0
    %1974 = vmatprep.subr.mxu0 0.0
    %1975 = vmatpush1.msra.mxu0 0.0
    %1976 = vmatprep.subr.mxu0 0.0
    %1977 = vmatpush1.msra.mxu0 0.0
    %1978 = vmatprep.subr.mxu0 0.0
    %1979 = vmatpush1.msra.mxu0 0.0
    %1980 = vmatprep.subr.mxu0 0.0
    %1981 = vmatpush1.msra.mxu0 0.0
    %1982 = vmatprep.subr.mxu0 0.0
    %1983 = vmatpush1.msra.mxu0 0.0
    %1984 = vmatprep.subr.mxu0 0.0
    %1985 = vmatpush1.msra.mxu0 0.0
    %1986 = vmatprep.subr.mxu0 0.0
    %1987 = vmatpush1.msra.mxu0 0.0
    %1988 = vmatprep.subr.mxu0 0.0
    %1989 = vmatpush1.msra.mxu0 0.0
    %1990 = vmatprep.subr.mxu0 0.0
    %1991 = vmatpush1.msra.mxu0 0.0
    %1992 = vmatprep.subr.mxu0 0.0
    %1993 = vmatpush1.msra.mxu0 %v754
    %1994 = vmatprep.subr.mxu0 0.0
    %1995 = vmatpush1.msra.mxu0 %v753
    %1996 = vmatprep.subr.mxu0 0.0
    %1997 = vmatpush1.msra.mxu0 %v752
    %1998 = vmatprep.subr.mxu0 0.0
    %1999 = vmatpush1.msra.mxu0 %v751
    %2000 = vmatprep.subr.mxu0 0.0
    %2001 = vmatpush2.msra.mxu0 0.0
    %2002 = vmatprep.subr.mxu0 0.0
    %2003 = vmatpush2.msra.mxu0 0.0
    %2004 = vmatprep.subr.mxu0 0.0
    %2005 = vmatpush2.msra.mxu0 0.0
    %2006 = vmatprep.subr.mxu0 0.0
    %2007 = vmatpush2.msra.mxu0 0.0
    %2008 = vmatprep.subr.mxu0 0.0
    %2009 = vmatpush2.msra.mxu0 0.0
    %2010 = vmatprep.subr.mxu0 0.0
    %2011 = vmatpush2.msra.mxu0 0.0
    %2012 = vmatprep.subr.mxu0 0.0
    %2013 = vmatpush2.msra.mxu0 0.0
    %2014 = vmatprep.subr.mxu0 0.0
    %2015 = vmatpush2.msra.mxu0 0.0
    %2016 = vmatprep.subr.mxu0 0.0
    %2017 = vmatpush2.msra.mxu0 0.0
    %2018 = vmatprep.subr.mxu0 0.0
    %2019 = vmatpush2.msra.mxu0 0.0
    %2020 = vmatprep.subr.mxu0 0.0
    %2021 = vmatpush2.msra.mxu0 0.0
    %2022 = vmatprep.subr.mxu0 0.0
    %2023 = vmatpush2.msra.mxu0 0.0
    %2024 = vmatprep.subr.mxu0 0.0
    %2025 = vmatpush2.msra.mxu0 0.0
    %2026 = vmatprep.subr.mxu0 0.0
    %2027 = vmatpush2.msra.mxu0 0.0
    %2028 = vmatprep.subr.mxu0 0.0
    %2029 = vmatpush2.msra.mxu0 0.0
    %2030 = vmatprep.subr.mxu0 0.0
    %2031 = vmatpush2.msra.mxu0 0.0
    %2032 = vmatprep.mubr.f32.mxu0 0.0
    %2033 = vmatmul.mubr.f32.gmra.mxu0 %v1966
    %v2034 = vpop.f32.mrf.mxu0
    %v2035 = vadd.f32 %v475, %v2034
    %v2036 = vpop.f32.mrf.mxu0
    %2037 = vdwg.mxu0
    %2039 = vrot.lane.b32.xlu0 %v1719, 96
    %v2040 = vpop.permute.xlu0 %2039
    %v2041 = vsel %vm496, %v2040, 0
    %2043 = vmatprep.subr.mxu0 0.0
    %2044 = vmatpush1.msra.mxu0 0.0
    %2045 = vmatprep.subr.mxu0 0.0
    %2046 = vmatpush1.msra.mxu0 0.0
    %2047 = vmatprep.subr.mxu0 0.0
    %2048 = vmatpush1.msra.mxu0 0.0
    %2049 = vmatprep.subr.mxu0 0.0
    %2050 = vmatpush1.msra.mxu0 0.0
    %2051 = vmatprep.subr.mxu0 0.0
    %2052 = vmatpush1.msra.mxu0 0.0
    %2053 = vmatprep.subr.mxu0 0.0
    %2054 = vmatpush1.msra.mxu0 0.0
    %2055 = vmatprep.subr.mxu0 0.0
    %2056 = vmatpush1.msra.mxu0 0.0
    %2057 = vmatprep.subr.mxu0 0.0
    %2058 = vmatpush1.msra.mxu0 0.0
    %2059 = vmatprep.subr.mxu0 0.0
    %2060 = vmatpush1.msra.mxu0 0.0
    %2061 = vmatprep.subr.mxu0 0.0
    %2062 = vmatpush1.msra.mxu0 0.0
    %2063 = vmatprep.subr.mxu0 0.0
    %2064 = vmatpush1.msra.mxu0 0.0
    %2065 = vmatprep.subr.mxu0 0.0
    %2066 = vmatpush1.msra.mxu0 0.0
    %2067 = vmatprep.subr.mxu0 0.0
    %2068 = vmatpush1.msra.mxu0 %v830
    %2069 = vmatprep.subr.mxu0 0.0
    %2070 = vmatpush1.msra.mxu0 %v829
    %2071 = vmatprep.subr.mxu0 0.0
    %2072 = vmatpush1.msra.mxu0 %v828
    %2073 = vmatprep.subr.mxu0 0.0
    %2074 = vmatpush1.msra.mxu0 %v827
    %2075 = vmatprep.subr.mxu0 0.0
    %2076 = vmatpush2.msra.mxu0 0.0
    %2077 = vmatprep.subr.mxu0 0.0
    %2078 = vmatpush2.msra.mxu0 0.0
    %2079 = vmatprep.subr.mxu0 0.0
    %2080 = vmatpush2.msra.mxu0 0.0
    %2081 = vmatprep.subr.mxu0 0.0
    %2082 = vmatpush2.msra.mxu0 0.0
    %2083 = vmatprep.subr.mxu0 0.0
    %2084 = vmatpush2.msra.mxu0 0.0
    %2085 = vmatprep.subr.mxu0 0.0
    %2086 = vmatpush2.msra.mxu0 0.0
    %2087 = vmatprep.subr.mxu0 0.0
    %2088 = vmatpush2.msra.mxu0 0.0
    %2089 = vmatprep.subr.mxu0 0.0
    %2090 = vmatpush2.msra.mxu0 0.0
    %2091 = vmatprep.subr.mxu0 0.0
    %2092 = vmatpush2.msra.mxu0 0.0
    %2093 = vmatprep.subr.mxu0 0.0
    %2094 = vmatpush2.msra.mxu0 0.0
    %2095 = vmatprep.subr.mxu0 0.0
    %2096 = vmatpush2.msra.mxu0 0.0
    %2097 = vmatprep.subr.mxu0 0.0
    %2098 = vmatpush2.msra.mxu0 0.0
    %2099 = vmatprep.subr.mxu0 0.0
    %2100 = vmatpush2.msra.mxu0 0.0
    %2101 = vmatprep.subr.mxu0 0.0
    %2102 = vmatpush2.msra.mxu0 0.0
    %2103 = vmatprep.subr.mxu0 0.0
    %2104 = vmatpush2.msra.mxu0 0.0
    %2105 = vmatprep.subr.mxu0 0.0
    %2106 = vmatpush2.msra.mxu0 0.0
    %2107 = vmatprep.mubr.f32.mxu0 0.0
    %2108 = vmatmul.mubr.f32.gmra.mxu0 %v2041
    %v2109 = vpop.f32.mrf.mxu0
    %v2110 = vadd.f32 %v482, %v2109
    %v2111 = vpop.f32.mrf.mxu0
    %2112 = vdwg.mxu0
    %v2113 = vmul.f32 %v1965, %v2110
    %v2114 = vadd.f32 %v2035, %v2113
    %v2115 = vtanh.pop %v2114
    %v2116 = vsub.f32 1.0, %v1965
    %2118 = vrot.lane.b32.xlu0 %v2115, 32
    %v2119 = vpop.permute.xlu0 %2118
    %v2121 = vmul.f32 %v2116, %v2119
    %v2122 = vmul.f32 %v1965, %v1719
    %v2123 = vadd.f32 %v2121, %v2122
    %2124 = vmatprep.subr.mxu0 0.0
    %2125 = vmatpush1.msra.mxu0 0.0
    %2126 = vmatprep.subr.mxu0 0.0
    %2127 = vmatpush1.msra.mxu0 0.0
    %2128 = vmatprep.subr.mxu0 0.0
    %2129 = vmatpush1.msra.mxu0 0.0
    %2130 = vmatprep.subr.mxu0 0.0
    %2131 = vmatpush1.msra.mxu0 0.0
    %2132 = vmatprep.subr.mxu0 0.0
    %2133 = vmatpush1.msra.mxu0 0.0
    %2134 = vmatprep.subr.mxu0 0.0
    %2135 = vmatpush1.msra.mxu0 0.0
    %2136 = vmatprep.subr.mxu0 0.0
    %2137 = vmatpush1.msra.mxu0 0.0
    %2138 = vmatprep.subr.mxu0 0.0
    %2139 = vmatpush1.msra.mxu0 0.0
    %2140 = vmatprep.subr.mxu0 0.0
    %2141 = vmatpush1.msra.mxu0 0.0
    %2142 = vmatprep.subr.mxu0 0.0
    %2143 = vmatpush1.msra.mxu0 0.0
    %2144 = vmatprep.subr.mxu0 0.0
    %2145 = vmatpush1.msra.mxu0 0.0
    %2146 = vmatprep.subr.mxu0 0.0
    %2147 = vmatpush1.msra.mxu0 0.0
    %2148 = vmatprep.subr.mxu0 0.0
    %2149 = vmatpush1.msra.mxu0 %v487
    %2150 = vmatprep.subr.mxu0 0.0
    %2151 = vmatpush1.msra.mxu0 %v486
    %2152 = vmatprep.subr.mxu0 0.0
    %2153 = vmatpush1.msra.mxu0 %v485
    %2154 = vmatprep.subr.mxu0 0.0
    %2155 = vmatpush1.msra.mxu0 %v484
    %2156 = vmatprep.subr.mxu0 0.0
    %2157 = vmatpush2.msra.mxu0 0.0
    %2158 = vmatprep.subr.mxu0 0.0
    %2159 = vmatpush2.msra.mxu0 0.0
    %2160 = vmatprep.subr.mxu0 0.0
    %2161 = vmatpush2.msra.mxu0 0.0
    %2162 = vmatprep.subr.mxu0 0.0
    %2163 = vmatpush2.msra.mxu0 0.0
    %2164 = vmatprep.subr.mxu0 0.0
    %2165 = vmatpush2.msra.mxu0 0.0
    %2166 = vmatprep.subr.mxu0 0.0
    %2167 = vmatpush2.msra.mxu0 0.0
    %2168 = vmatprep.subr.mxu0 0.0
    %2169 = vmatpush2.msra.mxu0 0.0
    %2170 = vmatprep.subr.mxu0 0.0
    %2171 = vmatpush2.msra.mxu0 0.0
    %2172 = vmatprep.subr.mxu0 0.0
    %2173 = vmatpush2.msra.mxu0 0.0
    %2174 = vmatprep.subr.mxu0 0.0
    %2175 = vmatpush2.msra.mxu0 0.0
    %2176 = vmatprep.subr.mxu0 0.0
    %2177 = vmatpush2.msra.mxu0 0.0
    %2178 = vmatprep.subr.mxu0 0.0
    %2179 = vmatpush2.msra.mxu0 0.0
    %2180 = vmatprep.subr.mxu0 0.0
    %2181 = vmatpush2.msra.mxu0 0.0
    %2182 = vmatprep.subr.mxu0 0.0
    %2183 = vmatpush2.msra.mxu0 0.0
    %2184 = vmatprep.subr.mxu0 0.0
    %2185 = vmatpush2.msra.mxu0 0.0
    %2186 = vmatprep.subr.mxu0 0.0
    %2187 = vmatpush2.msra.mxu0 0.0
    %2188 = vmatprep.mubr.f32.mxu0 0.0
    %2189 = vmatmul.mubr.f32.gmra.mxu0 %v1966
    %v2190 = vpop.f32.mrf.mxu0
    %v2191 = vadd.f32 0.0, %v2190
    %v2192 = vpop.f32.mrf.mxu0
    %2193 = vdwg.mxu0
    %v2194 = vadd.f32 %v298, %v2191
    %v2195 = vxor.u32 %v2194, 2147483648
    %v2196 = vmul.f32 %v2195, 1.442695
    %v2197 = vpow.pop %v2196
    %v2198 = vadd.f32 %v2197, 1.0
    %v2199 = vrcp.pop %v2198
    %v2200 = vmul.f32 1.0, %v2199
    %2201 = vmatprep.subr.mxu0 0.0
    %2202 = vmatpush1.msra.mxu0 0.0
    %2203 = vmatprep.subr.mxu0 0.0
    %2204 = vmatpush1.msra.mxu0 0.0
    %2205 = vmatprep.subr.mxu0 0.0
    %2206 = vmatpush1.msra.mxu0 0.0
    %2207 = vmatprep.subr.mxu0 0.0
    %2208 = vmatpush1.msra.mxu0 0.0
    %2209 = vmatprep.subr.mxu0 0.0
    %2210 = vmatpush1.msra.mxu0 0.0
    %2211 = vmatprep.subr.mxu0 0.0
    %2212 = vmatpush1.msra.mxu0 0.0
    %2213 = vmatprep.subr.mxu0 0.0
    %2214 = vmatpush1.msra.mxu0 0.0
    %2215 = vmatprep.subr.mxu0 0.0
    %2216 = vmatpush1.msra.mxu0 0.0
    %2217 = vmatprep.subr.mxu0 0.0
    %2218 = vmatpush1.msra.mxu0 0.0
    %2219 = vmatprep.subr.mxu0 0.0
    %2220 = vmatpush1.msra.mxu0 0.0
    %2221 = vmatprep.subr.mxu0 0.0
    %2222 = vmatpush1.msra.mxu0 0.0
    %2223 = vmatprep.subr.mxu0 0.0
    %2224 = vmatpush1.msra.mxu0 0.0
    %2225 = vmatprep.subr.mxu0 0.0
    %2226 = vmatpush1.msra.mxu0 %v580
    %2227 = vmatprep.subr.mxu0 0.0
    %2228 = vmatpush1.msra.mxu0 %v579
    %2229 = vmatprep.subr.mxu0 0.0
    %2230 = vmatpush1.msra.mxu0 %v578
    %2231 = vmatprep.subr.mxu0 0.0
    %2232 = vmatpush1.msra.mxu0 %v577
    %2233 = vmatprep.subr.mxu0 0.0
    %2234 = vmatpush2.msra.mxu0 0.0
    %2235 = vmatprep.subr.mxu0 0.0
    %2236 = vmatpush2.msra.mxu0 0.0
    %2237 = vmatprep.subr.mxu0 0.0
    %2238 = vmatpush2.msra.mxu0 0.0
    %2239 = vmatprep.subr.mxu0 0.0
    %2240 = vmatpush2.msra.mxu0 0.0
    %2241 = vmatprep.subr.mxu0 0.0
    %2242 = vmatpush2.msra.mxu0 0.0
    %2243 = vmatprep.subr.mxu0 0.0
    %2244 = vmatpush2.msra.mxu0 0.0
    %2245 = vmatprep.subr.mxu0 0.0
    %2246 = vmatpush2.msra.mxu0 0.0
    %2247 = vmatprep.subr.mxu0 0.0
    %2248 = vmatpush2.msra.mxu0 0.0
    %2249 = vmatprep.subr.mxu0 0.0
    %2250 = vmatpush2.msra.mxu0 0.0
    %2251 = vmatprep.subr.mxu0 0.0
    %2252 = vmatpush2.msra.mxu0 0.0
    %2253 = vmatprep.subr.mxu0 0.0
    %2254 = vmatpush2.msra.mxu0 0.0
    %2255 = vmatprep.subr.mxu0 0.0
    %2256 = vmatpush2.msra.mxu0 0.0
    %2257 = vmatprep.subr.mxu0 0.0
    %2258 = vmatpush2.msra.mxu0 0.0
    %2259 = vmatprep.subr.mxu0 0.0
    %2260 = vmatpush2.msra.mxu0 0.0
    %2261 = vmatprep.subr.mxu0 0.0
    %2262 = vmatpush2.msra.mxu0 0.0
    %2263 = vmatprep.subr.mxu0 0.0
    %2264 = vmatpush2.msra.mxu0 0.0
    %2265 = vmatprep.mubr.f32.mxu0 0.0
    %2266 = vmatmul.mubr.f32.gmra.mxu0 %v1966
    %v2267 = vpop.f32.mrf.mxu0
    %v2268 = vadd.f32 %v461, %v2267
    %v2269 = vpop.f32.mrf.mxu0
    %2270 = vdwg.mxu0
    %v2271 = vmul.f32 %v2200, %v2268
    %2273 = vrot.lane.b32.xlu0 %v2271, 64
    %v2274 = vpop.permute.xlu0 %2273
    %v2276 = vadd.f32 %v298, %v2274
    %v2277 = vtanh.pop %v2276
    %v2278 = vsub.f32 1.0, %v2200
    %2280 = vrot.lane.b32.xlu0 %v2277, 96
    %v2281 = vpop.permute.xlu0 %2280
    %v2283 = vmul.f32 %v2278, %v2281
    %v2284 = vmul.f32 %v2200, %v1881
    %v2285 = vadd.f32 %v2283, %v2284
    %2287 = vrot.lane.b32.xlu0 %v2285, 96
    %v2288 = vpop.permute.xlu0 %2287
    %v2290 = vsel %vm496, %v2288, %v2123
    %v2292 = vsel %vm671, %v2290, 0
    %2294 = vmatprep.subr.mxu0 0.0
    %2295 = vmatpush1.msra.mxu0 0.0
    %2296 = vmatprep.subr.mxu0 0.0
    %2297 = vmatpush1.msra.mxu0 0.0
    %2298 = vmatprep.subr.mxu0 0.0
    %2299 = vmatpush1.msra.mxu0 0.0
    %2300 = vmatprep.subr.mxu0 0.0
    %2301 = vmatpush1.msra.mxu0 0.0
    %2302 = vmatprep.subr.mxu0 0.0
    %2303 = vmatpush1.msra.mxu0 0.0
    %2304 = vmatprep.subr.mxu0 0.0
    %2305 = vmatpush1.msra.mxu0 0.0
    %2306 = vmatprep.subr.mxu0 0.0
    %2307 = vmatpush1.msra.mxu0 0.0
    %2308 = vmatprep.subr.mxu0 0.0
    %2309 = vmatpush1.msra.mxu0 0.0
    %2310 = vmatprep.subr.mxu0 0.0
    %2311 = vmatpush1.msra.mxu0 %v495
    %2312 = vmatprep.subr.mxu0 0.0
    %2313 = vmatpush1.msra.mxu0 %v494
    %2314 = vmatprep.subr.mxu0 0.0
    %2315 = vmatpush1.msra.mxu0 %v493
    %2316 = vmatprep.subr.mxu0 0.0
    %2317 = vmatpush1.msra.mxu0 %v492
    %2318 = vmatprep.subr.mxu0 0.0
    %2319 = vmatpush1.msra.mxu0 %v491
    %2320 = vmatprep.subr.mxu0 0.0
    %2321 = vmatpush1.msra.mxu0 %v490
    %2322 = vmatprep.subr.mxu0 0.0
    %2323 = vmatpush1.msra.mxu0 %v489
    %2324 = vmatprep.subr.mxu0 0.0
    %2325 = vmatpush1.msra.mxu0 %v488
    %2326 = vmatprep.subr.mxu0 0.0
    %2327 = vmatpush2.msra.mxu0 0.0
    %2328 = vmatprep.subr.mxu0 0.0
    %2329 = vmatpush2.msra.mxu0 0.0
    %2330 = vmatprep.subr.mxu0 0.0
    %2331 = vmatpush2.msra.mxu0 0.0
    %2332 = vmatprep.subr.mxu0 0.0
    %2333 = vmatpush2.msra.mxu0 0.0
    %2334 = vmatprep.subr.mxu0 0.0
    %2335 = vmatpush2.msra.mxu0 0.0
    %2336 = vmatprep.subr.mxu0 0.0
    %2337 = vmatpush2.msra.mxu0 0.0
    %2338 = vmatprep.subr.mxu0 0.0
    %2339 = vmatpush2.msra.mxu0 0.0
    %2340 = vmatprep.subr.mxu0 0.0
    %2341 = vmatpush2.msra.mxu0 0.0
    %2342 = vmatprep.subr.mxu0 0.0
    %2343 = vmatpush2.msra.mxu0 0.0
    %2344 = vmatprep.subr.mxu0 0.0
    %2345 = vmatpush2.msra.mxu0 0.0
    %2346 = vmatprep.subr.mxu0 0.0
    %2347 = vmatpush2.msra.mxu0 0.0
    %2348 = vmatprep.subr.mxu0 0.0
    %2349 = vmatpush2.msra.mxu0 0.0
    %2350 = vmatprep.subr.mxu0 0.0
    %2351 = vmatpush2.msra.mxu0 0.0
    %2352 = vmatprep.subr.mxu0 0.0
    %2353 = vmatpush2.msra.mxu0 0.0
    %2354 = vmatprep.subr.mxu0 0.0
    %2355 = vmatpush2.msra.mxu0 0.0
    %2356 = vmatprep.subr.mxu0 0.0
    %2357 = vmatpush2.msra.mxu0 0.0
    %2358 = vmatprep.mubr.f32.mxu0 0.0
    %2359 = vmatmul.mubr.f32.gmra.mxu0 %v2292
    %v2360 = vpop.f32.mrf.mxu0
    %v2361 = vadd.f32 %v468, %v2360
    %v2362 = vpop.f32.mrf.mxu0
    %2363 = vdwg.mxu0
    %v2364 = vxor.u32 %v2361, 2147483648
    %v2365 = vmul.f32 %v2364, 1.442695
    %v2366 = vpow.pop %v2365
    %v2367 = vadd.f32 %v2366, 1.0
    %v2368 = vrcp.pop %v2367
    %v2369 = vmul.f32 1.0, %v2368
    %v2370 = vsel %vm496, %v2288, 0
    %2372 = vmatprep.subr.mxu0 0.0
    %2373 = vmatpush1.msra.mxu0 0.0
    %2374 = vmatprep.subr.mxu0 0.0
    %2375 = vmatpush1.msra.mxu0 0.0
    %2376 = vmatprep.subr.mxu0 0.0
    %2377 = vmatpush1.msra.mxu0 0.0
    %2378 = vmatprep.subr.mxu0 0.0
    %2379 = vmatpush1.msra.mxu0 0.0
    %2380 = vmatprep.subr.mxu0 0.0
    %2381 = vmatpush1.msra.mxu0 0.0
    %2382 = vmatprep.subr.mxu0 0.0
    %2383 = vmatpush1.msra.mxu0 0.0
    %2384 = vmatprep.subr.mxu0 0.0
    %2385 = vmatpush1.msra.mxu0 0.0
    %2386 = vmatprep.subr.mxu0 0.0
    %2387 = vmatpush1.msra.mxu0 0.0
    %2388 = vmatprep.subr.mxu0 0.0
    %2389 = vmatpush1.msra.mxu0 0.0
    %2390 = vmatprep.subr.mxu0 0.0
    %2391 = vmatpush1.msra.mxu0 0.0
    %2392 = vmatprep.subr.mxu0 0.0
    %2393 = vmatpush1.msra.mxu0 0.0
    %2394 = vmatprep.subr.mxu0 0.0
    %2395 = vmatpush1.msra.mxu0 0.0
    %2396 = vmatprep.subr.mxu0 0.0
    %2397 = vmatpush1.msra.mxu0 %v754
    %2398 = vmatprep.subr.mxu0 0.0
    %2399 = vmatpush1.msra.mxu0 %v753
    %2400 = vmatprep.subr.mxu0 0.0
    %2401 = vmatpush1.msra.mxu0 %v752
    %2402 = vmatprep.subr.mxu0 0.0
    %2403 = vmatpush1.msra.mxu0 %v751
    %2404 = vmatprep.subr.mxu0 0.0
    %2405 = vmatpush2.msra.mxu0 0.0
    %2406 = vmatprep.subr.mxu0 0.0
    %2407 = vmatpush2.msra.mxu0 0.0
    %2408 = vmatprep.subr.mxu0 0.0
    %2409 = vmatpush2.msra.mxu0 0.0
    %2410 = vmatprep.subr.mxu0 0.0
    %2411 = vmatpush2.msra.mxu0 0.0
    %2412 = vmatprep.subr.mxu0 0.0
    %2413 = vmatpush2.msra.mxu0 0.0
    %2414 = vmatprep.subr.mxu0 0.0
    %2415 = vmatpush2.msra.mxu0 0.0
    %2416 = vmatprep.subr.mxu0 0.0
    %2417 = vmatpush2.msra.mxu0 0.0
    %2418 = vmatprep.subr.mxu0 0.0
    %2419 = vmatpush2.msra.mxu0 0.0
    %2420 = vmatprep.subr.mxu0 0.0
    %2421 = vmatpush2.msra.mxu0 0.0
    %2422 = vmatprep.subr.mxu0 0.0
    %2423 = vmatpush2.msra.mxu0 0.0
    %2424 = vmatprep.subr.mxu0 0.0
    %2425 = vmatpush2.msra.mxu0 0.0
    %2426 = vmatprep.subr.mxu0 0.0
    %2427 = vmatpush2.msra.mxu0 0.0
    %2428 = vmatprep.subr.mxu0 0.0
    %2429 = vmatpush2.msra.mxu0 0.0
    %2430 = vmatprep.subr.mxu0 0.0
    %2431 = vmatpush2.msra.mxu0 0.0
    %2432 = vmatprep.subr.mxu0 0.0
    %2433 = vmatpush2.msra.mxu0 0.0
    %2434 = vmatprep.subr.mxu0 0.0
    %2435 = vmatpush2.msra.mxu0 0.0
    %2436 = vmatprep.mubr.f32.mxu0 0.0
    %2437 = vmatmul.mubr.f32.gmra.mxu0 %v2370
    %v2438 = vpop.f32.mrf.mxu0
    %v2439 = vadd.f32 %v475, %v2438
    %v2440 = vpop.f32.mrf.mxu0
    %2441 = vdwg.mxu0
    %2443 = vrot.lane.b32.xlu0 %v2123, 96
    %v2444 = vpop.permute.xlu0 %2443
    %v2445 = vsel %vm496, %v2444, 0
    %2447 = vmatprep.subr.mxu0 0.0
    %2448 = vmatpush1.msra.mxu0 0.0
    %2449 = vmatprep.subr.mxu0 0.0
    %2450 = vmatpush1.msra.mxu0 0.0
    %2451 = vmatprep.subr.mxu0 0.0
    %2452 = vmatpush1.msra.mxu0 0.0
    %2453 = vmatprep.subr.mxu0 0.0
    %2454 = vmatpush1.msra.mxu0 0.0
    %2455 = vmatprep.subr.mxu0 0.0
    %2456 = vmatpush1.msra.mxu0 0.0
    %2457 = vmatprep.subr.mxu0 0.0
    %2458 = vmatpush1.msra.mxu0 0.0
    %2459 = vmatprep.subr.mxu0 0.0
    %2460 = vmatpush1.msra.mxu0 0.0
    %2461 = vmatprep.subr.mxu0 0.0
    %2462 = vmatpush1.msra.mxu0 0.0
    %2463 = vmatprep.subr.mxu0 0.0
    %2464 = vmatpush1.msra.mxu0 0.0
    %2465 = vmatprep.subr.mxu0 0.0
    %2466 = vmatpush1.msra.mxu0 0.0
    %2467 = vmatprep.subr.mxu0 0.0
    %2468 = vmatpush1.msra.mxu0 0.0
    %2469 = vmatprep.subr.mxu0 0.0
    %2470 = vmatpush1.msra.mxu0 0.0
    %2471 = vmatprep.subr.mxu0 0.0
    %2472 = vmatpush1.msra.mxu0 %v830
    %2473 = vmatprep.subr.mxu0 0.0
    %2474 = vmatpush1.msra.mxu0 %v829
    %2475 = vmatprep.subr.mxu0 0.0
    %2476 = vmatpush1.msra.mxu0 %v828
    %2477 = vmatprep.subr.mxu0 0.0
    %2478 = vmatpush1.msra.mxu0 %v827
    %2479 = vmatprep.subr.mxu0 0.0
    %2480 = vmatpush2.msra.mxu0 0.0
    %2481 = vmatprep.subr.mxu0 0.0
    %2482 = vmatpush2.msra.mxu0 0.0
    %2483 = vmatprep.subr.mxu0 0.0
    %2484 = vmatpush2.msra.mxu0 0.0
    %2485 = vmatprep.subr.mxu0 0.0
    %2486 = vmatpush2.msra.mxu0 0.0
    %2487 = vmatprep.subr.mxu0 0.0
    %2488 = vmatpush2.msra.mxu0 0.0
    %2489 = vmatprep.subr.mxu0 0.0
    %2490 = vmatpush2.msra.mxu0 0.0
    %2491 = vmatprep.subr.mxu0 0.0
    %2492 = vmatpush2.msra.mxu0 0.0
    %2493 = vmatprep.subr.mxu0 0.0
    %2494 = vmatpush2.msra.mxu0 0.0
    %2495 = vmatprep.subr.mxu0 0.0
    %2496 = vmatpush2.msra.mxu0 0.0
    %2497 = vmatprep.subr.mxu0 0.0
    %2498 = vmatpush2.msra.mxu0 0.0
    %2499 = vmatprep.subr.mxu0 0.0
    %2500 = vmatpush2.msra.mxu0 0.0
    %2501 = vmatprep.subr.mxu0 0.0
    %2502 = vmatpush2.msra.mxu0 0.0
    %2503 = vmatprep.subr.mxu0 0.0
    %2504 = vmatpush2.msra.mxu0 0.0
    %2505 = vmatprep.subr.mxu0 0.0
    %2506 = vmatpush2.msra.mxu0 0.0
    %2507 = vmatprep.subr.mxu0 0.0
    %2508 = vmatpush2.msra.mxu0 0.0
    %2509 = vmatprep.subr.mxu0 0.0
    %2510 = vmatpush2.msra.mxu0 0.0
    %2511 = vmatprep.mubr.f32.mxu0 0.0
    %2512 = vmatmul.mubr.f32.gmra.mxu0 %v2445
    %v2513 = vpop.f32.mrf.mxu0
    %v2514 = vadd.f32 %v482, %v2513
    %v2515 = vpop.f32.mrf.mxu0
    %2516 = vdwg.mxu0
    %v2517 = vmul.f32 %v2369, %v2514
    %v2518 = vadd.f32 %v2439, %v2517
    %v2519 = vtanh.pop %v2518
    %v2520 = vsub.f32 1.0, %v2369
    %2522 = vrot.lane.b32.xlu0 %v2519, 32
    %v2523 = vpop.permute.xlu0 %2522
    %v2525 = vmul.f32 %v2520, %v2523
    %v2526 = vmul.f32 %v2369, %v2123
    %v2527 = vadd.f32 %v2525, %v2526
    %2528 = vmatprep.subr.mxu0 0.0
    %2529 = vmatpush1.msra.mxu0 0.0
    %2530 = vmatprep.subr.mxu0 0.0
    %2531 = vmatpush1.msra.mxu0 0.0
    %2532 = vmatprep.subr.mxu0 0.0
    %2533 = vmatpush1.msra.mxu0 0.0
    %2534 = vmatprep.subr.mxu0 0.0
    %2535 = vmatpush1.msra.mxu0 0.0
    %2536 = vmatprep.subr.mxu0 0.0
    %2537 = vmatpush1.msra.mxu0 0.0
    %2538 = vmatprep.subr.mxu0 0.0
    %2539 = vmatpush1.msra.mxu0 0.0
    %2540 = vmatprep.subr.mxu0 0.0
    %2541 = vmatpush1.msra.mxu0 0.0
    %2542 = vmatprep.subr.mxu0 0.0
    %2543 = vmatpush1.msra.mxu0 0.0
    %2544 = vmatprep.subr.mxu0 0.0
    %2545 = vmatpush1.msra.mxu0 0.0
    %2546 = vmatprep.subr.mxu0 0.0
    %2547 = vmatpush1.msra.mxu0 0.0
    %2548 = vmatprep.subr.mxu0 0.0
    %2549 = vmatpush1.msra.mxu0 0.0
    %2550 = vmatprep.subr.mxu0 0.0
    %2551 = vmatpush1.msra.mxu0 0.0
    %2552 = vmatprep.subr.mxu0 0.0
    %2553 = vmatpush1.msra.mxu0 %v487
    %2554 = vmatprep.subr.mxu0 0.0
    %2555 = vmatpush1.msra.mxu0 %v486
    %2556 = vmatprep.subr.mxu0 0.0
    %2557 = vmatpush1.msra.mxu0 %v485
    %2558 = vmatprep.subr.mxu0 0.0
    %2559 = vmatpush1.msra.mxu0 %v484
    %2560 = vmatprep.subr.mxu0 0.0
    %2561 = vmatpush2.msra.mxu0 0.0
    %2562 = vmatprep.subr.mxu0 0.0
    %2563 = vmatpush2.msra.mxu0 0.0
    %2564 = vmatprep.subr.mxu0 0.0
    %2565 = vmatpush2.msra.mxu0 0.0
    %2566 = vmatprep.subr.mxu0 0.0
    %2567 = vmatpush2.msra.mxu0 0.0
    %2568 = vmatprep.subr.mxu0 0.0
    %2569 = vmatpush2.msra.mxu0 0.0
    %2570 = vmatprep.subr.mxu0 0.0
    %2571 = vmatpush2.msra.mxu0 0.0
    %2572 = vmatprep.subr.mxu0 0.0
    %2573 = vmatpush2.msra.mxu0 0.0
    %2574 = vmatprep.subr.mxu0 0.0
    %2575 = vmatpush2.msra.mxu0 0.0
    %2576 = vmatprep.subr.mxu0 0.0
    %2577 = vmatpush2.msra.mxu0 0.0
    %2578 = vmatprep.subr.mxu0 0.0
    %2579 = vmatpush2.msra.mxu0 0.0
    %2580 = vmatprep.subr.mxu0 0.0
    %2581 = vmatpush2.msra.mxu0 0.0
    %2582 = vmatprep.subr.mxu0 0.0
    %2583 = vmatpush2.msra.mxu0 0.0
    %2584 = vmatprep.subr.mxu0 0.0
    %2585 = vmatpush2.msra.mxu0 0.0
    %2586 = vmatprep.subr.mxu0 0.0
    %2587 = vmatpush2.msra.mxu0 0.0
    %2588 = vmatprep.subr.mxu0 0.0
    %2589 = vmatpush2.msra.mxu0 0.0
    %2590 = vmatprep.subr.mxu0 0.0
    %2591 = vmatpush2.msra.mxu0 0.0
    %2592 = vmatprep.mubr.f32.mxu0 0.0
    %2593 = vmatmul.mubr.f32.gmra.mxu0 %v2370
    %v2594 = vpop.f32.mrf.mxu0
    %v2595 = vadd.f32 0.0, %v2594
    %v2596 = vpop.f32.mrf.mxu0
    %2597 = vdwg.mxu0
    %v2598 = vadd.f32 %v303, %v2595
    %v2599 = vxor.u32 %v2598, 2147483648
    %v2600 = vmul.f32 %v2599, 1.442695
    %v2601 = vpow.pop %v2600
    %v2602 = vadd.f32 %v2601, 1.0
    %v2603 = vrcp.pop %v2602
    %v2604 = vmul.f32 1.0, %v2603
    %2605 = vmatprep.subr.mxu0 0.0
    %2606 = vmatpush1.msra.mxu0 0.0
    %2607 = vmatprep.subr.mxu0 0.0
    %2608 = vmatpush1.msra.mxu0 0.0
    %2609 = vmatprep.subr.mxu0 0.0
    %2610 = vmatpush1.msra.mxu0 0.0
    %2611 = vmatprep.subr.mxu0 0.0
    %2612 = vmatpush1.msra.mxu0 0.0
    %2613 = vmatprep.subr.mxu0 0.0
    %2614 = vmatpush1.msra.mxu0 0.0
    %2615 = vmatprep.subr.mxu0 0.0
    %2616 = vmatpush1.msra.mxu0 0.0
    %2617 = vmatprep.subr.mxu0 0.0
    %2618 = vmatpush1.msra.mxu0 0.0
    %2619 = vmatprep.subr.mxu0 0.0
    %2620 = vmatpush1.msra.mxu0 0.0
    %2621 = vmatprep.subr.mxu0 0.0
    %2622 = vmatpush1.msra.mxu0 0.0
    %2623 = vmatprep.subr.mxu0 0.0
    %2624 = vmatpush1.msra.mxu0 0.0
    %2625 = vmatprep.subr.mxu0 0.0
    %2626 = vmatpush1.msra.mxu0 0.0
    %2627 = vmatprep.subr.mxu0 0.0
    %2628 = vmatpush1.msra.mxu0 0.0
    %2629 = vmatprep.subr.mxu0 0.0
    %2630 = vmatpush1.msra.mxu0 %v580
    %2631 = vmatprep.subr.mxu0 0.0
    %2632 = vmatpush1.msra.mxu0 %v579
    %2633 = vmatprep.subr.mxu0 0.0
    %2634 = vmatpush1.msra.mxu0 %v578
    %2635 = vmatprep.subr.mxu0 0.0
    %2636 = vmatpush1.msra.mxu0 %v577
    %2637 = vmatprep.subr.mxu0 0.0
    %2638 = vmatpush2.msra.mxu0 0.0
    %2639 = vmatprep.subr.mxu0 0.0
    %2640 = vmatpush2.msra.mxu0 0.0
    %2641 = vmatprep.subr.mxu0 0.0
    %2642 = vmatpush2.msra.mxu0 0.0
    %2643 = vmatprep.subr.mxu0 0.0
    %2644 = vmatpush2.msra.mxu0 0.0
    %2645 = vmatprep.subr.mxu0 0.0
    %2646 = vmatpush2.msra.mxu0 0.0
    %2647 = vmatprep.subr.mxu0 0.0
    %2648 = vmatpush2.msra.mxu0 0.0
    %2649 = vmatprep.subr.mxu0 0.0
    %2650 = vmatpush2.msra.mxu0 0.0
    %2651 = vmatprep.subr.mxu0 0.0
    %2652 = vmatpush2.msra.mxu0 0.0
    %2653 = vmatprep.subr.mxu0 0.0
    %2654 = vmatpush2.msra.mxu0 0.0
    %2655 = vmatprep.subr.mxu0 0.0
    %2656 = vmatpush2.msra.mxu0 0.0
    %2657 = vmatprep.subr.mxu0 0.0
    %2658 = vmatpush2.msra.mxu0 0.0
    %2659 = vmatprep.subr.mxu0 0.0
    %2660 = vmatpush2.msra.mxu0 0.0
    %2661 = vmatprep.subr.mxu0 0.0
    %2662 = vmatpush2.msra.mxu0 0.0
    %2663 = vmatprep.subr.mxu0 0.0
    %2664 = vmatpush2.msra.mxu0 0.0
    %2665 = vmatprep.subr.mxu0 0.0
    %2666 = vmatpush2.msra.mxu0 0.0
    %2667 = vmatprep.subr.mxu0 0.0
    %2668 = vmatpush2.msra.mxu0 0.0
    %2669 = vmatprep.mubr.f32.mxu0 0.0
    %2670 = vmatmul.mubr.f32.gmra.mxu0 %v2370
    %v2671 = vpop.f32.mrf.mxu0
    %v2672 = vadd.f32 %v461, %v2671
    %v2673 = vpop.f32.mrf.mxu0
    %2674 = vdwg.mxu0
    %v2675 = vmul.f32 %v2604, %v2672
    %2677 = vrot.lane.b32.xlu0 %v2675, 64
    %v2678 = vpop.permute.xlu0 %2677
    %v2680 = vadd.f32 %v303, %v2678
    %v2681 = vtanh.pop %v2680
    %v2682 = vsub.f32 1.0, %v2604
    %2684 = vrot.lane.b32.xlu0 %v2681, 96
    %v2685 = vpop.permute.xlu0 %2684
    %v2687 = vmul.f32 %v2682, %v2685
    %v2688 = vmul.f32 %v2604, %v2285
    %v2689 = vadd.f32 %v2687, %v2688
    %2691 = vrot.lane.b32.xlu0 %v2689, 96
    %v2692 = vpop.permute.xlu0 %2691
    %v2694 = vsel %vm496, %v2692, %v2527
    %v2696 = vsel %vm671, %v2694, 0
    %2698 = vmatprep.subr.mxu0 0.0
    %2699 = vmatpush1.msra.mxu0 0.0
    %2700 = vmatprep.subr.mxu0 0.0
    %2701 = vmatpush1.msra.mxu0 0.0
    %2702 = vmatprep.subr.mxu0 0.0
    %2703 = vmatpush1.msra.mxu0 0.0
    %2704 = vmatprep.subr.mxu0 0.0
    %2705 = vmatpush1.msra.mxu0 0.0
    %2706 = vmatprep.subr.mxu0 0.0
    %2707 = vmatpush1.msra.mxu0 0.0
    %2708 = vmatprep.subr.mxu0 0.0
    %2709 = vmatpush1.msra.mxu0 0.0
    %2710 = vmatprep.subr.mxu0 0.0
    %2711 = vmatpush1.msra.mxu0 0.0
    %2712 = vmatprep.subr.mxu0 0.0
    %2713 = vmatpush1.msra.mxu0 0.0
    %2714 = vmatprep.subr.mxu0 0.0
    %2715 = vmatpush1.msra.mxu0 %v495
    %2716 = vmatprep.subr.mxu0 0.0
    %2717 = vmatpush1.msra.mxu0 %v494
    %2718 = vmatprep.subr.mxu0 0.0
    %2719 = vmatpush1.msra.mxu0 %v493
    %2720 = vmatprep.subr.mxu0 0.0
    %2721 = vmatpush1.msra.mxu0 %v492
    %2722 = vmatprep.subr.mxu0 0.0
    %2723 = vmatpush1.msra.mxu0 %v491
    %2724 = vmatprep.subr.mxu0 0.0
    %2725 = vmatpush1.msra.mxu0 %v490
    %2726 = vmatprep.subr.mxu0 0.0
    %2727 = vmatpush1.msra.mxu0 %v489
    %2728 = vmatprep.subr.mxu0 0.0
    %2729 = vmatpush1.msra.mxu0 %v488
    %2730 = vmatprep.subr.mxu0 0.0
    %2731 = vmatpush2.msra.mxu0 0.0
    %2732 = vmatprep.subr.mxu0 0.0
    %2733 = vmatpush2.msra.mxu0 0.0
    %2734 = vmatprep.subr.mxu0 0.0
    %2735 = vmatpush2.msra.mxu0 0.0
    %2736 = vmatprep.subr.mxu0 0.0
    %2737 = vmatpush2.msra.mxu0 0.0
    %2738 = vmatprep.subr.mxu0 0.0
    %2739 = vmatpush2.msra.mxu0 0.0
    %2740 = vmatprep.subr.mxu0 0.0
    %2741 = vmatpush2.msra.mxu0 0.0
    %2742 = vmatprep.subr.mxu0 0.0
    %2743 = vmatpush2.msra.mxu0 0.0
    %2744 = vmatprep.subr.mxu0 0.0
    %2745 = vmatpush2.msra.mxu0 0.0
    %2746 = vmatprep.subr.mxu0 0.0
    %2747 = vmatpush2.msra.mxu0 0.0
    %2748 = vmatprep.subr.mxu0 0.0
    %2749 = vmatpush2.msra.mxu0 0.0
    %2750 = vmatprep.subr.mxu0 0.0
    %2751 = vmatpush2.msra.mxu0 0.0
    %2752 = vmatprep.subr.mxu0 0.0
    %2753 = vmatpush2.msra.mxu0 0.0
    %2754 = vmatprep.subr.mxu0 0.0
    %2755 = vmatpush2.msra.mxu0 0.0
    %2756 = vmatprep.subr.mxu0 0.0
    %2757 = vmatpush2.msra.mxu0 0.0
    %2758 = vmatprep.subr.mxu0 0.0
    %2759 = vmatpush2.msra.mxu0 0.0
    %2760 = vmatprep.subr.mxu0 0.0
    %2761 = vmatpush2.msra.mxu0 0.0
    %2762 = vmatprep.mubr.f32.mxu0 0.0
    %2763 = vmatmul.mubr.f32.gmra.mxu0 %v2696
    %v2764 = vpop.f32.mrf.mxu0
    %v2765 = vadd.f32 %v468, %v2764
    %v2766 = vpop.f32.mrf.mxu0
    %2767 = vdwg.mxu0
    %v2768 = vxor.u32 %v2765, 2147483648
    %v2769 = vmul.f32 %v2768, 1.442695
    %v2770 = vpow.pop %v2769
    %v2771 = vadd.f32 %v2770, 1.0
    %v2772 = vrcp.pop %v2771
    %v2773 = vmul.f32 1.0, %v2772
    %v2774 = vsel %vm496, %v2692, 0
    %2776 = vmatprep.subr.mxu0 0.0
    %2777 = vmatpush1.msra.mxu0 0.0
    %2778 = vmatprep.subr.mxu0 0.0
    %2779 = vmatpush1.msra.mxu0 0.0
    %2780 = vmatprep.subr.mxu0 0.0
    %2781 = vmatpush1.msra.mxu0 0.0
    %2782 = vmatprep.subr.mxu0 0.0
    %2783 = vmatpush1.msra.mxu0 0.0
    %2784 = vmatprep.subr.mxu0 0.0
    %2785 = vmatpush1.msra.mxu0 0.0
    %2786 = vmatprep.subr.mxu0 0.0
    %2787 = vmatpush1.msra.mxu0 0.0
    %2788 = vmatprep.subr.mxu0 0.0
    %2789 = vmatpush1.msra.mxu0 0.0
    %2790 = vmatprep.subr.mxu0 0.0
    %2791 = vmatpush1.msra.mxu0 0.0
    %2792 = vmatprep.subr.mxu0 0.0
    %2793 = vmatpush1.msra.mxu0 0.0
    %2794 = vmatprep.subr.mxu0 0.0
    %2795 = vmatpush1.msra.mxu0 0.0
    %2796 = vmatprep.subr.mxu0 0.0
    %2797 = vmatpush1.msra.mxu0 0.0
    %2798 = vmatprep.subr.mxu0 0.0
    %2799 = vmatpush1.msra.mxu0 0.0
    %2800 = vmatprep.subr.mxu0 0.0
    %2801 = vmatpush1.msra.mxu0 %v754
    %2802 = vmatprep.subr.mxu0 0.0
    %2803 = vmatpush1.msra.mxu0 %v753
    %2804 = vmatprep.subr.mxu0 0.0
    %2805 = vmatpush1.msra.mxu0 %v752
    %2806 = vmatprep.subr.mxu0 0.0
    %2807 = vmatpush1.msra.mxu0 %v751
    %2808 = vmatprep.subr.mxu0 0.0
    %2809 = vmatpush2.msra.mxu0 0.0
    %2810 = vmatprep.subr.mxu0 0.0
    %2811 = vmatpush2.msra.mxu0 0.0
    %2812 = vmatprep.subr.mxu0 0.0
    %2813 = vmatpush2.msra.mxu0 0.0
    %2814 = vmatprep.subr.mxu0 0.0
    %2815 = vmatpush2.msra.mxu0 0.0
    %2816 = vmatprep.subr.mxu0 0.0
    %2817 = vmatpush2.msra.mxu0 0.0
    %2818 = vmatprep.subr.mxu0 0.0
    %2819 = vmatpush2.msra.mxu0 0.0
    %2820 = vmatprep.subr.mxu0 0.0
    %2821 = vmatpush2.msra.mxu0 0.0
    %2822 = vmatprep.subr.mxu0 0.0
    %2823 = vmatpush2.msra.mxu0 0.0
    %2824 = vmatprep.subr.mxu0 0.0
    %2825 = vmatpush2.msra.mxu0 0.0
    %2826 = vmatprep.subr.mxu0 0.0
    %2827 = vmatpush2.msra.mxu0 0.0
    %2828 = vmatprep.subr.mxu0 0.0
    %2829 = vmatpush2.msra.mxu0 0.0
    %2830 = vmatprep.subr.mxu0 0.0
    %2831 = vmatpush2.msra.mxu0 0.0
    %2832 = vmatprep.subr.mxu0 0.0
    %2833 = vmatpush2.msra.mxu0 0.0
    %2834 = vmatprep.subr.mxu0 0.0
    %2835 = vmatpush2.msra.mxu0 0.0
    %2836 = vmatprep.subr.mxu0 0.0
    %2837 = vmatpush2.msra.mxu0 0.0
    %2838 = vmatprep.subr.mxu0 0.0
    %2839 = vmatpush2.msra.mxu0 0.0
    %2840 = vmatprep.mubr.f32.mxu0 0.0
    %2841 = vmatmul.mubr.f32.gmra.mxu0 %v2774
    %v2842 = vpop.f32.mrf.mxu0
    %v2843 = vadd.f32 %v475, %v2842
    %v2844 = vpop.f32.mrf.mxu0
    %2845 = vdwg.mxu0
    %2847 = vrot.lane.b32.xlu0 %v2527, 96
    %v2848 = vpop.permute.xlu0 %2847
    %v2849 = vsel %vm496, %v2848, 0
    %2851 = vmatprep.subr.mxu0 0.0
    %2852 = vmatpush1.msra.mxu0 0.0
    %2853 = vmatprep.subr.mxu0 0.0
    %2854 = vmatpush1.msra.mxu0 0.0
    %2855 = vmatprep.subr.mxu0 0.0
    %2856 = vmatpush1.msra.mxu0 0.0
    %2857 = vmatprep.subr.mxu0 0.0
    %2858 = vmatpush1.msra.mxu0 0.0
    %2859 = vmatprep.subr.mxu0 0.0
    %2860 = vmatpush1.msra.mxu0 0.0
    %2861 = vmatprep.subr.mxu0 0.0
    %2862 = vmatpush1.msra.mxu0 0.0
    %2863 = vmatprep.subr.mxu0 0.0
    %2864 = vmatpush1.msra.mxu0 0.0
    %2865 = vmatprep.subr.mxu0 0.0
    %2866 = vmatpush1.msra.mxu0 0.0
    %2867 = vmatprep.subr.mxu0 0.0
    %2868 = vmatpush1.msra.mxu0 0.0
    %2869 = vmatprep.subr.mxu0 0.0
    %2870 = vmatpush1.msra.mxu0 0.0
    %2871 = vmatprep.subr.mxu0 0.0
    %2872 = vmatpush1.msra.mxu0 0.0
    %2873 = vmatprep.subr.mxu0 0.0
    %2874 = vmatpush1.msra.mxu0 0.0
    %2875 = vmatprep.subr.mxu0 0.0
    %2876 = vmatpush1.msra.mxu0 %v830
    %2877 = vmatprep.subr.mxu0 0.0
    %2878 = vmatpush1.msra.mxu0 %v829
    %2879 = vmatprep.subr.mxu0 0.0
    %2880 = vmatpush1.msra.mxu0 %v828
    %2881 = vmatprep.subr.mxu0 0.0
    %2882 = vmatpush1.msra.mxu0 %v827
    %2883 = vmatprep.subr.mxu0 0.0
    %2884 = vmatpush2.msra.mxu0 0.0
    %2885 = vmatprep.subr.mxu0 0.0
    %2886 = vmatpush2.msra.mxu0 0.0
    %2887 = vmatprep.subr.mxu0 0.0
    %2888 = vmatpush2.msra.mxu0 0.0
    %2889 = vmatprep.subr.mxu0 0.0
    %2890 = vmatpush2.msra.mxu0 0.0
    %2891 = vmatprep.subr.mxu0 0.0
    %2892 = vmatpush2.msra.mxu0 0.0
    %2893 = vmatprep.subr.mxu0 0.0
    %2894 = vmatpush2.msra.mxu0 0.0
    %2895 = vmatprep.subr.mxu0 0.0
    %2896 = vmatpush2.msra.mxu0 0.0
    %2897 = vmatprep.subr.mxu0 0.0
    %2898 = vmatpush2.msra.mxu0 0.0
    %2899 = vmatprep.subr.mxu0 0.0
    %2900 = vmatpush2.msra.mxu0 0.0
    %2901 = vmatprep.subr.mxu0 0.0
    %2902 = vmatpush2.msra.mxu0 0.0
    %2903 = vmatprep.subr.mxu0 0.0
    %2904 = vmatpush2.msra.mxu0 0.0
    %2905 = vmatprep.subr.mxu0 0.0
    %2906 = vmatpush2.msra.mxu0 0.0
    %2907 = vmatprep.subr.mxu0 0.0
    %2908 = vmatpush2.msra.mxu0 0.0
    %2909 = vmatprep.subr.mxu0 0.0
    %2910 = vmatpush2.msra.mxu0 0.0
    %2911 = vmatprep.subr.mxu0 0.0
    %2912 = vmatpush2.msra.mxu0 0.0
    %2913 = vmatprep.subr.mxu0 0.0
    %2914 = vmatpush2.msra.mxu0 0.0
    %2915 = vmatprep.mubr.f32.mxu0 0.0
    %2916 = vmatmul.mubr.f32.gmra.mxu0 %v2849
    %v2917 = vpop.f32.mrf.mxu0
    %v2918 = vadd.f32 %v482, %v2917
    %v2919 = vpop.f32.mrf.mxu0
    %2920 = vdwg.mxu0
    %v2921 = vmul.f32 %v2773, %v2918
    %v2922 = vadd.f32 %v2843, %v2921
    %v2923 = vtanh.pop %v2922
    %v2924 = vsub.f32 1.0, %v2773
    %2926 = vrot.lane.b32.xlu0 %v2923, 32
    %v2927 = vpop.permute.xlu0 %2926
    %v2929 = vmul.f32 %v2924, %v2927
    %v2930 = vmul.f32 %v2773, %v2527
    %v2931 = vadd.f32 %v2929, %v2930
    %2932 = vmatprep.subr.mxu0 0.0
    %2933 = vmatpush1.msra.mxu0 0.0
    %2934 = vmatprep.subr.mxu0 0.0
    %2935 = vmatpush1.msra.mxu0 0.0
    %2936 = vmatprep.subr.mxu0 0.0
    %2937 = vmatpush1.msra.mxu0 0.0
    %2938 = vmatprep.subr.mxu0 0.0
    %2939 = vmatpush1.msra.mxu0 0.0
    %2940 = vmatprep.subr.mxu0 0.0
    %2941 = vmatpush1.msra.mxu0 0.0
    %2942 = vmatprep.subr.mxu0 0.0
    %2943 = vmatpush1.msra.mxu0 0.0
    %2944 = vmatprep.subr.mxu0 0.0
    %2945 = vmatpush1.msra.mxu0 0.0
    %2946 = vmatprep.subr.mxu0 0.0
    %2947 = vmatpush1.msra.mxu0 0.0
    %2948 = vmatprep.subr.mxu0 0.0
    %2949 = vmatpush1.msra.mxu0 0.0
    %2950 = vmatprep.subr.mxu0 0.0
    %2951 = vmatpush1.msra.mxu0 0.0
    %2952 = vmatprep.subr.mxu0 0.0
    %2953 = vmatpush1.msra.mxu0 0.0
    %2954 = vmatprep.subr.mxu0 0.0
    %2955 = vmatpush1.msra.mxu0 0.0
    %2956 = vmatprep.subr.mxu0 0.0
    %2957 = vmatpush1.msra.mxu0 %v487
    %2958 = vmatprep.subr.mxu0 0.0
    %2959 = vmatpush1.msra.mxu0 %v486
    %2960 = vmatprep.subr.mxu0 0.0
    %2961 = vmatpush1.msra.mxu0 %v485
    %2962 = vmatprep.subr.mxu0 0.0
    %2963 = vmatpush1.msra.mxu0 %v484
    %2964 = vmatprep.subr.mxu0 0.0
    %2965 = vmatpush2.msra.mxu0 0.0
    %2966 = vmatprep.subr.mxu0 0.0
    %2967 = vmatpush2.msra.mxu0 0.0
    %2968 = vmatprep.subr.mxu0 0.0
    %2969 = vmatpush2.msra.mxu0 0.0
    %2970 = vmatprep.subr.mxu0 0.0
    %2971 = vmatpush2.msra.mxu0 0.0
    %2972 = vmatprep.subr.mxu0 0.0
    %2973 = vmatpush2.msra.mxu0 0.0
    %2974 = vmatprep.subr.mxu0 0.0
    %2975 = vmatpush2.msra.mxu0 0.0
    %2976 = vmatprep.subr.mxu0 0.0
    %2977 = vmatpush2.msra.mxu0 0.0
    %2978 = vmatprep.subr.mxu0 0.0
    %2979 = vmatpush2.msra.mxu0 0.0
    %2980 = vmatprep.subr.mxu0 0.0
    %2981 = vmatpush2.msra.mxu0 0.0
    %2982 = vmatprep.subr.mxu0 0.0
    %2983 = vmatpush2.msra.mxu0 0.0
    %2984 = vmatprep.subr.mxu0 0.0
    %2985 = vmatpush2.msra.mxu0 0.0
    %2986 = vmatprep.subr.mxu0 0.0
    %2987 = vmatpush2.msra.mxu0 0.0
    %2988 = vmatprep.subr.mxu0 0.0
    %2989 = vmatpush2.msra.mxu0 0.0
    %2990 = vmatprep.subr.mxu0 0.0
    %2991 = vmatpush2.msra.mxu0 0.0
    %2992 = vmatprep.subr.mxu0 0.0
    %2993 = vmatpush2.msra.mxu0 0.0
    %2994 = vmatprep.subr.mxu0 0.0
    %2995 = vmatpush2.msra.mxu0 0.0
    %2996 = vmatprep.mubr.f32.mxu0 0.0
    %2997 = vmatmul.mubr.f32.gmra.mxu0 %v2774
    %v2998 = vpop.f32.mrf.mxu0
    %v2999 = vadd.f32 0.0, %v2998
    %v3000 = vpop.f32.mrf.mxu0
    %3001 = vdwg.mxu0
    %v3002 = vadd.f32 %v308, %v2999
    %v3003 = vxor.u32 %v3002, 2147483648
    %v3004 = vmul.f32 %v3003, 1.442695
    %v3005 = vpow.pop %v3004
    %v3006 = vadd.f32 %v3005, 1.0
    %v3007 = vrcp.pop %v3006
    %v3008 = vmul.f32 1.0, %v3007
    %3009 = vmatprep.subr.mxu0 0.0
    %3010 = vmatpush1.msra.mxu0 0.0
    %3011 = vmatprep.subr.mxu0 0.0
    %3012 = vmatpush1.msra.mxu0 0.0
    %3013 = vmatprep.subr.mxu0 0.0
    %3014 = vmatpush1.msra.mxu0 0.0
    %3015 = vmatprep.subr.mxu0 0.0
    %3016 = vmatpush1.msra.mxu0 0.0
    %3017 = vmatprep.subr.mxu0 0.0
    %3018 = vmatpush1.msra.mxu0 0.0
    %3019 = vmatprep.subr.mxu0 0.0
    %3020 = vmatpush1.msra.mxu0 0.0
    %3021 = vmatprep.subr.mxu0 0.0
    %3022 = vmatpush1.msra.mxu0 0.0
    %3023 = vmatprep.subr.mxu0 0.0
    %3024 = vmatpush1.msra.mxu0 0.0
    %3025 = vmatprep.subr.mxu0 0.0
    %3026 = vmatpush1.msra.mxu0 0.0
    %3027 = vmatprep.subr.mxu0 0.0
    %3028 = vmatpush1.msra.mxu0 0.0
    %3029 = vmatprep.subr.mxu0 0.0
    %3030 = vmatpush1.msra.mxu0 0.0
    %3031 = vmatprep.subr.mxu0 0.0
    %3032 = vmatpush1.msra.mxu0 0.0
    %3033 = vmatprep.subr.mxu0 0.0
    %3034 = vmatpush1.msra.mxu0 %v580
    %3035 = vmatprep.subr.mxu0 0.0
    %3036 = vmatpush1.msra.mxu0 %v579
    %3037 = vmatprep.subr.mxu0 0.0
    %3038 = vmatpush1.msra.mxu0 %v578
    %3039 = vmatprep.subr.mxu0 0.0
    %3040 = vmatpush1.msra.mxu0 %v577
    %3041 = vmatprep.subr.mxu0 0.0
    %3042 = vmatpush2.msra.mxu0 0.0
    %3043 = vmatprep.subr.mxu0 0.0
    %3044 = vmatpush2.msra.mxu0 0.0
    %3045 = vmatprep.subr.mxu0 0.0
    %3046 = vmatpush2.msra.mxu0 0.0
    %3047 = vmatprep.subr.mxu0 0.0
    %3048 = vmatpush2.msra.mxu0 0.0
    %3049 = vmatprep.subr.mxu0 0.0
    %3050 = vmatpush2.msra.mxu0 0.0
    %3051 = vmatprep.subr.mxu0 0.0
    %3052 = vmatpush2.msra.mxu0 0.0
    %3053 = vmatprep.subr.mxu0 0.0
    %3054 = vmatpush2.msra.mxu0 0.0
    %3055 = vmatprep.subr.mxu0 0.0
    %3056 = vmatpush2.msra.mxu0 0.0
    %3057 = vmatprep.subr.mxu0 0.0
    %3058 = vmatpush2.msra.mxu0 0.0
    %3059 = vmatprep.subr.mxu0 0.0
    %3060 = vmatpush2.msra.mxu0 0.0
    %3061 = vmatprep.subr.mxu0 0.0
    %3062 = vmatpush2.msra.mxu0 0.0
    %3063 = vmatprep.subr.mxu0 0.0
    %3064 = vmatpush2.msra.mxu0 0.0
    %3065 = vmatprep.subr.mxu0 0.0
    %3066 = vmatpush2.msra.mxu0 0.0
    %3067 = vmatprep.subr.mxu0 0.0
    %3068 = vmatpush2.msra.mxu0 0.0
    %3069 = vmatprep.subr.mxu0 0.0
    %3070 = vmatpush2.msra.mxu0 0.0
    %3071 = vmatprep.subr.mxu0 0.0
    %3072 = vmatpush2.msra.mxu0 0.0
    %3073 = vmatprep.mubr.f32.mxu0 0.0
    %3074 = vmatmul.mubr.f32.gmra.mxu0 %v2774
    %v3075 = vpop.f32.mrf.mxu0
    %v3076 = vadd.f32 %v461, %v3075
    %v3077 = vpop.f32.mrf.mxu0
    %3078 = vdwg.mxu0
    %v3079 = vmul.f32 %v3008, %v3076
    %3081 = vrot.lane.b32.xlu0 %v3079, 64
    %v3082 = vpop.permute.xlu0 %3081
    %v3084 = vadd.f32 %v308, %v3082
    %v3085 = vtanh.pop %v3084
    %v3086 = vsub.f32 1.0, %v3008
    %3088 = vrot.lane.b32.xlu0 %v3085, 96
    %v3089 = vpop.permute.xlu0 %3088
    %v3091 = vmul.f32 %v3086, %v3089
    %v3092 = vmul.f32 %v3008, %v2689
    %v3093 = vadd.f32 %v3091, %v3092
    %3095 = vrot.lane.b32.xlu0 %v3093, 96
    %v3096 = vpop.permute.xlu0 %3095
    %v3098 = vsel %vm496, %v3096, %v2931
    %v3100 = vsel %vm671, %v3098, 0
    %3102 = vmatprep.subr.mxu0 0.0
    %3103 = vmatpush1.msra.mxu0 0.0
    %3104 = vmatprep.subr.mxu0 0.0
    %3105 = vmatpush1.msra.mxu0 0.0
    %3106 = vmatprep.subr.mxu0 0.0
    %3107 = vmatpush1.msra.mxu0 0.0
    %3108 = vmatprep.subr.mxu0 0.0
    %3109 = vmatpush1.msra.mxu0 0.0
    %3110 = vmatprep.subr.mxu0 0.0
    %3111 = vmatpush1.msra.mxu0 0.0
    %3112 = vmatprep.subr.mxu0 0.0
    %3113 = vmatpush1.msra.mxu0 0.0
    %3114 = vmatprep.subr.mxu0 0.0
    %3115 = vmatpush1.msra.mxu0 0.0
    %3116 = vmatprep.subr.mxu0 0.0
    %3117 = vmatpush1.msra.mxu0 0.0
    %3118 = vmatprep.subr.mxu0 0.0
    %3119 = vmatpush1.msra.mxu0 %v495
    %3120 = vmatprep.subr.mxu0 0.0
    %3121 = vmatpush1.msra.mxu0 %v494
    %3122 = vmatprep.subr.mxu0 0.0
    %3123 = vmatpush1.msra.mxu0 %v493
    %3124 = vmatprep.subr.mxu0 0.0
    %3125 = vmatpush1.msra.mxu0 %v492
    %3126 = vmatprep.subr.mxu0 0.0
    %3127 = vmatpush1.msra.mxu0 %v491
    %3128 = vmatprep.subr.mxu0 0.0
    %3129 = vmatpush1.msra.mxu0 %v490
    %3130 = vmatprep.subr.mxu0 0.0
    %3131 = vmatpush1.msra.mxu0 %v489
    %3132 = vmatprep.subr.mxu0 0.0
    %3133 = vmatpush1.msra.mxu0 %v488
    %3134 = vmatprep.subr.mxu0 0.0
    %3135 = vmatpush2.msra.mxu0 0.0
    %3136 = vmatprep.subr.mxu0 0.0
    %3137 = vmatpush2.msra.mxu0 0.0
    %3138 = vmatprep.subr.mxu0 0.0
    %3139 = vmatpush2.msra.mxu0 0.0
    %3140 = vmatprep.subr.mxu0 0.0
    %3141 = vmatpush2.msra.mxu0 0.0
    %3142 = vmatprep.subr.mxu0 0.0
    %3143 = vmatpush2.msra.mxu0 0.0
    %3144 = vmatprep.subr.mxu0 0.0
    %3145 = vmatpush2.msra.mxu0 0.0
    %3146 = vmatprep.subr.mxu0 0.0
    %3147 = vmatpush2.msra.mxu0 0.0
    %3148 = vmatprep.subr.mxu0 0.0
    %3149 = vmatpush2.msra.mxu0 0.0
    %3150 = vmatprep.subr.mxu0 0.0
    %3151 = vmatpush2.msra.mxu0 0.0
    %3152 = vmatprep.subr.mxu0 0.0
    %3153 = vmatpush2.msra.mxu0 0.0
    %3154 = vmatprep.subr.mxu0 0.0
    %3155 = vmatpush2.msra.mxu0 0.0
    %3156 = vmatprep.subr.mxu0 0.0
    %3157 = vmatpush2.msra.mxu0 0.0
    %3158 = vmatprep.subr.mxu0 0.0
    %3159 = vmatpush2.msra.mxu0 0.0
    %3160 = vmatprep.subr.mxu0 0.0
    %3161 = vmatpush2.msra.mxu0 0.0
    %3162 = vmatprep.subr.mxu0 0.0
    %3163 = vmatpush2.msra.mxu0 0.0
    %3164 = vmatprep.subr.mxu0 0.0
    %3165 = vmatpush2.msra.mxu0 0.0
    %3166 = vmatprep.mubr.f32.mxu0 0.0
    %3167 = vmatmul.mubr.f32.gmra.mxu0 %v3100
    %v3168 = vpop.f32.mrf.mxu0
    %v3169 = vadd.f32 %v468, %v3168
    %v3170 = vpop.f32.mrf.mxu0
    %3171 = vdwg.mxu0
    %v3172 = vxor.u32 %v3169, 2147483648
    %v3173 = vmul.f32 %v3172, 1.442695
    %v3174 = vpow.pop %v3173
    %v3175 = vadd.f32 %v3174, 1.0
    %v3176 = vrcp.pop %v3175
    %v3177 = vmul.f32 1.0, %v3176
    %v3178 = vsel %vm496, %v3096, 0
    %3180 = vmatprep.subr.mxu0 0.0
    %3181 = vmatpush1.msra.mxu0 0.0
    %3182 = vmatprep.subr.mxu0 0.0
    %3183 = vmatpush1.msra.mxu0 0.0
    %3184 = vmatprep.subr.mxu0 0.0
    %3185 = vmatpush1.msra.mxu0 0.0
    %3186 = vmatprep.subr.mxu0 0.0
    %3187 = vmatpush1.msra.mxu0 0.0
    %3188 = vmatprep.subr.mxu0 0.0
    %3189 = vmatpush1.msra.mxu0 0.0
    %3190 = vmatprep.subr.mxu0 0.0
    %3191 = vmatpush1.msra.mxu0 0.0
    %3192 = vmatprep.subr.mxu0 0.0
    %3193 = vmatpush1.msra.mxu0 0.0
    %3194 = vmatprep.subr.mxu0 0.0
    %3195 = vmatpush1.msra.mxu0 0.0
    %3196 = vmatprep.subr.mxu0 0.0
    %3197 = vmatpush1.msra.mxu0 0.0
    %3198 = vmatprep.subr.mxu0 0.0
    %3199 = vmatpush1.msra.mxu0 0.0
    %3200 = vmatprep.subr.mxu0 0.0
    %3201 = vmatpush1.msra.mxu0 0.0
    %3202 = vmatprep.subr.mxu0 0.0
    %3203 = vmatpush1.msra.mxu0 0.0
    %3204 = vmatprep.subr.mxu0 0.0
    %3205 = vmatpush1.msra.mxu0 %v754
    %3206 = vmatprep.subr.mxu0 0.0
    %3207 = vmatpush1.msra.mxu0 %v753
    %3208 = vmatprep.subr.mxu0 0.0
    %3209 = vmatpush1.msra.mxu0 %v752
    %3210 = vmatprep.subr.mxu0 0.0
    %3211 = vmatpush1.msra.mxu0 %v751
    %3212 = vmatprep.subr.mxu0 0.0
    %3213 = vmatpush2.msra.mxu0 0.0
    %3214 = vmatprep.subr.mxu0 0.0
    %3215 = vmatpush2.msra.mxu0 0.0
    %3216 = vmatprep.subr.mxu0 0.0
    %3217 = vmatpush2.msra.mxu0 0.0
    %3218 = vmatprep.subr.mxu0 0.0
    %3219 = vmatpush2.msra.mxu0 0.0
    %3220 = vmatprep.subr.mxu0 0.0
    %3221 = vmatpush2.msra.mxu0 0.0
    %3222 = vmatprep.subr.mxu0 0.0
    %3223 = vmatpush2.msra.mxu0 0.0
    %3224 = vmatprep.subr.mxu0 0.0
    %3225 = vmatpush2.msra.mxu0 0.0
    %3226 = vmatprep.subr.mxu0 0.0
    %3227 = vmatpush2.msra.mxu0 0.0
    %3228 = vmatprep.subr.mxu0 0.0
    %3229 = vmatpush2.msra.mxu0 0.0
    %3230 = vmatprep.subr.mxu0 0.0
    %3231 = vmatpush2.msra.mxu0 0.0
    %3232 = vmatprep.subr.mxu0 0.0
    %3233 = vmatpush2.msra.mxu0 0.0
    %3234 = vmatprep.subr.mxu0 0.0
    %3235 = vmatpush2.msra.mxu0 0.0
    %3236 = vmatprep.subr.mxu0 0.0
    %3237 = vmatpush2.msra.mxu0 0.0
    %3238 = vmatprep.subr.mxu0 0.0
    %3239 = vmatpush2.msra.mxu0 0.0
    %3240 = vmatprep.subr.mxu0 0.0
    %3241 = vmatpush2.msra.mxu0 0.0
    %3242 = vmatprep.subr.mxu0 0.0
    %3243 = vmatpush2.msra.mxu0 0.0
    %3244 = vmatprep.mubr.f32.mxu0 0.0
    %3245 = vmatmul.mubr.f32.gmra.mxu0 %v3178
    %v3246 = vpop.f32.mrf.mxu0
    %v3247 = vadd.f32 %v475, %v3246
    %v3248 = vpop.f32.mrf.mxu0
    %3249 = vdwg.mxu0
    %3251 = vrot.lane.b32.xlu0 %v2931, 96
    %v3252 = vpop.permute.xlu0 %3251
    %v3253 = vsel %vm496, %v3252, 0
    %3255 = vmatprep.subr.mxu0 0.0
    %3256 = vmatpush1.msra.mxu0 0.0
    %3257 = vmatprep.subr.mxu0 0.0
    %3258 = vmatpush1.msra.mxu0 0.0
    %3259 = vmatprep.subr.mxu0 0.0
    %3260 = vmatpush1.msra.mxu0 0.0
    %3261 = vmatprep.subr.mxu0 0.0
    %3262 = vmatpush1.msra.mxu0 0.0
    %3263 = vmatprep.subr.mxu0 0.0
    %3264 = vmatpush1.msra.mxu0 0.0
    %3265 = vmatprep.subr.mxu0 0.0
    %3266 = vmatpush1.msra.mxu0 0.0
    %3267 = vmatprep.subr.mxu0 0.0
    %3268 = vmatpush1.msra.mxu0 0.0
    %3269 = vmatprep.subr.mxu0 0.0
    %3270 = vmatpush1.msra.mxu0 0.0
    %3271 = vmatprep.subr.mxu0 0.0
    %3272 = vmatpush1.msra.mxu0 0.0
    %3273 = vmatprep.subr.mxu0 0.0
    %3274 = vmatpush1.msra.mxu0 0.0
    %3275 = vmatprep.subr.mxu0 0.0
    %3276 = vmatpush1.msra.mxu0 0.0
    %3277 = vmatprep.subr.mxu0 0.0
    %3278 = vmatpush1.msra.mxu0 0.0
    %3279 = vmatprep.subr.mxu0 0.0
    %3280 = vmatpush1.msra.mxu0 %v830
    %3281 = vmatprep.subr.mxu0 0.0
    %3282 = vmatpush1.msra.mxu0 %v829
    %3283 = vmatprep.subr.mxu0 0.0
    %3284 = vmatpush1.msra.mxu0 %v828
    %3285 = vmatprep.subr.mxu0 0.0
    %3286 = vmatpush1.msra.mxu0 %v827
    %3287 = vmatprep.subr.mxu0 0.0
    %3288 = vmatpush2.msra.mxu0 0.0
    %3289 = vmatprep.subr.mxu0 0.0
    %3290 = vmatpush2.msra.mxu0 0.0
    %3291 = vmatprep.subr.mxu0 0.0
    %3292 = vmatpush2.msra.mxu0 0.0
    %3293 = vmatprep.subr.mxu0 0.0
    %3294 = vmatpush2.msra.mxu0 0.0
    %3295 = vmatprep.subr.mxu0 0.0
    %3296 = vmatpush2.msra.mxu0 0.0
    %3297 = vmatprep.subr.mxu0 0.0
    %3298 = vmatpush2.msra.mxu0 0.0
    %3299 = vmatprep.subr.mxu0 0.0
    %3300 = vmatpush2.msra.mxu0 0.0
    %3301 = vmatprep.subr.mxu0 0.0
    %3302 = vmatpush2.msra.mxu0 0.0
    %3303 = vmatprep.subr.mxu0 0.0
    %3304 = vmatpush2.msra.mxu0 0.0
    %3305 = vmatprep.subr.mxu0 0.0
    %3306 = vmatpush2.msra.mxu0 0.0
    %3307 = vmatprep.subr.mxu0 0.0
    %3308 = vmatpush2.msra.mxu0 0.0
    %3309 = vmatprep.subr.mxu0 0.0
    %3310 = vmatpush2.msra.mxu0 0.0
    %3311 = vmatprep.subr.mxu0 0.0
    %3312 = vmatpush2.msra.mxu0 0.0
    %3313 = vmatprep.subr.mxu0 0.0
    %3314 = vmatpush2.msra.mxu0 0.0
    %3315 = vmatprep.subr.mxu0 0.0
    %3316 = vmatpush2.msra.mxu0 0.0
    %3317 = vmatprep.subr.mxu0 0.0
    %3318 = vmatpush2.msra.mxu0 0.0
    %3319 = vmatprep.mubr.f32.mxu0 0.0
    %3320 = vmatmul.mubr.f32.gmra.mxu0 %v3253
    %v3321 = vpop.f32.mrf.mxu0
    %v3322 = vadd.f32 %v482, %v3321
    %v3323 = vpop.f32.mrf.mxu0
    %3324 = vdwg.mxu0
    %v3325 = vmul.f32 %v3177, %v3322
    %v3326 = vadd.f32 %v3247, %v3325
    %v3327 = vtanh.pop %v3326
    %v3328 = vsub.f32 1.0, %v3177
    %3330 = vrot.lane.b32.xlu0 %v3327, 32
    %v3331 = vpop.permute.xlu0 %3330
    %v3333 = vmul.f32 %v3328, %v3331
    %v3334 = vmul.f32 %v3177, %v2931
    %v3335 = vadd.f32 %v3333, %v3334
    %3336 = vmatprep.subr.mxu0 0.0
    %3337 = vmatpush1.msra.mxu0 0.0
    %3338 = vmatprep.subr.mxu0 0.0
    %3339 = vmatpush1.msra.mxu0 0.0
    %3340 = vmatprep.subr.mxu0 0.0
    %3341 = vmatpush1.msra.mxu0 0.0
    %3342 = vmatprep.subr.mxu0 0.0
    %3343 = vmatpush1.msra.mxu0 0.0
    %3344 = vmatprep.subr.mxu0 0.0
    %3345 = vmatpush1.msra.mxu0 0.0
    %3346 = vmatprep.subr.mxu0 0.0
    %3347 = vmatpush1.msra.mxu0 0.0
    %3348 = vmatprep.subr.mxu0 0.0
    %3349 = vmatpush1.msra.mxu0 0.0
    %3350 = vmatprep.subr.mxu0 0.0
    %3351 = vmatpush1.msra.mxu0 0.0
    %3352 = vmatprep.subr.mxu0 0.0
    %3353 = vmatpush1.msra.mxu0 0.0
    %3354 = vmatprep.subr.mxu0 0.0
    %3355 = vmatpush1.msra.mxu0 0.0
    %3356 = vmatprep.subr.mxu0 0.0
    %3357 = vmatpush1.msra.mxu0 0.0
    %3358 = vmatprep.subr.mxu0 0.0
    %3359 = vmatpush1.msra.mxu0 0.0
    %3360 = vmatprep.subr.mxu0 0.0
    %3361 = vmatpush1.msra.mxu0 %v487
    %3362 = vmatprep.subr.mxu0 0.0
    %3363 = vmatpush1.msra.mxu0 %v486
    %3364 = vmatprep.subr.mxu0 0.0
    %3365 = vmatpush1.msra.mxu0 %v485
    %3366 = vmatprep.subr.mxu0 0.0
    %3367 = vmatpush1.msra.mxu0 %v484
    %3368 = vmatprep.subr.mxu0 0.0
    %3369 = vmatpush2.msra.mxu0 0.0
    %3370 = vmatprep.subr.mxu0 0.0
    %3371 = vmatpush2.msra.mxu0 0.0
    %3372 = vmatprep.subr.mxu0 0.0
    %3373 = vmatpush2.msra.mxu0 0.0
    %3374 = vmatprep.subr.mxu0 0.0
    %3375 = vmatpush2.msra.mxu0 0.0
    %3376 = vmatprep.subr.mxu0 0.0
    %3377 = vmatpush2.msra.mxu0 0.0
    %3378 = vmatprep.subr.mxu0 0.0
    %3379 = vmatpush2.msra.mxu0 0.0
    %3380 = vmatprep.subr.mxu0 0.0
    %3381 = vmatpush2.msra.mxu0 0.0
    %3382 = vmatprep.subr.mxu0 0.0
    %3383 = vmatpush2.msra.mxu0 0.0
    %3384 = vmatprep.subr.mxu0 0.0
    %3385 = vmatpush2.msra.mxu0 0.0
    %3386 = vmatprep.subr.mxu0 0.0
    %3387 = vmatpush2.msra.mxu0 0.0
    %3388 = vmatprep.subr.mxu0 0.0
    %3389 = vmatpush2.msra.mxu0 0.0
    %3390 = vmatprep.subr.mxu0 0.0
    %3391 = vmatpush2.msra.mxu0 0.0
    %3392 = vmatprep.subr.mxu0 0.0
    %3393 = vmatpush2.msra.mxu0 0.0
    %3394 = vmatprep.subr.mxu0 0.0
    %3395 = vmatpush2.msra.mxu0 0.0
    %3396 = vmatprep.subr.mxu0 0.0
    %3397 = vmatpush2.msra.mxu0 0.0
    %3398 = vmatprep.subr.mxu0 0.0
    %3399 = vmatpush2.msra.mxu0 0.0
    %3400 = vmatprep.mubr.f32.mxu0 0.0
    %3401 = vmatmul.mubr.f32.gmra.mxu0 %v3178
    %v3402 = vpop.f32.mrf.mxu0
    %v3403 = vadd.f32 0.0, %v3402
    %v3404 = vpop.f32.mrf.mxu0
    %3405 = vdwg.mxu0
    %v3406 = vadd.f32 %v313, %v3403
    %v3407 = vxor.u32 %v3406, 2147483648
    %v3408 = vmul.f32 %v3407, 1.442695
    %v3409 = vpow.pop %v3408
    %v3410 = vadd.f32 %v3409, 1.0
    %v3411 = vrcp.pop %v3410
    %v3412 = vmul.f32 1.0, %v3411
    %3413 = vmatprep.subr.mxu0 0.0
    %3414 = vmatpush1.msra.mxu0 0.0
    %3415 = vmatprep.subr.mxu0 0.0
    %3416 = vmatpush1.msra.mxu0 0.0
    %3417 = vmatprep.subr.mxu0 0.0
    %3418 = vmatpush1.msra.mxu0 0.0
    %3419 = vmatprep.subr.mxu0 0.0
    %3420 = vmatpush1.msra.mxu0 0.0
    %3421 = vmatprep.subr.mxu0 0.0
    %3422 = vmatpush1.msra.mxu0 0.0
    %3423 = vmatprep.subr.mxu0 0.0
    %3424 = vmatpush1.msra.mxu0 0.0
    %3425 = vmatprep.subr.mxu0 0.0
    %3426 = vmatpush1.msra.mxu0 0.0
    %3427 = vmatprep.subr.mxu0 0.0
    %3428 = vmatpush1.msra.mxu0 0.0
    %3429 = vmatprep.subr.mxu0 0.0
    %3430 = vmatpush1.msra.mxu0 0.0
    %3431 = vmatprep.subr.mxu0 0.0
    %3432 = vmatpush1.msra.mxu0 0.0
    %3433 = vmatprep.subr.mxu0 0.0
    %3434 = vmatpush1.msra.mxu0 0.0
    %3435 = vmatprep.subr.mxu0 0.0
    %3436 = vmatpush1.msra.mxu0 0.0
    %3437 = vmatprep.subr.mxu0 0.0
    %3438 = vmatpush1.msra.mxu0 %v580
    %3439 = vmatprep.subr.mxu0 0.0
    %3440 = vmatpush1.msra.mxu0 %v579
    %3441 = vmatprep.subr.mxu0 0.0
    %3442 = vmatpush1.msra.mxu0 %v578
    %3443 = vmatprep.subr.mxu0 0.0
    %3444 = vmatpush1.msra.mxu0 %v577
    %3445 = vmatprep.subr.mxu0 0.0
    %3446 = vmatpush2.msra.mxu0 0.0
    %3447 = vmatprep.subr.mxu0 0.0
    %3448 = vmatpush2.msra.mxu0 0.0
    %3449 = vmatprep.subr.mxu0 0.0
    %3450 = vmatpush2.msra.mxu0 0.0
    %3451 = vmatprep.subr.mxu0 0.0
    %3452 = vmatpush2.msra.mxu0 0.0
    %3453 = vmatprep.subr.mxu0 0.0
    %3454 = vmatpush2.msra.mxu0 0.0
    %3455 = vmatprep.subr.mxu0 0.0
    %3456 = vmatpush2.msra.mxu0 0.0
    %3457 = vmatprep.subr.mxu0 0.0
    %3458 = vmatpush2.msra.mxu0 0.0
    %3459 = vmatprep.subr.mxu0 0.0
    %3460 = vmatpush2.msra.mxu0 0.0
    %3461 = vmatprep.subr.mxu0 0.0
    %3462 = vmatpush2.msra.mxu0 0.0
    %3463 = vmatprep.subr.mxu0 0.0
    %3464 = vmatpush2.msra.mxu0 0.0
    %3465 = vmatprep.subr.mxu0 0.0
    %3466 = vmatpush2.msra.mxu0 0.0
    %3467 = vmatprep.subr.mxu0 0.0
    %3468 = vmatpush2.msra.mxu0 0.0
    %3469 = vmatprep.subr.mxu0 0.0
    %3470 = vmatpush2.msra.mxu0 0.0
    %3471 = vmatprep.subr.mxu0 0.0
    %3472 = vmatpush2.msra.mxu0 0.0
    %3473 = vmatprep.subr.mxu0 0.0
    %3474 = vmatpush2.msra.mxu0 0.0
    %3475 = vmatprep.subr.mxu0 0.0
    %3476 = vmatpush2.msra.mxu0 0.0
    %3477 = vmatprep.mubr.f32.mxu0 0.0
    %3478 = vmatmul.mubr.f32.gmra.mxu0 %v3178
    %v3479 = vpop.f32.mrf.mxu0
    %v3480 = vadd.f32 %v461, %v3479
    %v3481 = vpop.f32.mrf.mxu0
    %3482 = vdwg.mxu0
    %v3483 = vmul.f32 %v3412, %v3480
    %3485 = vrot.lane.b32.xlu0 %v3483, 64
    %v3486 = vpop.permute.xlu0 %3485
    %v3488 = vadd.f32 %v313, %v3486
    %v3489 = vtanh.pop %v3488
    %v3490 = vsub.f32 1.0, %v3412
    %3492 = vrot.lane.b32.xlu0 %v3489, 96
    %v3493 = vpop.permute.xlu0 %3492
    %v3495 = vmul.f32 %v3490, %v3493
    %v3496 = vmul.f32 %v3412, %v3093
    %v3497 = vadd.f32 %v3495, %v3496
    %3499 = vrot.lane.b32.xlu0 %v3497, 96
    %v3500 = vpop.permute.xlu0 %3499
    %v3502 = vsel %vm496, %v3500, %v3335
    %v3504 = vsel %vm671, %v3502, 0
    %3506 = vmatprep.subr.mxu0 0.0
    %3507 = vmatpush1.msra.mxu0 0.0
    %3508 = vmatprep.subr.mxu0 0.0
    %3509 = vmatpush1.msra.mxu0 0.0
    %3510 = vmatprep.subr.mxu0 0.0
    %3511 = vmatpush1.msra.mxu0 0.0
    %3512 = vmatprep.subr.mxu0 0.0
    %3513 = vmatpush1.msra.mxu0 0.0
    %3514 = vmatprep.subr.mxu0 0.0
    %3515 = vmatpush1.msra.mxu0 0.0
    %3516 = vmatprep.subr.mxu0 0.0
    %3517 = vmatpush1.msra.mxu0 0.0
    %3518 = vmatprep.subr.mxu0 0.0
    %3519 = vmatpush1.msra.mxu0 0.0
    %3520 = vmatprep.subr.mxu0 0.0
    %3521 = vmatpush1.msra.mxu0 0.0
    %3522 = vmatprep.subr.mxu0 0.0
    %3523 = vmatpush1.msra.mxu0 %v495
    %3524 = vmatprep.subr.mxu0 0.0
    %3525 = vmatpush1.msra.mxu0 %v494
    %3526 = vmatprep.subr.mxu0 0.0
    %3527 = vmatpush1.msra.mxu0 %v493
    %3528 = vmatprep.subr.mxu0 0.0
    %3529 = vmatpush1.msra.mxu0 %v492
    %3530 = vmatprep.subr.mxu0 0.0
    %3531 = vmatpush1.msra.mxu0 %v491
    %3532 = vmatprep.subr.mxu0 0.0
    %3533 = vmatpush1.msra.mxu0 %v490
    %3534 = vmatprep.subr.mxu0 0.0
    %3535 = vmatpush1.msra.mxu0 %v489
    %3536 = vmatprep.subr.mxu0 0.0
    %3537 = vmatpush1.msra.mxu0 %v488
    %3538 = vmatprep.subr.mxu0 0.0
    %3539 = vmatpush2.msra.mxu0 0.0
    %3540 = vmatprep.subr.mxu0 0.0
    %3541 = vmatpush2.msra.mxu0 0.0
    %3542 = vmatprep.subr.mxu0 0.0
    %3543 = vmatpush2.msra.mxu0 0.0
    %3544 = vmatprep.subr.mxu0 0.0
    %3545 = vmatpush2.msra.mxu0 0.0
    %3546 = vmatprep.subr.mxu0 0.0
    %3547 = vmatpush2.msra.mxu0 0.0
    %3548 = vmatprep.subr.mxu0 0.0
    %3549 = vmatpush2.msra.mxu0 0.0
    %3550 = vmatprep.subr.mxu0 0.0
    %3551 = vmatpush2.msra.mxu0 0.0
    %3552 = vmatprep.subr.mxu0 0.0
    %3553 = vmatpush2.msra.mxu0 0.0
    %3554 = vmatprep.subr.mxu0 0.0
    %3555 = vmatpush2.msra.mxu0 0.0
    %3556 = vmatprep.subr.mxu0 0.0
    %3557 = vmatpush2.msra.mxu0 0.0
    %3558 = vmatprep.subr.mxu0 0.0
    %3559 = vmatpush2.msra.mxu0 0.0
    %3560 = vmatprep.subr.mxu0 0.0
    %3561 = vmatpush2.msra.mxu0 0.0
    %3562 = vmatprep.subr.mxu0 0.0
    %3563 = vmatpush2.msra.mxu0 0.0
    %3564 = vmatprep.subr.mxu0 0.0
    %3565 = vmatpush2.msra.mxu0 0.0
    %3566 = vmatprep.subr.mxu0 0.0
    %3567 = vmatpush2.msra.mxu0 0.0
    %3568 = vmatprep.subr.mxu0 0.0
    %3569 = vmatpush2.msra.mxu0 0.0
    %3570 = vmatprep.mubr.f32.mxu0 0.0
    %3571 = vmatmul.mubr.f32.gmra.mxu0 %v3504
    %v3572 = vpop.f32.mrf.mxu0
    %v3573 = vadd.f32 %v468, %v3572
    %v3574 = vpop.f32.mrf.mxu0
    %3575 = vdwg.mxu0
    %v3576 = vxor.u32 %v3573, 2147483648
    %v3577 = vmul.f32 %v3576, 1.442695
    %v3578 = vpow.pop %v3577
    %v3579 = vadd.f32 %v3578, 1.0
    %v3580 = vrcp.pop %v3579
    %v3581 = vmul.f32 1.0, %v3580
    %v3582 = vsel %vm496, %v3500, 0
    %3584 = vmatprep.subr.mxu0 0.0
    %3585 = vmatpush1.msra.mxu0 0.0
    %3586 = vmatprep.subr.mxu0 0.0
    %3587 = vmatpush1.msra.mxu0 0.0
    %3588 = vmatprep.subr.mxu0 0.0
    %3589 = vmatpush1.msra.mxu0 0.0
    %3590 = vmatprep.subr.mxu0 0.0
    %3591 = vmatpush1.msra.mxu0 0.0
    %3592 = vmatprep.subr.mxu0 0.0
    %3593 = vmatpush1.msra.mxu0 0.0
    %3594 = vmatprep.subr.mxu0 0.0
    %3595 = vmatpush1.msra.mxu0 0.0
    %3596 = vmatprep.subr.mxu0 0.0
    %3597 = vmatpush1.msra.mxu0 0.0
    %3598 = vmatprep.subr.mxu0 0.0
    %3599 = vmatpush1.msra.mxu0 0.0
    %3600 = vmatprep.subr.mxu0 0.0
    %3601 = vmatpush1.msra.mxu0 0.0
    %3602 = vmatprep.subr.mxu0 0.0
    %3603 = vmatpush1.msra.mxu0 0.0
    %3604 = vmatprep.subr.mxu0 0.0
    %3605 = vmatpush1.msra.mxu0 0.0
    %3606 = vmatprep.subr.mxu0 0.0
    %3607 = vmatpush1.msra.mxu0 0.0
    %3608 = vmatprep.subr.mxu0 0.0
    %3609 = vmatpush1.msra.mxu0 %v754
    %3610 = vmatprep.subr.mxu0 0.0
    %3611 = vmatpush1.msra.mxu0 %v753
    %3612 = vmatprep.subr.mxu0 0.0
    %3613 = vmatpush1.msra.mxu0 %v752
    %3614 = vmatprep.subr.mxu0 0.0
    %3615 = vmatpush1.msra.mxu0 %v751
    %3616 = vmatprep.subr.mxu0 0.0
    %3617 = vmatpush2.msra.mxu0 0.0
    %3618 = vmatprep.subr.mxu0 0.0
    %3619 = vmatpush2.msra.mxu0 0.0
    %3620 = vmatprep.subr.mxu0 0.0
    %3621 = vmatpush2.msra.mxu0 0.0
    %3622 = vmatprep.subr.mxu0 0.0
    %3623 = vmatpush2.msra.mxu0 0.0
    %3624 = vmatprep.subr.mxu0 0.0
    %3625 = vmatpush2.msra.mxu0 0.0
    %3626 = vmatprep.subr.mxu0 0.0
    %3627 = vmatpush2.msra.mxu0 0.0
    %3628 = vmatprep.subr.mxu0 0.0
    %3629 = vmatpush2.msra.mxu0 0.0
    %3630 = vmatprep.subr.mxu0 0.0
    %3631 = vmatpush2.msra.mxu0 0.0
    %3632 = vmatprep.subr.mxu0 0.0
    %3633 = vmatpush2.msra.mxu0 0.0
    %3634 = vmatprep.subr.mxu0 0.0
    %3635 = vmatpush2.msra.mxu0 0.0
    %3636 = vmatprep.subr.mxu0 0.0
    %3637 = vmatpush2.msra.mxu0 0.0
    %3638 = vmatprep.subr.mxu0 0.0
    %3639 = vmatpush2.msra.mxu0 0.0
    %3640 = vmatprep.subr.mxu0 0.0
    %3641 = vmatpush2.msra.mxu0 0.0
    %3642 = vmatprep.subr.mxu0 0.0
    %3643 = vmatpush2.msra.mxu0 0.0
    %3644 = vmatprep.subr.mxu0 0.0
    %3645 = vmatpush2.msra.mxu0 0.0
    %3646 = vmatprep.subr.mxu0 0.0
    %3647 = vmatpush2.msra.mxu0 0.0
    %3648 = vmatprep.mubr.f32.mxu0 0.0
    %3649 = vmatmul.mubr.f32.gmra.mxu0 %v3582
    %v3650 = vpop.f32.mrf.mxu0
    %v3651 = vadd.f32 %v475, %v3650
    %v3652 = vpop.f32.mrf.mxu0
    %3653 = vdwg.mxu0
    %3655 = vrot.lane.b32.xlu0 %v3335, 96
    %v3656 = vpop.permute.xlu0 %3655
    %v3657 = vsel %vm496, %v3656, 0
    %3659 = vmatprep.subr.mxu0 0.0
    %3660 = vmatpush1.msra.mxu0 0.0
    %3661 = vmatprep.subr.mxu0 0.0
    %3662 = vmatpush1.msra.mxu0 0.0
    %3663 = vmatprep.subr.mxu0 0.0
    %3664 = vmatpush1.msra.mxu0 0.0
    %3665 = vmatprep.subr.mxu0 0.0
    %3666 = vmatpush1.msra.mxu0 0.0
    %3667 = vmatprep.subr.mxu0 0.0
    %3668 = vmatpush1.msra.mxu0 0.0
    %3669 = vmatprep.subr.mxu0 0.0
    %3670 = vmatpush1.msra.mxu0 0.0
    %3671 = vmatprep.subr.mxu0 0.0
    %3672 = vmatpush1.msra.mxu0 0.0
    %3673 = vmatprep.subr.mxu0 0.0
    %3674 = vmatpush1.msra.mxu0 0.0
    %3675 = vmatprep.subr.mxu0 0.0
    %3676 = vmatpush1.msra.mxu0 0.0
    %3677 = vmatprep.subr.mxu0 0.0
    %3678 = vmatpush1.msra.mxu0 0.0
    %3679 = vmatprep.subr.mxu0 0.0
    %3680 = vmatpush1.msra.mxu0 0.0
    %3681 = vmatprep.subr.mxu0 0.0
    %3682 = vmatpush1.msra.mxu0 0.0
    %3683 = vmatprep.subr.mxu0 0.0
    %3684 = vmatpush1.msra.mxu0 %v830
    %3685 = vmatprep.subr.mxu0 0.0
    %3686 = vmatpush1.msra.mxu0 %v829
    %3687 = vmatprep.subr.mxu0 0.0
    %3688 = vmatpush1.msra.mxu0 %v828
    %3689 = vmatprep.subr.mxu0 0.0
    %3690 = vmatpush1.msra.mxu0 %v827
    %3691 = vmatprep.subr.mxu0 0.0
    %3692 = vmatpush2.msra.mxu0 0.0
    %3693 = vmatprep.subr.mxu0 0.0
    %3694 = vmatpush2.msra.mxu0 0.0
    %3695 = vmatprep.subr.mxu0 0.0
    %3696 = vmatpush2.msra.mxu0 0.0
    %3697 = vmatprep.subr.mxu0 0.0
    %3698 = vmatpush2.msra.mxu0 0.0
    %3699 = vmatprep.subr.mxu0 0.0
    %3700 = vmatpush2.msra.mxu0 0.0
    %3701 = vmatprep.subr.mxu0 0.0
    %3702 = vmatpush2.msra.mxu0 0.0
    %3703 = vmatprep.subr.mxu0 0.0
    %3704 = vmatpush2.msra.mxu0 0.0
    %3705 = vmatprep.subr.mxu0 0.0
    %3706 = vmatpush2.msra.mxu0 0.0
    %3707 = vmatprep.subr.mxu0 0.0
    %3708 = vmatpush2.msra.mxu0 0.0
    %3709 = vmatprep.subr.mxu0 0.0
    %3710 = vmatpush2.msra.mxu0 0.0
    %3711 = vmatprep.subr.mxu0 0.0
    %3712 = vmatpush2.msra.mxu0 0.0
    %3713 = vmatprep.subr.mxu0 0.0
    %3714 = vmatpush2.msra.mxu0 0.0
    %3715 = vmatprep.subr.mxu0 0.0
    %3716 = vmatpush2.msra.mxu0 0.0
    %3717 = vmatprep.subr.mxu0 0.0
    %3718 = vmatpush2.msra.mxu0 0.0
    %3719 = vmatprep.subr.mxu0 0.0
    %3720 = vmatpush2.msra.mxu0 0.0
    %3721 = vmatprep.subr.mxu0 0.0
    %3722 = vmatpush2.msra.mxu0 0.0
    %3723 = vmatprep.mubr.f32.mxu0 0.0
    %3724 = vmatmul.mubr.f32.gmra.mxu0 %v3657
    %v3725 = vpop.f32.mrf.mxu0
    %v3726 = vadd.f32 %v482, %v3725
    %v3727 = vpop.f32.mrf.mxu0
    %3728 = vdwg.mxu0
    %v3729 = vmul.f32 %v3581, %v3726
    %v3730 = vadd.f32 %v3651, %v3729
    %v3731 = vtanh.pop %v3730
    %v3732 = vsub.f32 1.0, %v3581
    %3734 = vrot.lane.b32.xlu0 %v3731, 32
    %v3735 = vpop.permute.xlu0 %3734
    %v3737 = vmul.f32 %v3732, %v3735
    %v3738 = vmul.f32 %v3581, %v3335
    %v3739 = vadd.f32 %v3737, %v3738
    %v3740 = vld [vmem:[%s13] sm:$0xff]
    %v3741 = vld [vmem:[%s13 + $0x8] sm:$0xff]
    %v3742 = vld [vmem:[%s13 + $0x10] sm:$0xff]
    %v3743 = vld [vmem:[%s13 + $0x18] sm:$0xff]
    %3745 = vrot.lane.b32.xlu0 %v3739, 96
    %v3746 = vpop.permute.xlu0 %3745
    %v3747 = vsel %vm496, %v3746, 0
    %3749 = vmatprep.subr.mxu0 0.0
    %3750 = vmatpush1.msra.mxu0 0.0
    %3751 = vmatprep.subr.mxu0 0.0
    %3752 = vmatpush1.msra.mxu0 0.0
    %3753 = vmatprep.subr.mxu0 0.0
    %3754 = vmatpush1.msra.mxu0 0.0
    %3755 = vmatprep.subr.mxu0 0.0
    %3756 = vmatpush1.msra.mxu0 0.0
    %3757 = vmatprep.subr.mxu0 0.0
    %3758 = vmatpush1.msra.mxu0 0.0
    %3759 = vmatprep.subr.mxu0 0.0
    %3760 = vmatpush1.msra.mxu0 0.0
    %3761 = vmatprep.subr.mxu0 0.0
    %3762 = vmatpush1.msra.mxu0 0.0
    %3763 = vmatprep.subr.mxu0 0.0
    %3764 = vmatpush1.msra.mxu0 0.0
    %3765 = vmatprep.subr.mxu0 0.0
    %3766 = vmatpush1.msra.mxu0 0.0
    %3767 = vmatprep.subr.mxu0 0.0
    %3768 = vmatpush1.msra.mxu0 0.0
    %3769 = vmatprep.subr.mxu0 0.0
    %3770 = vmatpush1.msra.mxu0 0.0
    %3771 = vmatprep.subr.mxu0 0.0
    %3772 = vmatpush1.msra.mxu0 0.0
    %3773 = vmatprep.subr.mxu0 0.0
    %3774 = vmatpush1.msra.mxu0 %v3743
    %3775 = vmatprep.subr.mxu0 0.0
    %3776 = vmatpush1.msra.mxu0 %v3742
    %3777 = vmatprep.subr.mxu0 0.0
    %3778 = vmatpush1.msra.mxu0 %v3741
    %3779 = vmatprep.subr.mxu0 0.0
    %3780 = vmatpush1.msra.mxu0 %v3740
    %3781 = vmatprep.subr.mxu0 0.0
    %3782 = vmatpush2.msra.mxu0 0.0
    %3783 = vmatprep.subr.mxu0 0.0
    %3784 = vmatpush2.msra.mxu0 0.0
    %3785 = vmatprep.subr.mxu0 0.0
    %3786 = vmatpush2.msra.mxu0 0.0
    %3787 = vmatprep.subr.mxu0 0.0
    %3788 = vmatpush2.msra.mxu0 0.0
    %3789 = vmatprep.subr.mxu0 0.0
    %3790 = vmatpush2.msra.mxu0 0.0
    %3791 = vmatprep.subr.mxu0 0.0
    %3792 = vmatpush2.msra.mxu0 0.0
    %3793 = vmatprep.subr.mxu0 0.0
    %3794 = vmatpush2.msra.mxu0 0.0
    %3795 = vmatprep.subr.mxu0 0.0
    %3796 = vmatpush2.msra.mxu0 0.0
    %3797 = vmatprep.subr.mxu0 0.0
    %3798 = vmatpush2.msra.mxu0 0.0
    %3799 = vmatprep.subr.mxu0 0.0
    %3800 = vmatpush2.msra.mxu0 0.0
    %3801 = vmatprep.subr.mxu0 0.0
    %3802 = vmatpush2.msra.mxu0 0.0
    %3803 = vmatprep.subr.mxu0 0.0
    %3804 = vmatpush2.msra.mxu0 0.0
    %3805 = vmatprep.subr.mxu0 0.0
    %3806 = vmatpush2.msra.mxu0 0.0
    %3807 = vmatprep.subr.mxu0 0.0
    %3808 = vmatpush2.msra.mxu0 0.0
    %3809 = vmatprep.subr.mxu0 0.0
    %3810 = vmatpush2.msra.mxu0 0.0
    %3811 = vmatprep.subr.mxu0 0.0
    %3812 = vmatpush2.msra.mxu0 0.0
    %3813 = vmatprep.mubr.f32.mxu0 0.0
    %3814 = vmatmul.mubr.f32.gmra.mxu0 %v1233
    %v3815 = vpop.f32.mrf.mxu0
    %v3816 = vadd.f32 %v418, %v3815
    %v3817 = vpop.f32.mrf.mxu0
    %3818 = vmatprep.mubr.f32.mxu0 0.0
    %3819 = vmatmul.mubr.f32.gmra.mxu0 %v1637
    %v3820 = vpop.f32.mrf.mxu0
    %v3821 = vadd.f32 %v423, %v3820
    %v3822 = vpop.f32.mrf.mxu0
    %3823 = vmatprep.mubr.f32.mxu0 0.0
    %3824 = vmatmul.mubr.f32.gmra.mxu0 %v2041
    %v3825 = vpop.f32.mrf.mxu0
    %v3826 = vadd.f32 %v428, %v3825
    %v3827 = vpop.f32.mrf.mxu0
    %3828 = vmatprep.mubr.f32.mxu0 0.0
    %3829 = vmatmul.mubr.f32.gmra.mxu0 %v2445
    %v3830 = vpop.f32.mrf.mxu0
    %v3831 = vadd.f32 %v433, %v3830
    %v3832 = vpop.f32.mrf.mxu0
    %3833 = vmatprep.mubr.f32.mxu0 0.0
    %3834 = vmatmul.mubr.f32.gmra.mxu0 %v2849
    %v3835 = vpop.f32.mrf.mxu0
    %v3836 = vadd.f32 %v438, %v3835
    %v3837 = vpop.f32.mrf.mxu0
    %3838 = vmatprep.mubr.f32.mxu0 0.0
    %3839 = vmatmul.mubr.f32.gmra.mxu0 %v3253
    %v3840 = vpop.f32.mrf.mxu0
    %v3841 = vadd.f32 %v443, %v3840
    %v3842 = vpop.f32.mrf.mxu0
    %3843 = vmatprep.mubr.f32.mxu0 0.0
    %3844 = vmatmul.mubr.f32.gmra.mxu0 %v3657
    %v3845 = vpop.f32.mrf.mxu0
    %v3846 = vadd.f32 %v448, %v3845
    %v3847 = vpop.f32.mrf.mxu0
    %3848 = vmatprep.mubr.f32.mxu0 0.0
    %3849 = vmatmul.mubr.f32.gmra.mxu0 %v3747
    %v3850 = vpop.f32.mrf.mxu0
    %v3851 = vadd.f32 %v453, %v3850
    %v3852 = vpop.f32.mrf.mxu0
    %3853 = vdwg.mxu0
    %v3854 = vmax.f32 %v3816, 0.0
    %v3855 = vmax.f32 %v3821, 0.0
    %v3856 = vmax.f32 %v3826, 0.0
    %v3857 = vmax.f32 %v3831, 0.0
    %v3858 = vmax.f32 %v3836, 0.0
    %v3859 = vmax.f32 %v3841, 0.0
    %v3860 = vmax.f32 %v3846, 0.0
    %v3861 = vmax.f32 %v3851, 0.0
    %v3862 = vld [vmem:[%s16] sm:$0x1]
    %v3864 = vlaneseq
    %v3865 = vshrl.u32 %v3864, 7
    %v3866 = vsub.s32 0, %v3865
    %v3867 = vrot.slane %v3862, %v3866
    %v3869 = vmul.f32 %v3854, %v3867
    %v3870 = vmul.f32 %v3855, %v3867
    %v3871 = vmul.f32 %v3856, %v3867
    %v3872 = vmul.f32 %v3857, %v3867
    %v3873 = vmul.f32 %v3858, %v3867
    %v3874 = vmul.f32 %v3859, %v3867
    %v3875 = vmul.f32 %v3860, %v3867
    %v3876 = vmul.f32 %v3861, %v3867
    %v3877 = vsel %vm496, %v3869, 0.0
    %3878 = vadd.xlane.f32.xlu0 %v3877
    %v3879 = vpop.xlane.xlu0 %3878
    %v3880 = vsel %vm496, %v3870, 0.0
    %3881 = vadd.xlane.f32.xlu0 %v3880
    %v3882 = vpop.xlane.xlu0 %3881
    %v3883 = vsel %vm496, %v3871, 0.0
    %3884 = vadd.xlane.f32.xlu0 %v3883
    %v3885 = vpop.xlane.xlu0 %3884
    %v3886 = vsel %vm496, %v3872, 0.0
    %3887 = vadd.xlane.f32.xlu0 %v3886
    %v3888 = vpop.xlane.xlu0 %3887
    %v3889 = vsel %vm496, %v3873, 0.0
    %3890 = vadd.xlane.f32.xlu0 %v3889
    %v3891 = vpop.xlane.xlu0 %3890
    %v3892 = vsel %vm496, %v3874, 0.0
    %3893 = vadd.xlane.f32.xlu0 %v3892
    %v3894 = vpop.xlane.xlu0 %3893
    %v3895 = vsel %vm496, %v3875, 0.0
    %3896 = vadd.xlane.f32.xlu0 %v3895
    %v3897 = vpop.xlane.xlu0 %3896
    %v3898 = vsel %vm496, %v3876, 0.0
    %3899 = vadd.xlane.f32.xlu0 %v3898
    %v3900 = vpop.xlane.xlu0 %3899
    %v3901 = vld [vmem:[#allocation2] sm:$0x1]
    %v3903 = vlaneseq
    %v3904 = vshrl.u32 %v3903, 7
    %v3905 = vsub.s32 0, %v3904
    %v3906 = vrot.slane %v3901, %v3905
    %v3908 = vadd.f32 %v3879, %v3906
    %v3909 = vadd.f32 %v3882, %v3906
    %v3910 = vadd.f32 %v3885, %v3906
    %v3911 = vadd.f32 %v3888, %v3906
    %v3912 = vadd.f32 %v3891, %v3906
    %v3913 = vadd.f32 %v3894, %v3906
    %v3914 = vadd.f32 %v3897, %v3906
    %v3915 = vadd.f32 %v3900, %v3906
    %v3916 = vxor.u32 %v3908, 2147483648
    %v3917 = vxor.u32 %v3909, 2147483648
    %v3918 = vxor.u32 %v3910, 2147483648
    %v3919 = vxor.u32 %v3911, 2147483648
    %v3920 = vxor.u32 %v3912, 2147483648
    %v3921 = vxor.u32 %v3913, 2147483648
    %v3922 = vxor.u32 %v3914, 2147483648
    %v3923 = vxor.u32 %v3915, 2147483648
    %v3924 = vmul.f32 %v3916, 1.442695
    %v3925 = vpow.pop %v3924
    %v3926 = vmul.f32 %v3917, 1.442695
    %v3927 = vpow.pop %v3926
    %v3928 = vmul.f32 %v3918, 1.442695
    %v3929 = vpow.pop %v3928
    %v3930 = vmul.f32 %v3919, 1.442695
    %v3931 = vpow.pop %v3930
    %v3932 = vmul.f32 %v3920, 1.442695
    %v3933 = vpow.pop %v3932
    %v3934 = vmul.f32 %v3921, 1.442695
    %v3935 = vpow.pop %v3934
    %v3936 = vmul.f32 %v3922, 1.442695
    %v3937 = vpow.pop %v3936
    %v3938 = vmul.f32 %v3923, 1.442695
    %v3939 = vpow.pop %v3938
    %v3940 = vadd.f32 %v3925, 1.0
    %v3941 = vadd.f32 %v3927, 1.0
    %v3942 = vadd.f32 %v3929, 1.0
    %v3943 = vadd.f32 %v3931, 1.0
    %v3944 = vadd.f32 %v3933, 1.0
    %v3945 = vadd.f32 %v3935, 1.0
    %v3946 = vadd.f32 %v3937, 1.0
    %v3947 = vadd.f32 %v3939, 1.0
    %v3948 = vrcp.pop %v3940
    %v3949 = vmul.f32 1.0, %v3948
    %v3950 = vrcp.pop %v3941
    %v3951 = vmul.f32 1.0, %v3950
    %v3952 = vrcp.pop %v3942
    %v3953 = vmul.f32 1.0, %v3952
    %v3954 = vrcp.pop %v3943
    %v3955 = vmul.f32 1.0, %v3954
    %v3956 = vrcp.pop %v3944
    %v3957 = vmul.f32 1.0, %v3956
    %v3958 = vrcp.pop %v3945
    %v3959 = vmul.f32 1.0, %v3958
    %v3960 = vrcp.pop %v3946
    %v3961 = vmul.f32 1.0, %v3960
    %v3962 = vrcp.pop %v3947
    %v3963 = vmul.f32 1.0, %v3962
    %vm3964 = vcmask 7168
    %3965 = vst.msk [vmem:[%s18] sm:$0xff] %vm3964, %v3949
    %3966 = vst.msk [vmem:[%s18 + $0x8] sm:$0xff] %vm3964, %v3951
    %3967 = vst.msk [vmem:[%s18 + $0x10] sm:$0xff] %vm3964, %v3953
    %3968 = vst.msk [vmem:[%s18 + $0x18] sm:$0xff] %vm3964, %v3955
    %3969 = vst.msk [vmem:[%s18 + $0x20] sm:$0xff] %vm3964, %v3957
    %3970 = vst.msk [vmem:[%s18 + $0x28] sm:$0xff] %vm3964, %v3959
    %3971 = vst.msk [vmem:[%s18 + $0x30] sm:$0xff] %vm3964, %v3961
    %3972 = vst.msk [vmem:[%s18 + $0x38] sm:$0xff] %vm3964, %v3963
    // Predicated region
    $region106: #{tpu_custom_call.1} parent=1 // pred_check
      _
    $region107: #{tpu_custom_call.1} parent=1 // pred_check_branch
      %3974 = sbr.rel (0) target = $region109
    $region108: #{tpu_custom_call.1} parent=1 // pred_region
      _
    $region109: #{tpu_custom_call.1} parent=1 // pred_fallthru
      _
    // Predicated region
    $region110: #{tpu_custom_call.1} parent=1 // pred_check
      _
    $region111: #{tpu_custom_call.1} parent=1 // pred_check_branch
      %3976 = sbr.rel (0) target = $region113
    $region112: #{tpu_custom_call.1} parent=1 // pred_region
      _
    $region113: #{tpu_custom_call.1} parent=1 // pred_fallthru
      _
    %3977 = vsyncpa [#allocation4], 1
    %3978 = vsyncpa [#allocation6], 1
    %3979 = vsyncpa [#allocation9], 1
    %3980 = vsyncpa [#allocation12], 1
    %3981 = vsyncpa [#allocation15], 1

</llo_original>
